<compile_context>
chip_gen: v5e
topology: v5e:2x2
jax: 0.10.0
libtpu: 0.0.40
codegen_flags: <defaults>
</compile_context>

<pallas_src>
import functools

import jax
import jax.numpy as jnp
import numpy as np
from jax.experimental import pallas as pl
from jax.experimental.pallas import tpu as pltpu


# --------------------------------------------------------------------------
# In-kernel helper: one LSTM layer over the whole (time-major, flattened)
# sequence.  x2d: (T*B, D) value; seq_ref: (T*B, H) VMEM scratch to hold the
# per-timestep hidden states (consumed by the next layer / head).
# --------------------------------------------------------------------------
def _lstm_layer_in_kernel(x2d, wih, whh, bias, seq_ref, T, B):
    H = whh.shape[0]
    # Batched input projection: no time dependence -> one big MXU matmul.
    gx = jnp.dot(x2d, wih, preferred_element_type=jnp.float32) + bias  # (T*B, 4H)

    h = jnp.zeros((B, H), jnp.float32)
    c = jnp.zeros((B, H), jnp.float32)
    # T is small & static: fully-unrolled loop, all indices static.
    for t in range(T):
        gates = gx[t * B:(t + 1) * B, :] + jnp.dot(
            h, whh, preferred_element_type=jnp.float32)          # (B, 4H)
        i = jax.nn.sigmoid(gates[:, 0 * H:1 * H])
        f = jax.nn.sigmoid(gates[:, 1 * H:2 * H])
        g = jnp.tanh(gates[:, 2 * H:3 * H])
        o = jax.nn.sigmoid(gates[:, 3 * H:4 * H])
        c = f * c + i * g
        h = o * jnp.tanh(c)
        seq_ref[t * B:(t + 1) * B, :] = h
    return seq_ref[...]


# --------------------------------------------------------------------------
# Fused kernel: lstm1 -> lstm2 -> lstm3 -> dense -> ReLU -> out.
# --------------------------------------------------------------------------
def _fused_kernel(x_ref,
                  w1i_ref, w1h_ref, b1_ref,
                  w2i_ref, w2h_ref, b2_ref,
                  w3i_ref, w3h_ref, b3_ref,
                  wd_ref, bd_ref, wo_ref, bo_ref,
                  y_ref,
                  seq1_sc, seq2_sc, seq3_sc,
                  *, T, B):
    x = x_ref[...].astype(jnp.float32)                                    # (T*B, D)

    h1 = _lstm_layer_in_kernel(x, w1i_ref[...], w1h_ref[...], b1_ref[...],
                               seq1_sc, T, B)                             # (T*B, H1)
    h2 = _lstm_layer_in_kernel(h1, w2i_ref[...], w2h_ref[...], b2_ref[...],
                               seq2_sc, T, B)                             # (T*B, H2)
    h3 = _lstm_layer_in_kernel(h2, w3i_ref[...], w3h_ref[...], b3_ref[...],
                               seq3_sc, T, B)                             # (T*B, H3)

    hd = jnp.dot(h3, wd_ref[...], preferred_element_type=jnp.float32) + bd_ref[...]
    hd = jnp.maximum(hd, 0.0)
    y = jnp.dot(hd, wo_ref[...], preferred_element_type=jnp.float32) + bo_ref[...]
    y_ref[...] = y.astype(y_ref.dtype)                                    # one bulk store


# --------------------------------------------------------------------------
# Full model wrapper (batch_first in / out, like the PyTorch module).
# --------------------------------------------------------------------------
def vanilla_lstm_forward(params, x_btd):
    """x_btd: (B, T, input_shape) -> (B, T, output_shape)."""
    B, T, D = x_btd.shape
    H1 = params["lstm1"]["whh"].shape[0]
    H2 = params["lstm2"]["whh"].shape[0]
    H3 = params["lstm3"]["whh"].shape[0]
    F_out = params["out"]["w"].shape[1]

    # Time-major, flattened: row index = t*B + b (tiny tensor -> cheap).
    x_flat = jnp.transpose(x_btd, (1, 0, 2)).reshape(T * B, D)

    vm = pl.BlockSpec(memory_space=pltpu.MemorySpace.VMEM)
    out = pl.pallas_call(
        functools.partial(_fused_kernel, T=T, B=B),
        out_shape=jax.ShapeDtypeStruct((T * B, F_out), x_btd.dtype),
        in_specs=[vm] * 14,
        out_specs=vm,
        scratch_shapes=[
            pltpu.VMEM((T * B, H1), jnp.float32),
            pltpu.VMEM((T * B, H2), jnp.float32),
            pltpu.VMEM((T * B, H3), jnp.float32),
        ],
    )(
        x_flat,
        params["lstm1"]["wih"], params["lstm1"]["whh"], params["lstm1"]["b"].reshape(1, -1),
        params["lstm2"]["wih"], params["lstm2"]["whh"], params["lstm2"]["b"].reshape(1, -1),
        params["lstm3"]["wih"], params["lstm3"]["whh"], params["lstm3"]["b"].reshape(1, -1),
        params["dense"]["w"], params["dense"]["b"].reshape(1, -1),
        params["out"]["w"], params["out"]["b"].reshape(1, -1),
    )
    return jnp.transpose(out.reshape(T, B, F_out), (1, 0, 2))


# --------------------------------------------------------------------------
# Pure-JAX reference (matches PyTorch LSTM semantics; zero initial states).
# --------------------------------------------------------------------------
def _lstm_layer_ref(x_tbd, wih, whh, bias):
    T, B, _ = x_tbd.shape
    H = whh.shape[0]

    def step(carry, xt):
        h, c = carry
        g = xt @ wih + h @ whh + bias
        i = jax.nn.sigmoid(g[:, 0 * H:1 * H])
        f = jax.nn.sigmoid(g[:, 1 * H:2 * H])
        gg = jnp.tanh(g[:, 2 * H:3 * H])
        o = jax.nn.sigmoid(g[:, 3 * H:4 * H])
        c = f * c + i * gg
        h = o * jnp.tanh(c)
        return (h, c), h

    init = (jnp.zeros((B, H), jnp.float32), jnp.zeros((B, H), jnp.float32))
    _, ys = jax.lax.scan(step, init, x_tbd)
    return ys


def vanilla_lstm_ref(params, x_btd):
    h = jnp.transpose(x_btd, (1, 0, 2))
    for lyr in ("lstm1", "lstm2", "lstm3"):
        p = params[lyr]
        h = _lstm_layer_ref(h, p["wih"], p["whh"], p["b"])
    h = jnp.maximum(h @ params["dense"]["w"] + params["dense"]["b"], 0.0)
    h = h @ params["out"]["w"] + params["out"]["b"]
    return jnp.transpose(h, (1, 0, 2))


# --------------------------------------------------------------------------
# Deterministic parameter construction (PyTorch-like uniform(-1/sqrt(H), +)).
# --------------------------------------------------------------------------
def init_params(key, input_shape, output_shape, units):
    keys = iter(jax.random.split(key, 32))

    def unif(shape, k):
        return jax.random.uniform(next(keys), shape, jnp.float32, -k, k)

    params = {}
    dims_in = [input_shape, units[0], units[1]]
    for idx, name in enumerate(("lstm1", "lstm2", "lstm3")):
        H = units[idx]
        D = dims_in[idx]
        k = 1.0 / np.sqrt(H)
        params[name] = {
            "wih": unif((D, 4 * H), k),                    # transposed weight_ih_l0
            "whh": unif((H, 4 * H), k),                    # transposed weight_hh_l0
            "b": unif((4 * H,), k) + unif((4 * H,), k),    # bias_ih + bias_hh
        }
    k = 1.0 / np.sqrt(units[2])
    params["dense"] = {"w": unif((units[2], units[3]), k), "b": unif((units[3],), k)}
    k = 1.0 / np.sqrt(units[3])
    params["out"] = {"w": unif((units[3], output_shape), k), "b": unif((output_shape,), k)}
    return params


if __name__ == "__main__":
    B, T = 4, 8
    input_shape = 16
    units = (32, 32, 32, 16)
    output_shape = 8

    key = jax.random.PRNGKey(0)
    pkey, xkey = jax.random.split(key)
    params = init_params(pkey, input_shape, output_shape, units)
    x = jax.random.normal(xkey, (B, T, input_shape), jnp.float32)

    y = jax.jit(vanilla_lstm_forward)(params, x)
    y = jax.block_until_ready(y)

    y_ref = jax.block_until_ready(vanilla_lstm_ref(params, x))
    assert y.shape == (B, T, output_shape), y.shape
    np.testing.assert_allclose(np.asarray(y), np.asarray(y_ref), rtol=2e-2, atol=2e-2)

    print("KERNEL_OK")
</pallas_src>

<mosaic_0001>
module attributes {stable_mosaic.version = 11 : i64} {
  func.func @_fused_kernel(%arg0: memref<32x16xf32, #tpu.memory_space<vmem>>, %arg1: memref<16x128xf32, #tpu.memory_space<vmem>>, %arg2: memref<32x128xf32, #tpu.memory_space<vmem>>, %arg3: memref<1x128xf32, #tpu.memory_space<vmem>>, %arg4: memref<32x128xf32, #tpu.memory_space<vmem>>, %arg5: memref<32x128xf32, #tpu.memory_space<vmem>>, %arg6: memref<1x128xf32, #tpu.memory_space<vmem>>, %arg7: memref<32x128xf32, #tpu.memory_space<vmem>>, %arg8: memref<32x128xf32, #tpu.memory_space<vmem>>, %arg9: memref<1x128xf32, #tpu.memory_space<vmem>>, %arg10: memref<32x16xf32, #tpu.memory_space<vmem>>, %arg11: memref<1x16xf32, #tpu.memory_space<vmem>>, %arg12: memref<16x8xf32, #tpu.memory_space<vmem>>, %arg13: memref<1x8xf32, #tpu.memory_space<vmem>>, %arg14: memref<32x8xf32, #tpu.memory_space<vmem>>, %arg15: memref<32x32xf32, #tpu.memory_space<vmem>>, %arg16: memref<32x32xf32, #tpu.memory_space<vmem>>, %arg17: memref<32x32xf32, #tpu.memory_space<vmem>>) attributes {dimension_semantics = [], scalar_prefetch = 0 : i64, scratch_operands = 3 : i64, tpu.core_type = #tpu.core_type<tc>} {
    %c0 = arith.constant 0 : index
    %c0_0 = arith.constant 0 : index
    %0 = vector.load %arg0[%c0, %c0_0] : memref<32x16xf32, #tpu.memory_space<vmem>>, vector<32x16xf32>
    %c0_1 = arith.constant 0 : index
    %c0_2 = arith.constant 0 : index
    %1 = vector.load %arg1[%c0_1, %c0_2] : memref<16x128xf32, #tpu.memory_space<vmem>>, vector<16x128xf32>
    %c0_3 = arith.constant 0 : index
    %c0_4 = arith.constant 0 : index
    %2 = vector.load %arg2[%c0_3, %c0_4] : memref<32x128xf32, #tpu.memory_space<vmem>>, vector<32x128xf32>
    %c0_5 = arith.constant 0 : index
    %c0_6 = arith.constant 0 : index
    %3 = vector.load %arg3[%c0_5, %c0_6] : memref<1x128xf32, #tpu.memory_space<vmem>>, vector<1x128xf32>
    %cst = arith.constant dense<0.000000e+00> : vector<32x128xf32>
    %4 = tpu.matmul %0, %1, %cst {dimension_numbers = #tpu.dot_dimension_numbers<[1], [0], [0], [1], [0, 0, 1, 1], [], []>} : vector<32x16xf32>, vector<16x128xf32>, vector<32x128xf32> -> vector<32x128xf32>
    %5 = vector.broadcast %3 : vector<1x128xf32> to vector<32x128xf32>
    %6 = arith.addf %4, %5 : vector<32x128xf32>
    %cst_7 = arith.constant 0.000000e+00 : f32
    %7 = vector.broadcast %cst_7 : f32 to vector<4x32xf32>
    %cst_8 = arith.constant 0.000000e+00 : f32
    %8 = vector.broadcast %cst_8 : f32 to vector<4x32xf32>
    %9 = vector.extract_strided_slice %6 {offsets = [0, 0], sizes = [4, 128], strides = [1, 1]} : vector<32x128xf32> to vector<4x128xf32>
    %cst_9 = arith.constant dense<0.000000e+00> : vector<4x128xf32>
    %10 = tpu.matmul %7, %2, %cst_9 {dimension_numbers = #tpu.dot_dimension_numbers<[1], [0], [0], [1], [0, 0, 1, 1], [], []>} : vector<4x32xf32>, vector<32x128xf32>, vector<4x128xf32> -> vector<4x128xf32>
    %11 = arith.addf %9, %10 : vector<4x128xf32>
    %12 = vector.extract_strided_slice %11 {offsets = [0, 0], sizes = [4, 32], strides = [1, 1]} : vector<4x128xf32> to vector<4x32xf32>
    %13 = arith.negf %12 : vector<4x32xf32>
    %14 = math.exp %13 : vector<4x32xf32>
    %cst_10 = arith.constant 1.000000e+00 : f32
    %15 = vector.broadcast %cst_10 : f32 to vector<4x32xf32>
    %16 = arith.addf %15, %14 : vector<4x32xf32>
    %17 = arith.divf %15, %16 : vector<4x32xf32>
    %18 = vector.extract_strided_slice %11 {offsets = [0, 32], sizes = [4, 32], strides = [1, 1]} : vector<4x128xf32> to vector<4x32xf32>
    %19 = arith.negf %18 : vector<4x32xf32>
    %20 = math.exp %19 : vector<4x32xf32>
    %cst_11 = arith.constant 1.000000e+00 : f32
    %21 = vector.broadcast %cst_11 : f32 to vector<4x32xf32>
    %22 = arith.addf %21, %20 : vector<4x32xf32>
    %23 = arith.divf %21, %22 : vector<4x32xf32>
    %24 = vector.extract_strided_slice %11 {offsets = [0, 64], sizes = [4, 32], strides = [1, 1]} : vector<4x128xf32> to vector<4x32xf32>
    %25 = math.tanh %24 : vector<4x32xf32>
    %26 = vector.extract_strided_slice %11 {offsets = [0, 96], sizes = [4, 32], strides = [1, 1]} : vector<4x128xf32> to vector<4x32xf32>
    %27 = arith.negf %26 : vector<4x32xf32>
    %28 = math.exp %27 : vector<4x32xf32>
    %cst_12 = arith.constant 1.000000e+00 : f32
    %29 = vector.broadcast %cst_12 : f32 to vector<4x32xf32>
    %30 = arith.addf %29, %28 : vector<4x32xf32>
    %31 = arith.divf %29, %30 : vector<4x32xf32>
    %32 = arith.mulf %23, %8 : vector<4x32xf32>
    %33 = arith.mulf %17, %25 : vector<4x32xf32>
    %34 = arith.addf %32, %33 : vector<4x32xf32>
    %35 = math.tanh %34 : vector<4x32xf32>
    %36 = arith.mulf %31, %35 : vector<4x32xf32>
    %c0_13 = arith.constant 0 : index
    %c0_14 = arith.constant 0 : index
    %37 = vector.load %arg15[%c0_13, %c0_14] : memref<32x32xf32, #tpu.memory_space<vmem>>, vector<4x32xf32>
    tpu.vector_store %arg15[%c0_13, %c0_14], %36 {strides = array<i32>} : memref<32x32xf32, #tpu.memory_space<vmem>>, vector<4x32xf32>,
    %38 = vector.extract_strided_slice %6 {offsets = [4, 0], sizes = [4, 128], strides = [1, 1]} : vector<32x128xf32> to vector<4x128xf32>
    %cst_15 = arith.constant dense<0.000000e+00> : vector<4x128xf32>
    %39 = tpu.matmul %36, %2, %cst_15 {dimension_numbers = #tpu.dot_dimension_numbers<[1], [0], [0], [1], [0, 0, 1, 1], [], []>} : vector<4x32xf32>, vector<32x128xf32>, vector<4x128xf32> -> vector<4x128xf32>
    %40 = arith.addf %38, %39 : vector<4x128xf32>
    %41 = vector.extract_strided_slice %40 {offsets = [0, 0], sizes = [4, 32], strides = [1, 1]} : vector<4x128xf32> to vector<4x32xf32>
    %42 = arith.negf %41 : vector<4x32xf32>
    %43 = math.exp %42 : vector<4x32xf32>
    %cst_16 = arith.constant 1.000000e+00 : f32
    %44 = vector.broadcast %cst_16 : f32 to vector<4x32xf32>
    %45 = arith.addf %44, %43 : vector<4x32xf32>
    %46 = arith.divf %44, %45 : vector<4x32xf32>
    %47 = vector.extract_strided_slice %40 {offsets = [0, 32], sizes = [4, 32], strides = [1, 1]} : vector<4x128xf32> to vector<4x32xf32>
    %48 = arith.negf %47 : vector<4x32xf32>
    %49 = math.exp %48 : vector<4x32xf32>
    %cst_17 = arith.constant 1.000000e+00 : f32
    %50 = vector.broadcast %cst_17 : f32 to vector<4x32xf32>
    %51 = arith.addf %50, %49 : vector<4x32xf32>
    %52 = arith.divf %50, %51 : vector<4x32xf32>
    %53 = vector.extract_strided_slice %40 {offsets = [0, 64], sizes = [4, 32], strides = [1, 1]} : vector<4x128xf32> to vector<4x32xf32>
    %54 = math.tanh %53 : vector<4x32xf32>
    %55 = vector.extract_strided_slice %40 {offsets = [0, 96], sizes = [4, 32], strides = [1, 1]} : vector<4x128xf32> to vector<4x32xf32>
    %56 = arith.negf %55 : vector<4x32xf32>
    %57 = math.exp %56 : vector<4x32xf32>
    %cst_18 = arith.constant 1.000000e+00 : f32
    %58 = vector.broadcast %cst_18 : f32 to vector<4x32xf32>
    %59 = arith.addf %58, %57 : vector<4x32xf32>
    %60 = arith.divf %58, %59 : vector<4x32xf32>
    %61 = arith.mulf %52, %34 : vector<4x32xf32>
    %62 = arith.mulf %46, %54 : vector<4x32xf32>
    %63 = arith.addf %61, %62 : vector<4x32xf32>
    %64 = math.tanh %63 : vector<4x32xf32>
    %65 = arith.mulf %60, %64 : vector<4x32xf32>
    %c4 = arith.constant 4 : index
    %c0_19 = arith.constant 0 : index
    %66 = vector.load %arg15[%c4, %c0_19] : memref<32x32xf32, #tpu.memory_space<vmem>>, vector<4x32xf32>
    tpu.vector_store %arg15[%c4, %c0_19], %65 {strides = array<i32>} : memref<32x32xf32, #tpu.memory_space<vmem>>, vector<4x32xf32>,
    %67 = vector.extract_strided_slice %6 {offsets = [8, 0], sizes = [4, 128], strides = [1, 1]} : vector<32x128xf32> to vector<4x128xf32>
    %cst_20 = arith.constant dense<0.000000e+00> : vector<4x128xf32>
    %68 = tpu.matmul %65, %2, %cst_20 {dimension_numbers = #tpu.dot_dimension_numbers<[1], [0], [0], [1], [0, 0, 1, 1], [], []>} : vector<4x32xf32>, vector<32x128xf32>, vector<4x128xf32> -> vector<4x128xf32>
    %69 = arith.addf %67, %68 : vector<4x128xf32>
    %70 = vector.extract_strided_slice %69 {offsets = [0, 0], sizes = [4, 32], strides = [1, 1]} : vector<4x128xf32> to vector<4x32xf32>
    %71 = arith.negf %70 : vector<4x32xf32>
    %72 = math.exp %71 : vector<4x32xf32>
    %cst_21 = arith.constant 1.000000e+00 : f32
    %73 = vector.broadcast %cst_21 : f32 to vector<4x32xf32>
    %74 = arith.addf %73, %72 : vector<4x32xf32>
    %75 = arith.divf %73, %74 : vector<4x32xf32>
    %76 = vector.extract_strided_slice %69 {offsets = [0, 32], sizes = [4, 32], strides = [1, 1]} : vector<4x128xf32> to vector<4x32xf32>
    %77 = arith.negf %76 : vector<4x32xf32>
    %78 = math.exp %77 : vector<4x32xf32>
    %cst_22 = arith.constant 1.000000e+00 : f32
    %79 = vector.broadcast %cst_22 : f32 to vector<4x32xf32>
    %80 = arith.addf %79, %78 : vector<4x32xf32>
    %81 = arith.divf %79, %80 : vector<4x32xf32>
    %82 = vector.extract_strided_slice %69 {offsets = [0, 64], sizes = [4, 32], strides = [1, 1]} : vector<4x128xf32> to vector<4x32xf32>
    %83 = math.tanh %82 : vector<4x32xf32>
    %84 = vector.extract_strided_slice %69 {offsets = [0, 96], sizes = [4, 32], strides = [1, 1]} : vector<4x128xf32> to vector<4x32xf32>
    %85 = arith.negf %84 : vector<4x32xf32>
    %86 = math.exp %85 : vector<4x32xf32>
    %cst_23 = arith.constant 1.000000e+00 : f32
    %87 = vector.broadcast %cst_23 : f32 to vector<4x32xf32>
    %88 = arith.addf %87, %86 : vector<4x32xf32>
    %89 = arith.divf %87, %88 : vector<4x32xf32>
    %90 = arith.mulf %81, %63 : vector<4x32xf32>
    %91 = arith.mulf %75, %83 : vector<4x32xf32>
    %92 = arith.addf %90, %91 : vector<4x32xf32>
    %93 = math.tanh %92 : vector<4x32xf32>
    %94 = arith.mulf %89, %93 : vector<4x32xf32>
    %c8 = arith.constant 8 : index
    %c0_24 = arith.constant 0 : index
    %95 = vector.load %arg15[%c8, %c0_24] : memref<32x32xf32, #tpu.memory_space<vmem>>, vector<4x32xf32>
    tpu.vector_store %arg15[%c8, %c0_24], %94 {strides = array<i32>} : memref<32x32xf32, #tpu.memory_space<vmem>>, vector<4x32xf32>,
    %96 = vector.extract_strided_slice %6 {offsets = [12, 0], sizes = [4, 128], strides = [1, 1]} : vector<32x128xf32> to vector<4x128xf32>
    %cst_25 = arith.constant dense<0.000000e+00> : vector<4x128xf32>
    %97 = tpu.matmul %94, %2, %cst_25 {dimension_numbers = #tpu.dot_dimension_numbers<[1], [0], [0], [1], [0, 0, 1, 1], [], []>} : vector<4x32xf32>, vector<32x128xf32>, vector<4x128xf32> -> vector<4x128xf32>
    %98 = arith.addf %96, %97 : vector<4x128xf32>
    %99 = vector.extract_strided_slice %98 {offsets = [0, 0], sizes = [4, 32], strides = [1, 1]} : vector<4x128xf32> to vector<4x32xf32>
    %100 = arith.negf %99 : vector<4x32xf32>
    %101 = math.exp %100 : vector<4x32xf32>
    %cst_26 = arith.constant 1.000000e+00 : f32
    %102 = vector.broadcast %cst_26 : f32 to vector<4x32xf32>
    %103 = arith.addf %102, %101 : vector<4x32xf32>
    %104 = arith.divf %102, %103 : vector<4x32xf32>
    %105 = vector.extract_strided_slice %98 {offsets = [0, 32], sizes = [4, 32], strides = [1, 1]} : vector<4x128xf32> to vector<4x32xf32>
    %106 = arith.negf %105 : vector<4x32xf32>
    %107 = math.exp %106 : vector<4x32xf32>
    %cst_27 = arith.constant 1.000000e+00 : f32
    %108 = vector.broadcast %cst_27 : f32 to vector<4x32xf32>
    %109 = arith.addf %108, %107 : vector<4x32xf32>
    %110 = arith.divf %108, %109 : vector<4x32xf32>
    %111 = vector.extract_strided_slice %98 {offsets = [0, 64], sizes = [4, 32], strides = [1, 1]} : vector<4x128xf32> to vector<4x32xf32>
    %112 = math.tanh %111 : vector<4x32xf32>
    %113 = vector.extract_strided_slice %98 {offsets = [0, 96], sizes = [4, 32], strides = [1, 1]} : vector<4x128xf32> to vector<4x32xf32>
    %114 = arith.negf %113 : vector<4x32xf32>
    %115 = math.exp %114 : vector<4x32xf32>
    %cst_28 = arith.constant 1.000000e+00 : f32
    %116 = vector.broadcast %cst_28 : f32 to vector<4x32xf32>
    %117 = arith.addf %116, %115 : vector<4x32xf32>
    %118 = arith.divf %116, %117 : vector<4x32xf32>
    %119 = arith.mulf %110, %92 : vector<4x32xf32>
    %120 = arith.mulf %104, %112 : vector<4x32xf32>
    %121 = arith.addf %119, %120 : vector<4x32xf32>
    %122 = math.tanh %121 : vector<4x32xf32>
    %123 = arith.mulf %118, %122 : vector<4x32xf32>
    %c12 = arith.constant 12 : index
    %c0_29 = arith.constant 0 : index
    %124 = vector.load %arg15[%c12, %c0_29] : memref<32x32xf32, #tpu.memory_space<vmem>>, vector<4x32xf32>
    tpu.vector_store %arg15[%c12, %c0_29], %123 {strides = array<i32>} : memref<32x32xf32, #tpu.memory_space<vmem>>, vector<4x32xf32>,
    %125 = vector.extract_strided_slice %6 {offsets = [16, 0], sizes = [4, 128], strides = [1, 1]} : vector<32x128xf32> to vector<4x128xf32>
    %cst_30 = arith.constant dense<0.000000e+00> : vector<4x128xf32>
    %126 = tpu.matmul %123, %2, %cst_30 {dimension_numbers = #tpu.dot_dimension_numbers<[1], [0], [0], [1], [0, 0, 1, 1], [], []>} : vector<4x32xf32>, vector<32x128xf32>, vector<4x128xf32> -> vector<4x128xf32>
    %127 = arith.addf %125, %126 : vector<4x128xf32>
    %128 = vector.extract_strided_slice %127 {offsets = [0, 0], sizes = [4, 32], strides = [1, 1]} : vector<4x128xf32> to vector<4x32xf32>
    %129 = arith.negf %128 : vector<4x32xf32>
    %130 = math.exp %129 : vector<4x32xf32>
    %cst_31 = arith.constant 1.000000e+00 : f32
    %131 = vector.broadcast %cst_31 : f32 to vector<4x32xf32>
    %132 = arith.addf %131, %130 : vector<4x32xf32>
    %133 = arith.divf %131, %132 : vector<4x32xf32>
    %134 = vector.extract_strided_slice %127 {offsets = [0, 32], sizes = [4, 32], strides = [1, 1]} : vector<4x128xf32> to vector<4x32xf32>
    %135 = arith.negf %134 : vector<4x32xf32>
    %136 = math.exp %135 : vector<4x32xf32>
    %cst_32 = arith.constant 1.000000e+00 : f32
    %137 = vector.broadcast %cst_32 : f32 to vector<4x32xf32>
    %138 = arith.addf %137, %136 : vector<4x32xf32>
    %139 = arith.divf %137, %138 : vector<4x32xf32>
    %140 = vector.extract_strided_slice %127 {offsets = [0, 64], sizes = [4, 32], strides = [1, 1]} : vector<4x128xf32> to vector<4x32xf32>
    %141 = math.tanh %140 : vector<4x32xf32>
    %142 = vector.extract_strided_slice %127 {offsets = [0, 96], sizes = [4, 32], strides = [1, 1]} : vector<4x128xf32> to vector<4x32xf32>
    %143 = arith.negf %142 : vector<4x32xf32>
    %144 = math.exp %143 : vector<4x32xf32>
    %cst_33 = arith.constant 1.000000e+00 : f32
    %145 = vector.broadcast %cst_33 : f32 to vector<4x32xf32>
    %146 = arith.addf %145, %144 : vector<4x32xf32>
    %147 = arith.divf %145, %146 : vector<4x32xf32>
    %148 = arith.mulf %139, %121 : vector<4x32xf32>
    %149 = arith.mulf %133, %141 : vector<4x32xf32>
    %150 = arith.addf %148, %149 : vector<4x32xf32>
    %151 = math.tanh %150 : vector<4x32xf32>
    %152 = arith.mulf %147, %151 : vector<4x32xf32>
    %c16 = arith.constant 16 : index
    %c0_34 = arith.constant 0 : index
    %153 = vector.load %arg15[%c16, %c0_34] : memref<32x32xf32, #tpu.memory_space<vmem>>, vector<4x32xf32>
    tpu.vector_store %arg15[%c16, %c0_34], %152 {strides = array<i32>} : memref<32x32xf32, #tpu.memory_space<vmem>>, vector<4x32xf32>,
    %154 = vector.extract_strided_slice %6 {offsets = [20, 0], sizes = [4, 128], strides = [1, 1]} : vector<32x128xf32> to vector<4x128xf32>
    %cst_35 = arith.constant dense<0.000000e+00> : vector<4x128xf32>
    %155 = tpu.matmul %152, %2, %cst_35 {dimension_numbers = #tpu.dot_dimension_numbers<[1], [0], [0], [1], [0, 0, 1, 1], [], []>} : vector<4x32xf32>, vector<32x128xf32>, vector<4x128xf32> -> vector<4x128xf32>
    %156 = arith.addf %154, %155 : vector<4x128xf32>
    %157 = vector.extract_strided_slice %156 {offsets = [0, 0], sizes = [4, 32], strides = [1, 1]} : vector<4x128xf32> to vector<4x32xf32>
    %158 = arith.negf %157 : vector<4x32xf32>
    %159 = math.exp %158 : vector<4x32xf32>
    %cst_36 = arith.constant 1.000000e+00 : f32
    %160 = vector.broadcast %cst_36 : f32 to vector<4x32xf32>
    %161 = arith.addf %160, %159 : vector<4x32xf32>
    %162 = arith.divf %160, %161 : vector<4x32xf32>
    %163 = vector.extract_strided_slice %156 {offsets = [0, 32], sizes = [4, 32], strides = [1, 1]} : vector<4x128xf32> to vector<4x32xf32>
    %164 = arith.negf %163 : vector<4x32xf32>
    %165 = math.exp %164 : vector<4x32xf32>
    %cst_37 = arith.constant 1.000000e+00 : f32
    %166 = vector.broadcast %cst_37 : f32 to vector<4x32xf32>
    %167 = arith.addf %166, %165 : vector<4x32xf32>
    %168 = arith.divf %166, %167 : vector<4x32xf32>
    %169 = vector.extract_strided_slice %156 {offsets = [0, 64], sizes = [4, 32], strides = [1, 1]} : vector<4x128xf32> to vector<4x32xf32>
    %170 = math.tanh %169 : vector<4x32xf32>
    %171 = vector.extract_strided_slice %156 {offsets = [0, 96], sizes = [4, 32], strides = [1, 1]} : vector<4x128xf32> to vector<4x32xf32>
    %172 = arith.negf %171 : vector<4x32xf32>
    %173 = math.exp %172 : vector<4x32xf32>
    %cst_38 = arith.constant 1.000000e+00 : f32
    %174 = vector.broadcast %cst_38 : f32 to vector<4x32xf32>
    %175 = arith.addf %174, %173 : vector<4x32xf32>
    %176 = arith.divf %174, %175 : vector<4x32xf32>
    %177 = arith.mulf %168, %150 : vector<4x32xf32>
    %178 = arith.mulf %162, %170 : vector<4x32xf32>
    %179 = arith.addf %177, %178 : vector<4x32xf32>
    %180 = math.tanh %179 : vector<4x32xf32>
    %181 = arith.mulf %176, %180 : vector<4x32xf32>
    %c20 = arith.constant 20 : index
    %c0_39 = arith.constant 0 : index
    %182 = vector.load %arg15[%c20, %c0_39] : memref<32x32xf32, #tpu.memory_space<vmem>>, vector<4x32xf32>
    tpu.vector_store %arg15[%c20, %c0_39], %181 {strides = array<i32>} : memref<32x32xf32, #tpu.memory_space<vmem>>, vector<4x32xf32>,
    %183 = vector.extract_strided_slice %6 {offsets = [24, 0], sizes = [4, 128], strides = [1, 1]} : vector<32x128xf32> to vector<4x128xf32>
    %cst_40 = arith.constant dense<0.000000e+00> : vector<4x128xf32>
    %184 = tpu.matmul %181, %2, %cst_40 {dimension_numbers = #tpu.dot_dimension_numbers<[1], [0], [0], [1], [0, 0, 1, 1], [], []>} : vector<4x32xf32>, vector<32x128xf32>, vector<4x128xf32> -> vector<4x128xf32>
    %185 = arith.addf %183, %184 : vector<4x128xf32>
    %186 = vector.extract_strided_slice %185 {offsets = [0, 0], sizes = [4, 32], strides = [1, 1]} : vector<4x128xf32> to vector<4x32xf32>
    %187 = arith.negf %186 : vector<4x32xf32>
    %188 = math.exp %187 : vector<4x32xf32>
    %cst_41 = arith.constant 1.000000e+00 : f32
    %189 = vector.broadcast %cst_41 : f32 to vector<4x32xf32>
    %190 = arith.addf %189, %188 : vector<4x32xf32>
    %191 = arith.divf %189, %190 : vector<4x32xf32>
    %192 = vector.extract_strided_slice %185 {offsets = [0, 32], sizes = [4, 32], strides = [1, 1]} : vector<4x128xf32> to vector<4x32xf32>
    %193 = arith.negf %192 : vector<4x32xf32>
    %194 = math.exp %193 : vector<4x32xf32>
    %cst_42 = arith.constant 1.000000e+00 : f32
    %195 = vector.broadcast %cst_42 : f32 to vector<4x32xf32>
    %196 = arith.addf %195, %194 : vector<4x32xf32>
    %197 = arith.divf %195, %196 : vector<4x32xf32>
    %198 = vector.extract_strided_slice %185 {offsets = [0, 64], sizes = [4, 32], strides = [1, 1]} : vector<4x128xf32> to vector<4x32xf32>
    %199 = math.tanh %198 : vector<4x32xf32>
    %200 = vector.extract_strided_slice %185 {offsets = [0, 96], sizes = [4, 32], strides = [1, 1]} : vector<4x128xf32> to vector<4x32xf32>
    %201 = arith.negf %200 : vector<4x32xf32>
    %202 = math.exp %201 : vector<4x32xf32>
    %cst_43 = arith.constant 1.000000e+00 : f32
    %203 = vector.broadcast %cst_43 : f32 to vector<4x32xf32>
    %204 = arith.addf %203, %202 : vector<4x32xf32>
    %205 = arith.divf %203, %204 : vector<4x32xf32>
    %206 = arith.mulf %197, %179 : vector<4x32xf32>
    %207 = arith.mulf %191, %199 : vector<4x32xf32>
    %208 = arith.addf %206, %207 : vector<4x32xf32>
    %209 = math.tanh %208 : vector<4x32xf32>
    %210 = arith.mulf %205, %209 : vector<4x32xf32>
    %c24 = arith.constant 24 : index
    %c0_44 = arith.constant 0 : index
    %211 = vector.load %arg15[%c24, %c0_44] : memref<32x32xf32, #tpu.memory_space<vmem>>, vector<4x32xf32>
    tpu.vector_store %arg15[%c24, %c0_44], %210 {strides = array<i32>} : memref<32x32xf32, #tpu.memory_space<vmem>>, vector<4x32xf32>,
    %212 = vector.extract_strided_slice %6 {offsets = [28, 0], sizes = [4, 128], strides = [1, 1]} : vector<32x128xf32> to vector<4x128xf32>
    %cst_45 = arith.constant dense<0.000000e+00> : vector<4x128xf32>
    %213 = tpu.matmul %210, %2, %cst_45 {dimension_numbers = #tpu.dot_dimension_numbers<[1], [0], [0], [1], [0, 0, 1, 1], [], []>} : vector<4x32xf32>, vector<32x128xf32>, vector<4x128xf32> -> vector<4x128xf32>
    %214 = arith.addf %212, %213 : vector<4x128xf32>
    %215 = vector.extract_strided_slice %214 {offsets = [0, 0], sizes = [4, 32], strides = [1, 1]} : vector<4x128xf32> to vector<4x32xf32>
    %216 = arith.negf %215 : vector<4x32xf32>
    %217 = math.exp %216 : vector<4x32xf32>
    %cst_46 = arith.constant 1.000000e+00 : f32
    %218 = vector.broadcast %cst_46 : f32 to vector<4x32xf32>
    %219 = arith.addf %218, %217 : vector<4x32xf32>
    %220 = arith.divf %218, %219 : vector<4x32xf32>
    %221 = vector.extract_strided_slice %214 {offsets = [0, 32], sizes = [4, 32], strides = [1, 1]} : vector<4x128xf32> to vector<4x32xf32>
    %222 = arith.negf %221 : vector<4x32xf32>
    %223 = math.exp %222 : vector<4x32xf32>
    %cst_47 = arith.constant 1.000000e+00 : f32
    %224 = vector.broadcast %cst_47 : f32 to vector<4x32xf32>
    %225 = arith.addf %224, %223 : vector<4x32xf32>
    %226 = arith.divf %224, %225 : vector<4x32xf32>
    %227 = vector.extract_strided_slice %214 {offsets = [0, 64], sizes = [4, 32], strides = [1, 1]} : vector<4x128xf32> to vector<4x32xf32>
    %228 = math.tanh %227 : vector<4x32xf32>
    %229 = vector.extract_strided_slice %214 {offsets = [0, 96], sizes = [4, 32], strides = [1, 1]} : vector<4x128xf32> to vector<4x32xf32>
    %230 = arith.negf %229 : vector<4x32xf32>
    %231 = math.exp %230 : vector<4x32xf32>
    %cst_48 = arith.constant 1.000000e+00 : f32
    %232 = vector.broadcast %cst_48 : f32 to vector<4x32xf32>
    %233 = arith.addf %232, %231 : vector<4x32xf32>
    %234 = arith.divf %232, %233 : vector<4x32xf32>
    %235 = arith.mulf %226, %208 : vector<4x32xf32>
    %236 = arith.mulf %220, %228 : vector<4x32xf32>
    %237 = arith.addf %235, %236 : vector<4x32xf32>
    %238 = math.tanh %237 : vector<4x32xf32>
    %239 = arith.mulf %234, %238 : vector<4x32xf32>
    %c28 = arith.constant 28 : index
    %c0_49 = arith.constant 0 : index
    %240 = vector.load %arg15[%c28, %c0_49] : memref<32x32xf32, #tpu.memory_space<vmem>>, vector<4x32xf32>
    tpu.vector_store %arg15[%c28, %c0_49], %239 {strides = array<i32>} : memref<32x32xf32, #tpu.memory_space<vmem>>, vector<4x32xf32>,
    %c0_50 = arith.constant 0 : index
    %c0_51 = arith.constant 0 : index
    %241 = vector.load %arg15[%c0_50, %c0_51] : memref<32x32xf32, #tpu.memory_space<vmem>>, vector<32x32xf32>
    %c0_52 = arith.constant 0 : index
    %c0_53 = arith.constant 0 : index
    %242 = vector.load %arg4[%c0_52, %c0_53] : memref<32x128xf32, #tpu.memory_space<vmem>>, vector<32x128xf32>
    %c0_54 = arith.constant 0 : index
    %c0_55 = arith.constant 0 : index
    %243 = vector.load %arg5[%c0_54, %c0_55] : memref<32x128xf32, #tpu.memory_space<vmem>>, vector<32x128xf32>
    %c0_56 = arith.constant 0 : index
    %c0_57 = arith.constant 0 : index
    %244 = vector.load %arg6[%c0_56, %c0_57] : memref<1x128xf32, #tpu.memory_space<vmem>>, vector<1x128xf32>
    %cst_58 = arith.constant dense<0.000000e+00> : vector<32x128xf32>
    %245 = tpu.matmul %241, %242, %cst_58 {dimension_numbers = #tpu.dot_dimension_numbers<[1], [0], [0], [1], [0, 0, 1, 1], [], []>} : vector<32x32xf32>, vector<32x128xf32>, vector<32x128xf32> -> vector<32x128xf32>
    %246 = vector.broadcast %244 : vector<1x128xf32> to vector<32x128xf32>
    %247 = arith.addf %245, %246 : vector<32x128xf32>
    %cst_59 = arith.constant 0.000000e+00 : f32
    %248 = vector.broadcast %cst_59 : f32 to vector<4x32xf32>
    %cst_60 = arith.constant 0.000000e+00 : f32
    %249 = vector.broadcast %cst_60 : f32 to vector<4x32xf32>
    %250 = vector.extract_strided_slice %247 {offsets = [0, 0], sizes = [4, 128], strides = [1, 1]} : vector<32x128xf32> to vector<4x128xf32>
    %cst_61 = arith.constant dense<0.000000e+00> : vector<4x128xf32>
    %251 = tpu.matmul %248, %243, %cst_61 {dimension_numbers = #tpu.dot_dimension_numbers<[1], [0], [0], [1], [0, 0, 1, 1], [], []>} : vector<4x32xf32>, vector<32x128xf32>, vector<4x128xf32> -> vector<4x128xf32>
    %252 = arith.addf %250, %251 : vector<4x128xf32>
    %253 = vector.extract_strided_slice %252 {offsets = [0, 0], sizes = [4, 32], strides = [1, 1]} : vector<4x128xf32> to vector<4x32xf32>
    %254 = arith.negf %253 : vector<4x32xf32>
    %255 = math.exp %254 : vector<4x32xf32>
    %cst_62 = arith.constant 1.000000e+00 : f32
    %256 = vector.broadcast %cst_62 : f32 to vector<4x32xf32>
    %257 = arith.addf %256, %255 : vector<4x32xf32>
    %258 = arith.divf %256, %257 : vector<4x32xf32>
    %259 = vector.extract_strided_slice %252 {offsets = [0, 32], sizes = [4, 32], strides = [1, 1]} : vector<4x128xf32> to vector<4x32xf32>
    %260 = arith.negf %259 : vector<4x32xf32>
    %261 = math.exp %260 : vector<4x32xf32>
    %cst_63 = arith.constant 1.000000e+00 : f32
    %262 = vector.broadcast %cst_63 : f32 to vector<4x32xf32>
    %263 = arith.addf %262, %261 : vector<4x32xf32>
    %264 = arith.divf %262, %263 : vector<4x32xf32>
    %265 = vector.extract_strided_slice %252 {offsets = [0, 64], sizes = [4, 32], strides = [1, 1]} : vector<4x128xf32> to vector<4x32xf32>
    %266 = math.tanh %265 : vector<4x32xf32>
    %267 = vector.extract_strided_slice %252 {offsets = [0, 96], sizes = [4, 32], strides = [1, 1]} : vector<4x128xf32> to vector<4x32xf32>
    %268 = arith.negf %267 : vector<4x32xf32>
    %269 = math.exp %268 : vector<4x32xf32>
    %cst_64 = arith.constant 1.000000e+00 : f32
    %270 = vector.broadcast %cst_64 : f32 to vector<4x32xf32>
    %271 = arith.addf %270, %269 : vector<4x32xf32>
    %272 = arith.divf %270, %271 : vector<4x32xf32>
    %273 = arith.mulf %264, %249 : vector<4x32xf32>
    %274 = arith.mulf %258, %266 : vector<4x32xf32>
    %275 = arith.addf %273, %274 : vector<4x32xf32>
    %276 = math.tanh %275 : vector<4x32xf32>
    %277 = arith.mulf %272, %276 : vector<4x32xf32>
    %c0_65 = arith.constant 0 : index
    %c0_66 = arith.constant 0 : index
    %278 = vector.load %arg16[%c0_65, %c0_66] : memref<32x32xf32, #tpu.memory_space<vmem>>, vector<4x32xf32>
    tpu.vector_store %arg16[%c0_65, %c0_66], %277 {strides = array<i32>} : memref<32x32xf32, #tpu.memory_space<vmem>>, vector<4x32xf32>,
    %279 = vector.extract_strided_slice %247 {offsets = [4, 0], sizes = [4, 128], strides = [1, 1]} : vector<32x128xf32> to vector<4x128xf32>
    %cst_67 = arith.constant dense<0.000000e+00> : vector<4x128xf32>
    %280 = tpu.matmul %277, %243, %cst_67 {dimension_numbers = #tpu.dot_dimension_numbers<[1], [0], [0], [1], [0, 0, 1, 1], [], []>} : vector<4x32xf32>, vector<32x128xf32>, vector<4x128xf32> -> vector<4x128xf32>
    %281 = arith.addf %279, %280 : vector<4x128xf32>
    %282 = vector.extract_strided_slice %281 {offsets = [0, 0], sizes = [4, 32], strides = [1, 1]} : vector<4x128xf32> to vector<4x32xf32>
    %283 = arith.negf %282 : vector<4x32xf32>
    %284 = math.exp %283 : vector<4x32xf32>
    %cst_68 = arith.constant 1.000000e+00 : f32
    %285 = vector.broadcast %cst_68 : f32 to vector<4x32xf32>
    %286 = arith.addf %285, %284 : vector<4x32xf32>
    %287 = arith.divf %285, %286 : vector<4x32xf32>
    %288 = vector.extract_strided_slice %281 {offsets = [0, 32], sizes = [4, 32], strides = [1, 1]} : vector<4x128xf32> to vector<4x32xf32>
    %289 = arith.negf %288 : vector<4x32xf32>
    %290 = math.exp %289 : vector<4x32xf32>
    %cst_69 = arith.constant 1.000000e+00 : f32
    %291 = vector.broadcast %cst_69 : f32 to vector<4x32xf32>
    %292 = arith.addf %291, %290 : vector<4x32xf32>
    %293 = arith.divf %291, %292 : vector<4x32xf32>
    %294 = vector.extract_strided_slice %281 {offsets = [0, 64], sizes = [4, 32], strides = [1, 1]} : vector<4x128xf32> to vector<4x32xf32>
    %295 = math.tanh %294 : vector<4x32xf32>
    %296 = vector.extract_strided_slice %281 {offsets = [0, 96], sizes = [4, 32], strides = [1, 1]} : vector<4x128xf32> to vector<4x32xf32>
    %297 = arith.negf %296 : vector<4x32xf32>
    %298 = math.exp %297 : vector<4x32xf32>
    %cst_70 = arith.constant 1.000000e+00 : f32
    %299 = vector.broadcast %cst_70 : f32 to vector<4x32xf32>
    %300 = arith.addf %299, %298 : vector<4x32xf32>
    %301 = arith.divf %299, %300 : vector<4x32xf32>
    %302 = arith.mulf %293, %275 : vector<4x32xf32>
    %303 = arith.mulf %287, %295 : vector<4x32xf32>
    %304 = arith.addf %302, %303 : vector<4x32xf32>
    %305 = math.tanh %304 : vector<4x32xf32>
    %306 = arith.mulf %301, %305 : vector<4x32xf32>
    %c4_71 = arith.constant 4 : index
    %c0_72 = arith.constant 0 : index
    %307 = vector.load %arg16[%c4_71, %c0_72] : memref<32x32xf32, #tpu.memory_space<vmem>>, vector<4x32xf32>
    tpu.vector_store %arg16[%c4_71, %c0_72], %306 {strides = array<i32>} : memref<32x32xf32, #tpu.memory_space<vmem>>, vector<4x32xf32>,
    %308 = vector.extract_strided_slice %247 {offsets = [8, 0], sizes = [4, 128], strides = [1, 1]} : vector<32x128xf32> to vector<4x128xf32>
    %cst_73 = arith.constant dense<0.000000e+00> : vector<4x128xf32>
    %309 = tpu.matmul %306, %243, %cst_73 {dimension_numbers = #tpu.dot_dimension_numbers<[1], [0], [0], [1], [0, 0, 1, 1], [], []>} : vector<4x32xf32>, vector<32x128xf32>, vector<4x128xf32> -> vector<4x128xf32>
    %310 = arith.addf %308, %309 : vector<4x128xf32>
    %311 = vector.extract_strided_slice %310 {offsets = [0, 0], sizes = [4, 32], strides = [1, 1]} : vector<4x128xf32> to vector<4x32xf32>
    %312 = arith.negf %311 : vector<4x32xf32>
    %313 = math.exp %312 : vector<4x32xf32>
    %cst_74 = arith.constant 1.000000e+00 : f32
    %314 = vector.broadcast %cst_74 : f32 to vector<4x32xf32>
    %315 = arith.addf %314, %313 : vector<4x32xf32>
    %316 = arith.divf %314, %315 : vector<4x32xf32>
    %317 = vector.extract_strided_slice %310 {offsets = [0, 32], sizes = [4, 32], strides = [1, 1]} : vector<4x128xf32> to vector<4x32xf32>
    %318 = arith.negf %317 : vector<4x32xf32>
    %319 = math.exp %318 : vector<4x32xf32>
    %cst_75 = arith.constant 1.000000e+00 : f32
    %320 = vector.broadcast %cst_75 : f32 to vector<4x32xf32>
    %321 = arith.addf %320, %319 : vector<4x32xf32>
    %322 = arith.divf %320, %321 : vector<4x32xf32>
    %323 = vector.extract_strided_slice %310 {offsets = [0, 64], sizes = [4, 32], strides = [1, 1]} : vector<4x128xf32> to vector<4x32xf32>
    %324 = math.tanh %323 : vector<4x32xf32>
    %325 = vector.extract_strided_slice %310 {offsets = [0, 96], sizes = [4, 32], strides = [1, 1]} : vector<4x128xf32> to vector<4x32xf32>
    %326 = arith.negf %325 : vector<4x32xf32>
    %327 = math.exp %326 : vector<4x32xf32>
    %cst_76 = arith.constant 1.000000e+00 : f32
    %328 = vector.broadcast %cst_76 : f32 to vector<4x32xf32>
    %329 = arith.addf %328, %327 : vector<4x32xf32>
    %330 = arith.divf %328, %329 : vector<4x32xf32>
    %331 = arith.mulf %322, %304 : vector<4x32xf32>
    %332 = arith.mulf %316, %324 : vector<4x32xf32>
    %333 = arith.addf %331, %332 : vector<4x32xf32>
    %334 = math.tanh %333 : vector<4x32xf32>
    %335 = arith.mulf %330, %334 : vector<4x32xf32>
    %c8_77 = arith.constant 8 : index
    %c0_78 = arith.constant 0 : index
    %336 = vector.load %arg16[%c8_77, %c0_78] : memref<32x32xf32, #tpu.memory_space<vmem>>, vector<4x32xf32>
    tpu.vector_store %arg16[%c8_77, %c0_78], %335 {strides = array<i32>} : memref<32x32xf32, #tpu.memory_space<vmem>>, vector<4x32xf32>,
    %337 = vector.extract_strided_slice %247 {offsets = [12, 0], sizes = [4, 128], strides = [1, 1]} : vector<32x128xf32> to vector<4x128xf32>
    %cst_79 = arith.constant dense<0.000000e+00> : vector<4x128xf32>
    %338 = tpu.matmul %335, %243, %cst_79 {dimension_numbers = #tpu.dot_dimension_numbers<[1], [0], [0], [1], [0, 0, 1, 1], [], []>} : vector<4x32xf32>, vector<32x128xf32>, vector<4x128xf32> -> vector<4x128xf32>
    %339 = arith.addf %337, %338 : vector<4x128xf32>
    %340 = vector.extract_strided_slice %339 {offsets = [0, 0], sizes = [4, 32], strides = [1, 1]} : vector<4x128xf32> to vector<4x32xf32>
    %341 = arith.negf %340 : vector<4x32xf32>
    %342 = math.exp %341 : vector<4x32xf32>
    %cst_80 = arith.constant 1.000000e+00 : f32
    %343 = vector.broadcast %cst_80 : f32 to vector<4x32xf32>
    %344 = arith.addf %343, %342 : vector<4x32xf32>
    %345 = arith.divf %343, %344 : vector<4x32xf32>
    %346 = vector.extract_strided_slice %339 {offsets = [0, 32], sizes = [4, 32], strides = [1, 1]} : vector<4x128xf32> to vector<4x32xf32>
    %347 = arith.negf %346 : vector<4x32xf32>
    %348 = math.exp %347 : vector<4x32xf32>
    %cst_81 = arith.constant 1.000000e+00 : f32
    %349 = vector.broadcast %cst_81 : f32 to vector<4x32xf32>
    %350 = arith.addf %349, %348 : vector<4x32xf32>
    %351 = arith.divf %349, %350 : vector<4x32xf32>
    %352 = vector.extract_strided_slice %339 {offsets = [0, 64], sizes = [4, 32], strides = [1, 1]} : vector<4x128xf32> to vector<4x32xf32>
    %353 = math.tanh %352 : vector<4x32xf32>
    %354 = vector.extract_strided_slice %339 {offsets = [0, 96], sizes = [4, 32], strides = [1, 1]} : vector<4x128xf32> to vector<4x32xf32>
    %355 = arith.negf %354 : vector<4x32xf32>
    %356 = math.exp %355 : vector<4x32xf32>
    %cst_82 = arith.constant 1.000000e+00 : f32
    %357 = vector.broadcast %cst_82 : f32 to vector<4x32xf32>
    %358 = arith.addf %357, %356 : vector<4x32xf32>
    %359 = arith.divf %357, %358 : vector<4x32xf32>
    %360 = arith.mulf %351, %333 : vector<4x32xf32>
    %361 = arith.mulf %345, %353 : vector<4x32xf32>
    %362 = arith.addf %360, %361 : vector<4x32xf32>
    %363 = math.tanh %362 : vector<4x32xf32>
    %364 = arith.mulf %359, %363 : vector<4x32xf32>
    %c12_83 = arith.constant 12 : index
    %c0_84 = arith.constant 0 : index
    %365 = vector.load %arg16[%c12_83, %c0_84] : memref<32x32xf32, #tpu.memory_space<vmem>>, vector<4x32xf32>
    tpu.vector_store %arg16[%c12_83, %c0_84], %364 {strides = array<i32>} : memref<32x32xf32, #tpu.memory_space<vmem>>, vector<4x32xf32>,
    %366 = vector.extract_strided_slice %247 {offsets = [16, 0], sizes = [4, 128], strides = [1, 1]} : vector<32x128xf32> to vector<4x128xf32>
    %cst_85 = arith.constant dense<0.000000e+00> : vector<4x128xf32>
    %367 = tpu.matmul %364, %243, %cst_85 {dimension_numbers = #tpu.dot_dimension_numbers<[1], [0], [0], [1], [0, 0, 1, 1], [], []>} : vector<4x32xf32>, vector<32x128xf32>, vector<4x128xf32> -> vector<4x128xf32>
    %368 = arith.addf %366, %367 : vector<4x128xf32>
    %369 = vector.extract_strided_slice %368 {offsets = [0, 0], sizes = [4, 32], strides = [1, 1]} : vector<4x128xf32> to vector<4x32xf32>
    %370 = arith.negf %369 : vector<4x32xf32>
    %371 = math.exp %370 : vector<4x32xf32>
    %cst_86 = arith.constant 1.000000e+00 : f32
    %372 = vector.broadcast %cst_86 : f32 to vector<4x32xf32>
    %373 = arith.addf %372, %371 : vector<4x32xf32>
    %374 = arith.divf %372, %373 : vector<4x32xf32>
    %375 = vector.extract_strided_slice %368 {offsets = [0, 32], sizes = [4, 32], strides = [1, 1]} : vector<4x128xf32> to vector<4x32xf32>
    %376 = arith.negf %375 : vector<4x32xf32>
    %377 = math.exp %376 : vector<4x32xf32>
    %cst_87 = arith.constant 1.000000e+00 : f32
    %378 = vector.broadcast %cst_87 : f32 to vector<4x32xf32>
    %379 = arith.addf %378, %377 : vector<4x32xf32>
    %380 = arith.divf %378, %379 : vector<4x32xf32>
    %381 = vector.extract_strided_slice %368 {offsets = [0, 64], sizes = [4, 32], strides = [1, 1]} : vector<4x128xf32> to vector<4x32xf32>
    %382 = math.tanh %381 : vector<4x32xf32>
    %383 = vector.extract_strided_slice %368 {offsets = [0, 96], sizes = [4, 32], strides = [1, 1]} : vector<4x128xf32> to vector<4x32xf32>
    %384 = arith.negf %383 : vector<4x32xf32>
    %385 = math.exp %384 : vector<4x32xf32>
    %cst_88 = arith.constant 1.000000e+00 : f32
    %386 = vector.broadcast %cst_88 : f32 to vector<4x32xf32>
    %387 = arith.addf %386, %385 : vector<4x32xf32>
    %388 = arith.divf %386, %387 : vector<4x32xf32>
    %389 = arith.mulf %380, %362 : vector<4x32xf32>
    %390 = arith.mulf %374, %382 : vector<4x32xf32>
    %391 = arith.addf %389, %390 : vector<4x32xf32>
    %392 = math.tanh %391 : vector<4x32xf32>
    %393 = arith.mulf %388, %392 : vector<4x32xf32>
    %c16_89 = arith.constant 16 : index
    %c0_90 = arith.constant 0 : index
    %394 = vector.load %arg16[%c16_89, %c0_90] : memref<32x32xf32, #tpu.memory_space<vmem>>, vector<4x32xf32>
    tpu.vector_store %arg16[%c16_89, %c0_90], %393 {strides = array<i32>} : memref<32x32xf32, #tpu.memory_space<vmem>>, vector<4x32xf32>,
    %395 = vector.extract_strided_slice %247 {offsets = [20, 0], sizes = [4, 128], strides = [1, 1]} : vector<32x128xf32> to vector<4x128xf32>
    %cst_91 = arith.constant dense<0.000000e+00> : vector<4x128xf32>
    %396 = tpu.matmul %393, %243, %cst_91 {dimension_numbers = #tpu.dot_dimension_numbers<[1], [0], [0], [1], [0, 0, 1, 1], [], []>} : vector<4x32xf32>, vector<32x128xf32>, vector<4x128xf32> -> vector<4x128xf32>
    %397 = arith.addf %395, %396 : vector<4x128xf32>
    %398 = vector.extract_strided_slice %397 {offsets = [0, 0], sizes = [4, 32], strides = [1, 1]} : vector<4x128xf32> to vector<4x32xf32>
    %399 = arith.negf %398 : vector<4x32xf32>
    %400 = math.exp %399 : vector<4x32xf32>
    %cst_92 = arith.constant 1.000000e+00 : f32
    %401 = vector.broadcast %cst_92 : f32 to vector<4x32xf32>
    %402 = arith.addf %401, %400 : vector<4x32xf32>
    %403 = arith.divf %401, %402 : vector<4x32xf32>
    %404 = vector.extract_strided_slice %397 {offsets = [0, 32], sizes = [4, 32], strides = [1, 1]} : vector<4x128xf32> to vector<4x32xf32>
    %405 = arith.negf %404 : vector<4x32xf32>
    %406 = math.exp %405 : vector<4x32xf32>
    %cst_93 = arith.constant 1.000000e+00 : f32
    %407 = vector.broadcast %cst_93 : f32 to vector<4x32xf32>
    %408 = arith.addf %407, %406 : vector<4x32xf32>
    %409 = arith.divf %407, %408 : vector<4x32xf32>
    %410 = vector.extract_strided_slice %397 {offsets = [0, 64], sizes = [4, 32], strides = [1, 1]} : vector<4x128xf32> to vector<4x32xf32>
    %411 = math.tanh %410 : vector<4x32xf32>
    %412 = vector.extract_strided_slice %397 {offsets = [0, 96], sizes = [4, 32], strides = [1, 1]} : vector<4x128xf32> to vector<4x32xf32>
    %413 = arith.negf %412 : vector<4x32xf32>
    %414 = math.exp %413 : vector<4x32xf32>
    %cst_94 = arith.constant 1.000000e+00 : f32
    %415 = vector.broadcast %cst_94 : f32 to vector<4x32xf32>
    %416 = arith.addf %415, %414 : vector<4x32xf32>
    %417 = arith.divf %415, %416 : vector<4x32xf32>
    %418 = arith.mulf %409, %391 : vector<4x32xf32>
    %419 = arith.mulf %403, %411 : vector<4x32xf32>
    %420 = arith.addf %418, %419 : vector<4x32xf32>
    %421 = math.tanh %420 : vector<4x32xf32>
    %422 = arith.mulf %417, %421 : vector<4x32xf32>
    %c20_95 = arith.constant 20 : index
    %c0_96 = arith.constant 0 : index
    %423 = vector.load %arg16[%c20_95, %c0_96] : memref<32x32xf32, #tpu.memory_space<vmem>>, vector<4x32xf32>
    tpu.vector_store %arg16[%c20_95, %c0_96], %422 {strides = array<i32>} : memref<32x32xf32, #tpu.memory_space<vmem>>, vector<4x32xf32>,
    %424 = vector.extract_strided_slice %247 {offsets = [24, 0], sizes = [4, 128], strides = [1, 1]} : vector<32x128xf32> to vector<4x128xf32>
    %cst_97 = arith.constant dense<0.000000e+00> : vector<4x128xf32>
    %425 = tpu.matmul %422, %243, %cst_97 {dimension_numbers = #tpu.dot_dimension_numbers<[1], [0], [0], [1], [0, 0, 1, 1], [], []>} : vector<4x32xf32>, vector<32x128xf32>, vector<4x128xf32> -> vector<4x128xf32>
    %426 = arith.addf %424, %425 : vector<4x128xf32>
    %427 = vector.extract_strided_slice %426 {offsets = [0, 0], sizes = [4, 32], strides = [1, 1]} : vector<4x128xf32> to vector<4x32xf32>
    %428 = arith.negf %427 : vector<4x32xf32>
    %429 = math.exp %428 : vector<4x32xf32>
    %cst_98 = arith.constant 1.000000e+00 : f32
    %430 = vector.broadcast %cst_98 : f32 to vector<4x32xf32>
    %431 = arith.addf %430, %429 : vector<4x32xf32>
    %432 = arith.divf %430, %431 : vector<4x32xf32>
    %433 = vector.extract_strided_slice %426 {offsets = [0, 32], sizes = [4, 32], strides = [1, 1]} : vector<4x128xf32> to vector<4x32xf32>
    %434 = arith.negf %433 : vector<4x32xf32>
    %435 = math.exp %434 : vector<4x32xf32>
    %cst_99 = arith.constant 1.000000e+00 : f32
    %436 = vector.broadcast %cst_99 : f32 to vector<4x32xf32>
    %437 = arith.addf %436, %435 : vector<4x32xf32>
    %438 = arith.divf %436, %437 : vector<4x32xf32>
    %439 = vector.extract_strided_slice %426 {offsets = [0, 64], sizes = [4, 32], strides = [1, 1]} : vector<4x128xf32> to vector<4x32xf32>
    %440 = math.tanh %439 : vector<4x32xf32>
    %441 = vector.extract_strided_slice %426 {offsets = [0, 96], sizes = [4, 32], strides = [1, 1]} : vector<4x128xf32> to vector<4x32xf32>
    %442 = arith.negf %441 : vector<4x32xf32>
    %443 = math.exp %442 : vector<4x32xf32>
    %cst_100 = arith.constant 1.000000e+00 : f32
    %444 = vector.broadcast %cst_100 : f32 to vector<4x32xf32>
    %445 = arith.addf %444, %443 : vector<4x32xf32>
    %446 = arith.divf %444, %445 : vector<4x32xf32>
    %447 = arith.mulf %438, %420 : vector<4x32xf32>
    %448 = arith.mulf %432, %440 : vector<4x32xf32>
    %449 = arith.addf %447, %448 : vector<4x32xf32>
    %450 = math.tanh %449 : vector<4x32xf32>
    %451 = arith.mulf %446, %450 : vector<4x32xf32>
    %c24_101 = arith.constant 24 : index
    %c0_102 = arith.constant 0 : index
    %452 = vector.load %arg16[%c24_101, %c0_102] : memref<32x32xf32, #tpu.memory_space<vmem>>, vector<4x32xf32>
    tpu.vector_store %arg16[%c24_101, %c0_102], %451 {strides = array<i32>} : memref<32x32xf32, #tpu.memory_space<vmem>>, vector<4x32xf32>,
    %453 = vector.extract_strided_slice %247 {offsets = [28, 0], sizes = [4, 128], strides = [1, 1]} : vector<32x128xf32> to vector<4x128xf32>
    %cst_103 = arith.constant dense<0.000000e+00> : vector<4x128xf32>
    %454 = tpu.matmul %451, %243, %cst_103 {dimension_numbers = #tpu.dot_dimension_numbers<[1], [0], [0], [1], [0, 0, 1, 1], [], []>} : vector<4x32xf32>, vector<32x128xf32>, vector<4x128xf32> -> vector<4x128xf32>
    %455 = arith.addf %453, %454 : vector<4x128xf32>
    %456 = vector.extract_strided_slice %455 {offsets = [0, 0], sizes = [4, 32], strides = [1, 1]} : vector<4x128xf32> to vector<4x32xf32>
    %457 = arith.negf %456 : vector<4x32xf32>
    %458 = math.exp %457 : vector<4x32xf32>
    %cst_104 = arith.constant 1.000000e+00 : f32
    %459 = vector.broadcast %cst_104 : f32 to vector<4x32xf32>
    %460 = arith.addf %459, %458 : vector<4x32xf32>
    %461 = arith.divf %459, %460 : vector<4x32xf32>
    %462 = vector.extract_strided_slice %455 {offsets = [0, 32], sizes = [4, 32], strides = [1, 1]} : vector<4x128xf32> to vector<4x32xf32>
    %463 = arith.negf %462 : vector<4x32xf32>
    %464 = math.exp %463 : vector<4x32xf32>
    %cst_105 = arith.constant 1.000000e+00 : f32
    %465 = vector.broadcast %cst_105 : f32 to vector<4x32xf32>
    %466 = arith.addf %465, %464 : vector<4x32xf32>
    %467 = arith.divf %465, %466 : vector<4x32xf32>
    %468 = vector.extract_strided_slice %455 {offsets = [0, 64], sizes = [4, 32], strides = [1, 1]} : vector<4x128xf32> to vector<4x32xf32>
    %469 = math.tanh %468 : vector<4x32xf32>
    %470 = vector.extract_strided_slice %455 {offsets = [0, 96], sizes = [4, 32], strides = [1, 1]} : vector<4x128xf32> to vector<4x32xf32>
    %471 = arith.negf %470 : vector<4x32xf32>
    %472 = math.exp %471 : vector<4x32xf32>
    %cst_106 = arith.constant 1.000000e+00 : f32
    %473 = vector.broadcast %cst_106 : f32 to vector<4x32xf32>
    %474 = arith.addf %473, %472 : vector<4x32xf32>
    %475 = arith.divf %473, %474 : vector<4x32xf32>
    %476 = arith.mulf %467, %449 : vector<4x32xf32>
    %477 = arith.mulf %461, %469 : vector<4x32xf32>
    %478 = arith.addf %476, %477 : vector<4x32xf32>
    %479 = math.tanh %478 : vector<4x32xf32>
    %480 = arith.mulf %475, %479 : vector<4x32xf32>
    %c28_107 = arith.constant 28 : index
    %c0_108 = arith.constant 0 : index
    %481 = vector.load %arg16[%c28_107, %c0_108] : memref<32x32xf32, #tpu.memory_space<vmem>>, vector<4x32xf32>
    tpu.vector_store %arg16[%c28_107, %c0_108], %480 {strides = array<i32>} : memref<32x32xf32, #tpu.memory_space<vmem>>, vector<4x32xf32>,
    %c0_109 = arith.constant 0 : index
    %c0_110 = arith.constant 0 : index
    %482 = vector.load %arg16[%c0_109, %c0_110] : memref<32x32xf32, #tpu.memory_space<vmem>>, vector<32x32xf32>
    %c0_111 = arith.constant 0 : index
    %c0_112 = arith.constant 0 : index
    %483 = vector.load %arg7[%c0_111, %c0_112] : memref<32x128xf32, #tpu.memory_space<vmem>>, vector<32x128xf32>
    %c0_113 = arith.constant 0 : index
    %c0_114 = arith.constant 0 : index
    %484 = vector.load %arg8[%c0_113, %c0_114] : memref<32x128xf32, #tpu.memory_space<vmem>>, vector<32x128xf32>
    %c0_115 = arith.constant 0 : index
    %c0_116 = arith.constant 0 : index
    %485 = vector.load %arg9[%c0_115, %c0_116] : memref<1x128xf32, #tpu.memory_space<vmem>>, vector<1x128xf32>
    %cst_117 = arith.constant dense<0.000000e+00> : vector<32x128xf32>
    %486 = tpu.matmul %482, %483, %cst_117 {dimension_numbers = #tpu.dot_dimension_numbers<[1], [0], [0], [1], [0, 0, 1, 1], [], []>} : vector<32x32xf32>, vector<32x128xf32>, vector<32x128xf32> -> vector<32x128xf32>
    %487 = vector.broadcast %485 : vector<1x128xf32> to vector<32x128xf32>
    %488 = arith.addf %486, %487 : vector<32x128xf32>
    %cst_118 = arith.constant 0.000000e+00 : f32
    %489 = vector.broadcast %cst_118 : f32 to vector<4x32xf32>
    %cst_119 = arith.constant 0.000000e+00 : f32
    %490 = vector.broadcast %cst_119 : f32 to vector<4x32xf32>
    %491 = vector.extract_strided_slice %488 {offsets = [0, 0], sizes = [4, 128], strides = [1, 1]} : vector<32x128xf32> to vector<4x128xf32>
    %cst_120 = arith.constant dense<0.000000e+00> : vector<4x128xf32>
    %492 = tpu.matmul %489, %484, %cst_120 {dimension_numbers = #tpu.dot_dimension_numbers<[1], [0], [0], [1], [0, 0, 1, 1], [], []>} : vector<4x32xf32>, vector<32x128xf32>, vector<4x128xf32> -> vector<4x128xf32>
    %493 = arith.addf %491, %492 : vector<4x128xf32>
    %494 = vector.extract_strided_slice %493 {offsets = [0, 0], sizes = [4, 32], strides = [1, 1]} : vector<4x128xf32> to vector<4x32xf32>
    %495 = arith.negf %494 : vector<4x32xf32>
    %496 = math.exp %495 : vector<4x32xf32>
    %cst_121 = arith.constant 1.000000e+00 : f32
    %497 = vector.broadcast %cst_121 : f32 to vector<4x32xf32>
    %498 = arith.addf %497, %496 : vector<4x32xf32>
    %499 = arith.divf %497, %498 : vector<4x32xf32>
    %500 = vector.extract_strided_slice %493 {offsets = [0, 32], sizes = [4, 32], strides = [1, 1]} : vector<4x128xf32> to vector<4x32xf32>
    %501 = arith.negf %500 : vector<4x32xf32>
    %502 = math.exp %501 : vector<4x32xf32>
    %cst_122 = arith.constant 1.000000e+00 : f32
    %503 = vector.broadcast %cst_122 : f32 to vector<4x32xf32>
    %504 = arith.addf %503, %502 : vector<4x32xf32>
    %505 = arith.divf %503, %504 : vector<4x32xf32>
    %506 = vector.extract_strided_slice %493 {offsets = [0, 64], sizes = [4, 32], strides = [1, 1]} : vector<4x128xf32> to vector<4x32xf32>
    %507 = math.tanh %506 : vector<4x32xf32>
    %508 = vector.extract_strided_slice %493 {offsets = [0, 96], sizes = [4, 32], strides = [1, 1]} : vector<4x128xf32> to vector<4x32xf32>
    %509 = arith.negf %508 : vector<4x32xf32>
    %510 = math.exp %509 : vector<4x32xf32>
    %cst_123 = arith.constant 1.000000e+00 : f32
    %511 = vector.broadcast %cst_123 : f32 to vector<4x32xf32>
    %512 = arith.addf %511, %510 : vector<4x32xf32>
    %513 = arith.divf %511, %512 : vector<4x32xf32>
    %514 = arith.mulf %505, %490 : vector<4x32xf32>
    %515 = arith.mulf %499, %507 : vector<4x32xf32>
    %516 = arith.addf %514, %515 : vector<4x32xf32>
    %517 = math.tanh %516 : vector<4x32xf32>
    %518 = arith.mulf %513, %517 : vector<4x32xf32>
    %c0_124 = arith.constant 0 : index
    %c0_125 = arith.constant 0 : index
    %519 = vector.load %arg17[%c0_124, %c0_125] : memref<32x32xf32, #tpu.memory_space<vmem>>, vector<4x32xf32>
    tpu.vector_store %arg17[%c0_124, %c0_125], %518 {strides = array<i32>} : memref<32x32xf32, #tpu.memory_space<vmem>>, vector<4x32xf32>,
    %520 = vector.extract_strided_slice %488 {offsets = [4, 0], sizes = [4, 128], strides = [1, 1]} : vector<32x128xf32> to vector<4x128xf32>
    %cst_126 = arith.constant dense<0.000000e+00> : vector<4x128xf32>
    %521 = tpu.matmul %518, %484, %cst_126 {dimension_numbers = #tpu.dot_dimension_numbers<[1], [0], [0], [1], [0, 0, 1, 1], [], []>} : vector<4x32xf32>, vector<32x128xf32>, vector<4x128xf32> -> vector<4x128xf32>
    %522 = arith.addf %520, %521 : vector<4x128xf32>
    %523 = vector.extract_strided_slice %522 {offsets = [0, 0], sizes = [4, 32], strides = [1, 1]} : vector<4x128xf32> to vector<4x32xf32>
    %524 = arith.negf %523 : vector<4x32xf32>
    %525 = math.exp %524 : vector<4x32xf32>
    %cst_127 = arith.constant 1.000000e+00 : f32
    %526 = vector.broadcast %cst_127 : f32 to vector<4x32xf32>
    %527 = arith.addf %526, %525 : vector<4x32xf32>
    %528 = arith.divf %526, %527 : vector<4x32xf32>
    %529 = vector.extract_strided_slice %522 {offsets = [0, 32], sizes = [4, 32], strides = [1, 1]} : vector<4x128xf32> to vector<4x32xf32>
    %530 = arith.negf %529 : vector<4x32xf32>
    %531 = math.exp %530 : vector<4x32xf32>
    %cst_128 = arith.constant 1.000000e+00 : f32
    %532 = vector.broadcast %cst_128 : f32 to vector<4x32xf32>
    %533 = arith.addf %532, %531 : vector<4x32xf32>
    %534 = arith.divf %532, %533 : vector<4x32xf32>
    %535 = vector.extract_strided_slice %522 {offsets = [0, 64], sizes = [4, 32], strides = [1, 1]} : vector<4x128xf32> to vector<4x32xf32>
    %536 = math.tanh %535 : vector<4x32xf32>
    %537 = vector.extract_strided_slice %522 {offsets = [0, 96], sizes = [4, 32], strides = [1, 1]} : vector<4x128xf32> to vector<4x32xf32>
    %538 = arith.negf %537 : vector<4x32xf32>
    %539 = math.exp %538 : vector<4x32xf32>
    %cst_129 = arith.constant 1.000000e+00 : f32
    %540 = vector.broadcast %cst_129 : f32 to vector<4x32xf32>
    %541 = arith.addf %540, %539 : vector<4x32xf32>
    %542 = arith.divf %540, %541 : vector<4x32xf32>
    %543 = arith.mulf %534, %516 : vector<4x32xf32>
    %544 = arith.mulf %528, %536 : vector<4x32xf32>
    %545 = arith.addf %543, %544 : vector<4x32xf32>
    %546 = math.tanh %545 : vector<4x32xf32>
    %547 = arith.mulf %542, %546 : vector<4x32xf32>
    %c4_130 = arith.constant 4 : index
    %c0_131 = arith.constant 0 : index
    %548 = vector.load %arg17[%c4_130, %c0_131] : memref<32x32xf32, #tpu.memory_space<vmem>>, vector<4x32xf32>
    tpu.vector_store %arg17[%c4_130, %c0_131], %547 {strides = array<i32>} : memref<32x32xf32, #tpu.memory_space<vmem>>, vector<4x32xf32>,
    %549 = vector.extract_strided_slice %488 {offsets = [8, 0], sizes = [4, 128], strides = [1, 1]} : vector<32x128xf32> to vector<4x128xf32>
    %cst_132 = arith.constant dense<0.000000e+00> : vector<4x128xf32>
    %550 = tpu.matmul %547, %484, %cst_132 {dimension_numbers = #tpu.dot_dimension_numbers<[1], [0], [0], [1], [0, 0, 1, 1], [], []>} : vector<4x32xf32>, vector<32x128xf32>, vector<4x128xf32> -> vector<4x128xf32>
    %551 = arith.addf %549, %550 : vector<4x128xf32>
    %552 = vector.extract_strided_slice %551 {offsets = [0, 0], sizes = [4, 32], strides = [1, 1]} : vector<4x128xf32> to vector<4x32xf32>
    %553 = arith.negf %552 : vector<4x32xf32>
    %554 = math.exp %553 : vector<4x32xf32>
    %cst_133 = arith.constant 1.000000e+00 : f32
    %555 = vector.broadcast %cst_133 : f32 to vector<4x32xf32>
    %556 = arith.addf %555, %554 : vector<4x32xf32>
    %557 = arith.divf %555, %556 : vector<4x32xf32>
    %558 = vector.extract_strided_slice %551 {offsets = [0, 32], sizes = [4, 32], strides = [1, 1]} : vector<4x128xf32> to vector<4x32xf32>
    %559 = arith.negf %558 : vector<4x32xf32>
    %560 = math.exp %559 : vector<4x32xf32>
    %cst_134 = arith.constant 1.000000e+00 : f32
    %561 = vector.broadcast %cst_134 : f32 to vector<4x32xf32>
    %562 = arith.addf %561, %560 : vector<4x32xf32>
    %563 = arith.divf %561, %562 : vector<4x32xf32>
    %564 = vector.extract_strided_slice %551 {offsets = [0, 64], sizes = [4, 32], strides = [1, 1]} : vector<4x128xf32> to vector<4x32xf32>
    %565 = math.tanh %564 : vector<4x32xf32>
    %566 = vector.extract_strided_slice %551 {offsets = [0, 96], sizes = [4, 32], strides = [1, 1]} : vector<4x128xf32> to vector<4x32xf32>
    %567 = arith.negf %566 : vector<4x32xf32>
    %568 = math.exp %567 : vector<4x32xf32>
    %cst_135 = arith.constant 1.000000e+00 : f32
    %569 = vector.broadcast %cst_135 : f32 to vector<4x32xf32>
    %570 = arith.addf %569, %568 : vector<4x32xf32>
    %571 = arith.divf %569, %570 : vector<4x32xf32>
    %572 = arith.mulf %563, %545 : vector<4x32xf32>
    %573 = arith.mulf %557, %565 : vector<4x32xf32>
    %574 = arith.addf %572, %573 : vector<4x32xf32>
    %575 = math.tanh %574 : vector<4x32xf32>
    %576 = arith.mulf %571, %575 : vector<4x32xf32>
    %c8_136 = arith.constant 8 : index
    %c0_137 = arith.constant 0 : index
    %577 = vector.load %arg17[%c8_136, %c0_137] : memref<32x32xf32, #tpu.memory_space<vmem>>, vector<4x32xf32>
    tpu.vector_store %arg17[%c8_136, %c0_137], %576 {strides = array<i32>} : memref<32x32xf32, #tpu.memory_space<vmem>>, vector<4x32xf32>,
    %578 = vector.extract_strided_slice %488 {offsets = [12, 0], sizes = [4, 128], strides = [1, 1]} : vector<32x128xf32> to vector<4x128xf32>
    %cst_138 = arith.constant dense<0.000000e+00> : vector<4x128xf32>
    %579 = tpu.matmul %576, %484, %cst_138 {dimension_numbers = #tpu.dot_dimension_numbers<[1], [0], [0], [1], [0, 0, 1, 1], [], []>} : vector<4x32xf32>, vector<32x128xf32>, vector<4x128xf32> -> vector<4x128xf32>
    %580 = arith.addf %578, %579 : vector<4x128xf32>
    %581 = vector.extract_strided_slice %580 {offsets = [0, 0], sizes = [4, 32], strides = [1, 1]} : vector<4x128xf32> to vector<4x32xf32>
    %582 = arith.negf %581 : vector<4x32xf32>
    %583 = math.exp %582 : vector<4x32xf32>
    %cst_139 = arith.constant 1.000000e+00 : f32
    %584 = vector.broadcast %cst_139 : f32 to vector<4x32xf32>
    %585 = arith.addf %584, %583 : vector<4x32xf32>
    %586 = arith.divf %584, %585 : vector<4x32xf32>
    %587 = vector.extract_strided_slice %580 {offsets = [0, 32], sizes = [4, 32], strides = [1, 1]} : vector<4x128xf32> to vector<4x32xf32>
    %588 = arith.negf %587 : vector<4x32xf32>
    %589 = math.exp %588 : vector<4x32xf32>
    %cst_140 = arith.constant 1.000000e+00 : f32
    %590 = vector.broadcast %cst_140 : f32 to vector<4x32xf32>
    %591 = arith.addf %590, %589 : vector<4x32xf32>
    %592 = arith.divf %590, %591 : vector<4x32xf32>
    %593 = vector.extract_strided_slice %580 {offsets = [0, 64], sizes = [4, 32], strides = [1, 1]} : vector<4x128xf32> to vector<4x32xf32>
    %594 = math.tanh %593 : vector<4x32xf32>
    %595 = vector.extract_strided_slice %580 {offsets = [0, 96], sizes = [4, 32], strides = [1, 1]} : vector<4x128xf32> to vector<4x32xf32>
    %596 = arith.negf %595 : vector<4x32xf32>
    %597 = math.exp %596 : vector<4x32xf32>
    %cst_141 = arith.constant 1.000000e+00 : f32
    %598 = vector.broadcast %cst_141 : f32 to vector<4x32xf32>
    %599 = arith.addf %598, %597 : vector<4x32xf32>
    %600 = arith.divf %598, %599 : vector<4x32xf32>
    %601 = arith.mulf %592, %574 : vector<4x32xf32>
    %602 = arith.mulf %586, %594 : vector<4x32xf32>
    %603 = arith.addf %601, %602 : vector<4x32xf32>
    %604 = math.tanh %603 : vector<4x32xf32>
    %605 = arith.mulf %600, %604 : vector<4x32xf32>
    %c12_142 = arith.constant 12 : index
    %c0_143 = arith.constant 0 : index
    %606 = vector.load %arg17[%c12_142, %c0_143] : memref<32x32xf32, #tpu.memory_space<vmem>>, vector<4x32xf32>
    tpu.vector_store %arg17[%c12_142, %c0_143], %605 {strides = array<i32>} : memref<32x32xf32, #tpu.memory_space<vmem>>, vector<4x32xf32>,
    %607 = vector.extract_strided_slice %488 {offsets = [16, 0], sizes = [4, 128], strides = [1, 1]} : vector<32x128xf32> to vector<4x128xf32>
    %cst_144 = arith.constant dense<0.000000e+00> : vector<4x128xf32>
    %608 = tpu.matmul %605, %484, %cst_144 {dimension_numbers = #tpu.dot_dimension_numbers<[1], [0], [0], [1], [0, 0, 1, 1], [], []>} : vector<4x32xf32>, vector<32x128xf32>, vector<4x128xf32> -> vector<4x128xf32>
    %609 = arith.addf %607, %608 : vector<4x128xf32>
    %610 = vector.extract_strided_slice %609 {offsets = [0, 0], sizes = [4, 32], strides = [1, 1]} : vector<4x128xf32> to vector<4x32xf32>
    %611 = arith.negf %610 : vector<4x32xf32>
    %612 = math.exp %611 : vector<4x32xf32>
    %cst_145 = arith.constant 1.000000e+00 : f32
    %613 = vector.broadcast %cst_145 : f32 to vector<4x32xf32>
    %614 = arith.addf %613, %612 : vector<4x32xf32>
    %615 = arith.divf %613, %614 : vector<4x32xf32>
    %616 = vector.extract_strided_slice %609 {offsets = [0, 32], sizes = [4, 32], strides = [1, 1]} : vector<4x128xf32> to vector<4x32xf32>
    %617 = arith.negf %616 : vector<4x32xf32>
    %618 = math.exp %617 : vector<4x32xf32>
    %cst_146 = arith.constant 1.000000e+00 : f32
    %619 = vector.broadcast %cst_146 : f32 to vector<4x32xf32>
    %620 = arith.addf %619, %618 : vector<4x32xf32>
    %621 = arith.divf %619, %620 : vector<4x32xf32>
    %622 = vector.extract_strided_slice %609 {offsets = [0, 64], sizes = [4, 32], strides = [1, 1]} : vector<4x128xf32> to vector<4x32xf32>
    %623 = math.tanh %622 : vector<4x32xf32>
    %624 = vector.extract_strided_slice %609 {offsets = [0, 96], sizes = [4, 32], strides = [1, 1]} : vector<4x128xf32> to vector<4x32xf32>
    %625 = arith.negf %624 : vector<4x32xf32>
    %626 = math.exp %625 : vector<4x32xf32>
    %cst_147 = arith.constant 1.000000e+00 : f32
    %627 = vector.broadcast %cst_147 : f32 to vector<4x32xf32>
    %628 = arith.addf %627, %626 : vector<4x32xf32>
    %629 = arith.divf %627, %628 : vector<4x32xf32>
    %630 = arith.mulf %621, %603 : vector<4x32xf32>
    %631 = arith.mulf %615, %623 : vector<4x32xf32>
    %632 = arith.addf %630, %631 : vector<4x32xf32>
    %633 = math.tanh %632 : vector<4x32xf32>
    %634 = arith.mulf %629, %633 : vector<4x32xf32>
    %c16_148 = arith.constant 16 : index
    %c0_149 = arith.constant 0 : index
    %635 = vector.load %arg17[%c16_148, %c0_149] : memref<32x32xf32, #tpu.memory_space<vmem>>, vector<4x32xf32>
    tpu.vector_store %arg17[%c16_148, %c0_149], %634 {strides = array<i32>} : memref<32x32xf32, #tpu.memory_space<vmem>>, vector<4x32xf32>,
    %636 = vector.extract_strided_slice %488 {offsets = [20, 0], sizes = [4, 128], strides = [1, 1]} : vector<32x128xf32> to vector<4x128xf32>
    %cst_150 = arith.constant dense<0.000000e+00> : vector<4x128xf32>
    %637 = tpu.matmul %634, %484, %cst_150 {dimension_numbers = #tpu.dot_dimension_numbers<[1], [0], [0], [1], [0, 0, 1, 1], [], []>} : vector<4x32xf32>, vector<32x128xf32>, vector<4x128xf32> -> vector<4x128xf32>
    %638 = arith.addf %636, %637 : vector<4x128xf32>
    %639 = vector.extract_strided_slice %638 {offsets = [0, 0], sizes = [4, 32], strides = [1, 1]} : vector<4x128xf32> to vector<4x32xf32>
    %640 = arith.negf %639 : vector<4x32xf32>
    %641 = math.exp %640 : vector<4x32xf32>
    %cst_151 = arith.constant 1.000000e+00 : f32
    %642 = vector.broadcast %cst_151 : f32 to vector<4x32xf32>
    %643 = arith.addf %642, %641 : vector<4x32xf32>
    %644 = arith.divf %642, %643 : vector<4x32xf32>
    %645 = vector.extract_strided_slice %638 {offsets = [0, 32], sizes = [4, 32], strides = [1, 1]} : vector<4x128xf32> to vector<4x32xf32>
    %646 = arith.negf %645 : vector<4x32xf32>
    %647 = math.exp %646 : vector<4x32xf32>
    %cst_152 = arith.constant 1.000000e+00 : f32
    %648 = vector.broadcast %cst_152 : f32 to vector<4x32xf32>
    %649 = arith.addf %648, %647 : vector<4x32xf32>
    %650 = arith.divf %648, %649 : vector<4x32xf32>
    %651 = vector.extract_strided_slice %638 {offsets = [0, 64], sizes = [4, 32], strides = [1, 1]} : vector<4x128xf32> to vector<4x32xf32>
    %652 = math.tanh %651 : vector<4x32xf32>
    %653 = vector.extract_strided_slice %638 {offsets = [0, 96], sizes = [4, 32], strides = [1, 1]} : vector<4x128xf32> to vector<4x32xf32>
    %654 = arith.negf %653 : vector<4x32xf32>
    %655 = math.exp %654 : vector<4x32xf32>
    %cst_153 = arith.constant 1.000000e+00 : f32
    %656 = vector.broadcast %cst_153 : f32 to vector<4x32xf32>
    %657 = arith.addf %656, %655 : vector<4x32xf32>
    %658 = arith.divf %656, %657 : vector<4x32xf32>
    %659 = arith.mulf %650, %632 : vector<4x32xf32>
    %660 = arith.mulf %644, %652 : vector<4x32xf32>
    %661 = arith.addf %659, %660 : vector<4x32xf32>
    %662 = math.tanh %661 : vector<4x32xf32>
    %663 = arith.mulf %658, %662 : vector<4x32xf32>
    %c20_154 = arith.constant 20 : index
    %c0_155 = arith.constant 0 : index
    %664 = vector.load %arg17[%c20_154, %c0_155] : memref<32x32xf32, #tpu.memory_space<vmem>>, vector<4x32xf32>
    tpu.vector_store %arg17[%c20_154, %c0_155], %663 {strides = array<i32>} : memref<32x32xf32, #tpu.memory_space<vmem>>, vector<4x32xf32>,
    %665 = vector.extract_strided_slice %488 {offsets = [24, 0], sizes = [4, 128], strides = [1, 1]} : vector<32x128xf32> to vector<4x128xf32>
    %cst_156 = arith.constant dense<0.000000e+00> : vector<4x128xf32>
    %666 = tpu.matmul %663, %484, %cst_156 {dimension_numbers = #tpu.dot_dimension_numbers<[1], [0], [0], [1], [0, 0, 1, 1], [], []>} : vector<4x32xf32>, vector<32x128xf32>, vector<4x128xf32> -> vector<4x128xf32>
    %667 = arith.addf %665, %666 : vector<4x128xf32>
    %668 = vector.extract_strided_slice %667 {offsets = [0, 0], sizes = [4, 32], strides = [1, 1]} : vector<4x128xf32> to vector<4x32xf32>
    %669 = arith.negf %668 : vector<4x32xf32>
    %670 = math.exp %669 : vector<4x32xf32>
    %cst_157 = arith.constant 1.000000e+00 : f32
    %671 = vector.broadcast %cst_157 : f32 to vector<4x32xf32>
    %672 = arith.addf %671, %670 : vector<4x32xf32>
    %673 = arith.divf %671, %672 : vector<4x32xf32>
    %674 = vector.extract_strided_slice %667 {offsets = [0, 32], sizes = [4, 32], strides = [1, 1]} : vector<4x128xf32> to vector<4x32xf32>
    %675 = arith.negf %674 : vector<4x32xf32>
    %676 = math.exp %675 : vector<4x32xf32>
    %cst_158 = arith.constant 1.000000e+00 : f32
    %677 = vector.broadcast %cst_158 : f32 to vector<4x32xf32>
    %678 = arith.addf %677, %676 : vector<4x32xf32>
    %679 = arith.divf %677, %678 : vector<4x32xf32>
    %680 = vector.extract_strided_slice %667 {offsets = [0, 64], sizes = [4, 32], strides = [1, 1]} : vector<4x128xf32> to vector<4x32xf32>
    %681 = math.tanh %680 : vector<4x32xf32>
    %682 = vector.extract_strided_slice %667 {offsets = [0, 96], sizes = [4, 32], strides = [1, 1]} : vector<4x128xf32> to vector<4x32xf32>
    %683 = arith.negf %682 : vector<4x32xf32>
    %684 = math.exp %683 : vector<4x32xf32>
    %cst_159 = arith.constant 1.000000e+00 : f32
    %685 = vector.broadcast %cst_159 : f32 to vector<4x32xf32>
    %686 = arith.addf %685, %684 : vector<4x32xf32>
    %687 = arith.divf %685, %686 : vector<4x32xf32>
    %688 = arith.mulf %679, %661 : vector<4x32xf32>
    %689 = arith.mulf %673, %681 : vector<4x32xf32>
    %690 = arith.addf %688, %689 : vector<4x32xf32>
    %691 = math.tanh %690 : vector<4x32xf32>
    %692 = arith.mulf %687, %691 : vector<4x32xf32>
    %c24_160 = arith.constant 24 : index
    %c0_161 = arith.constant 0 : index
    %693 = vector.load %arg17[%c24_160, %c0_161] : memref<32x32xf32, #tpu.memory_space<vmem>>, vector<4x32xf32>
    tpu.vector_store %arg17[%c24_160, %c0_161], %692 {strides = array<i32>} : memref<32x32xf32, #tpu.memory_space<vmem>>, vector<4x32xf32>,
    %694 = vector.extract_strided_slice %488 {offsets = [28, 0], sizes = [4, 128], strides = [1, 1]} : vector<32x128xf32> to vector<4x128xf32>
    %cst_162 = arith.constant dense<0.000000e+00> : vector<4x128xf32>
    %695 = tpu.matmul %692, %484, %cst_162 {dimension_numbers = #tpu.dot_dimension_numbers<[1], [0], [0], [1], [0, 0, 1, 1], [], []>} : vector<4x32xf32>, vector<32x128xf32>, vector<4x128xf32> -> vector<4x128xf32>
    %696 = arith.addf %694, %695 : vector<4x128xf32>
    %697 = vector.extract_strided_slice %696 {offsets = [0, 0], sizes = [4, 32], strides = [1, 1]} : vector<4x128xf32> to vector<4x32xf32>
    %698 = arith.negf %697 : vector<4x32xf32>
    %699 = math.exp %698 : vector<4x32xf32>
    %cst_163 = arith.constant 1.000000e+00 : f32
    %700 = vector.broadcast %cst_163 : f32 to vector<4x32xf32>
    %701 = arith.addf %700, %699 : vector<4x32xf32>
    %702 = arith.divf %700, %701 : vector<4x32xf32>
    %703 = vector.extract_strided_slice %696 {offsets = [0, 32], sizes = [4, 32], strides = [1, 1]} : vector<4x128xf32> to vector<4x32xf32>
    %704 = arith.negf %703 : vector<4x32xf32>
    %705 = math.exp %704 : vector<4x32xf32>
    %cst_164 = arith.constant 1.000000e+00 : f32
    %706 = vector.broadcast %cst_164 : f32 to vector<4x32xf32>
    %707 = arith.addf %706, %705 : vector<4x32xf32>
    %708 = arith.divf %706, %707 : vector<4x32xf32>
    %709 = vector.extract_strided_slice %696 {offsets = [0, 64], sizes = [4, 32], strides = [1, 1]} : vector<4x128xf32> to vector<4x32xf32>
    %710 = math.tanh %709 : vector<4x32xf32>
    %711 = vector.extract_strided_slice %696 {offsets = [0, 96], sizes = [4, 32], strides = [1, 1]} : vector<4x128xf32> to vector<4x32xf32>
    %712 = arith.negf %711 : vector<4x32xf32>
    %713 = math.exp %712 : vector<4x32xf32>
    %cst_165 = arith.constant 1.000000e+00 : f32
    %714 = vector.broadcast %cst_165 : f32 to vector<4x32xf32>
    %715 = arith.addf %714, %713 : vector<4x32xf32>
    %716 = arith.divf %714, %715 : vector<4x32xf32>
    %717 = arith.mulf %708, %690 : vector<4x32xf32>
    %718 = arith.mulf %702, %710 : vector<4x32xf32>
    %719 = arith.addf %717, %718 : vector<4x32xf32>
    %720 = math.tanh %719 : vector<4x32xf32>
    %721 = arith.mulf %716, %720 : vector<4x32xf32>
    %c28_166 = arith.constant 28 : index
    %c0_167 = arith.constant 0 : index
    %722 = vector.load %arg17[%c28_166, %c0_167] : memref<32x32xf32, #tpu.memory_space<vmem>>, vector<4x32xf32>
    tpu.vector_store %arg17[%c28_166, %c0_167], %721 {strides = array<i32>} : memref<32x32xf32, #tpu.memory_space<vmem>>, vector<4x32xf32>,
    %c0_168 = arith.constant 0 : index
    %c0_169 = arith.constant 0 : index
    %723 = vector.load %arg17[%c0_168, %c0_169] : memref<32x32xf32, #tpu.memory_space<vmem>>, vector<32x32xf32>
    %c0_170 = arith.constant 0 : index
    %c0_171 = arith.constant 0 : index
    %724 = vector.load %arg10[%c0_170, %c0_171] : memref<32x16xf32, #tpu.memory_space<vmem>>, vector<32x16xf32>
    %cst_172 = arith.constant dense<0.000000e+00> : vector<32x16xf32>
    %725 = tpu.matmul %723, %724, %cst_172 {dimension_numbers = #tpu.dot_dimension_numbers<[1], [0], [0], [1], [0, 0, 1, 1], [], []>} : vector<32x32xf32>, vector<32x16xf32>, vector<32x16xf32> -> vector<32x16xf32>
    %c0_173 = arith.constant 0 : index
    %c0_174 = arith.constant 0 : index
    %726 = vector.load %arg11[%c0_173, %c0_174] : memref<1x16xf32, #tpu.memory_space<vmem>>, vector<1x16xf32>
    %727 = vector.broadcast %726 : vector<1x16xf32> to vector<32x16xf32>
    %728 = arith.addf %725, %727 : vector<32x16xf32>
    %cst_175 = arith.constant 0.000000e+00 : f32
    %729 = vector.broadcast %cst_175 : f32 to vector<32x16xf32>
    %730 = arith.maximumf %728, %729 : vector<32x16xf32>
    %c0_176 = arith.constant 0 : index
    %c0_177 = arith.constant 0 : index
    %731 = vector.load %arg12[%c0_176, %c0_177] : memref<16x8xf32, #tpu.memory_space<vmem>>, vector<16x8xf32>
    %cst_178 = arith.constant dense<0.000000e+00> : vector<32x8xf32>
    %732 = tpu.matmul %730, %731, %cst_178 {dimension_numbers = #tpu.dot_dimension_numbers<[1], [0], [0], [1], [0, 0, 1, 1], [], []>} : vector<32x16xf32>, vector<16x8xf32>, vector<32x8xf32> -> vector<32x8xf32>
    %c0_179 = arith.constant 0 : index
    %c0_180 = arith.constant 0 : index
    %733 = vector.load %arg13[%c0_179, %c0_180] : memref<1x8xf32, #tpu.memory_space<vmem>>, vector<1x8xf32>
    %734 = vector.broadcast %733 : vector<1x8xf32> to vector<32x8xf32>
    %735 = arith.addf %732, %734 : vector<32x8xf32>
    %c0_181 = arith.constant 0 : index
    %c0_182 = arith.constant 0 : index
    %736 = vector.load %arg14[%c0_181, %c0_182] : memref<32x8xf32, #tpu.memory_space<vmem>>, vector<32x8xf32>
    tpu.vector_store %arg14[%c0_181, %c0_182], %735 {strides = array<i32>} : memref<32x8xf32, #tpu.memory_space<vmem>>, vector<32x8xf32>,
    return
  }
}

</mosaic_0001>

<llo_original>
// kernel: vanilla_lstm_forward.1
$region0: #{vanilla_lstm_forward.1}
  #allocation0 [shape = 'u32[]', space=smem, size = 0x4, offset = 0x4, fixed_abs, tag = 'smem constant byte address 0x4 - core index']
  #allocation1 [shape = 'u32[72,128]{1,0:T(1,128)}', space=vmem, size = 0x9000, scoped, tag = 'internal scratch']
  #allocation2 [shape = 'f32[32,32]{1,0:T(8,128)}', space=vmem, size = 0x4000, scoped, tag = 'scratch operand']
  #allocation3 [shape = 'f32[32,32]{1,0:T(8,128)}', space=vmem, size = 0x4000, scoped, tag = 'scratch operand']
  #allocation4 [shape = 'f32[32,32]{1,0:T(8,128)}', space=vmem, size = 0x4000, scoped, tag = 'scratch operand']
  %s0 = inlined_call_operand.vmem [shape: f32[32,16], index: 0, kind: input, shape index: {}]
  %s1 = inlined_call_operand.vmem [shape: f32[16,128], index: 1, kind: input, shape index: {}]
  %s2 = inlined_call_operand.vmem [shape: f32[32,128], index: 2, kind: input, shape index: {}]
  %s3 = inlined_call_operand.vmem [shape: f32[1,128], index: 3, kind: input, shape index: {}]
  %s4 = inlined_call_operand.vmem [shape: f32[32,128], index: 4, kind: input, shape index: {}]
  %s5 = inlined_call_operand.hbm [shape: f32[32,128], index: 5, kind: input, shape index: {}]
  %s6 = inlined_call_operand.vmem [shape: f32[1,128], index: 6, kind: input, shape index: {}]
  %s7 = inlined_call_operand.hbm [shape: f32[32,128], index: 7, kind: input, shape index: {}]
  %s8 = inlined_call_operand.hbm [shape: f32[32,128], index: 8, kind: input, shape index: {}]
  %s9 = inlined_call_operand.vmem [shape: f32[1,128], index: 9, kind: input, shape index: {}]
  %s10 = inlined_call_operand.vmem [shape: f32[32,16], index: 10, kind: input, shape index: {}]
  %s11 = inlined_call_operand.vmem [shape: f32[1,16], index: 11, kind: input, shape index: {}]
  %s12 = inlined_call_operand.vmem [shape: f32[16,8], index: 12, kind: input, shape index: {}]
  %s13 = inlined_call_operand.vmem [shape: f32[1,8], index: 13, kind: input, shape index: {}]
  %s14 = inlined_call_operand.vmem [shape: f32[32,8], index: 14, kind: output, shape index: {}]
  %s15 = sld [smem:[#allocation0]]
  $region78: #{vanilla_lstm_forward.1} parent=0
    _
  %s17 = ssub.s32 1, %s15
  %s18 = scalar_select 0, %s17, %s15
  $region1: #{vanilla_lstm_forward.1} parent=0
    #allocation5 [shape = 'u8[16384]{0}', space=vmem, size = 0x4000, scoped, tag = 'input window, operand 5, single buffered']
    #allocation6 [shape = 's32[1]{0}', space=sflag, size = 0x4, scoped, tag = 'scoped memory for vanilla_lstm_forward.1']
    #allocation7 [shape = 'u8[16384]{0}', space=vmem, size = 0x4000, scoped, tag = 'input window, operand 7, single buffered']
    #allocation8 [shape = 's32[1]{0}', space=sflag, size = 0x4, scoped, tag = 'scoped memory for vanilla_lstm_forward.1']
    #allocation9 [shape = 'u8[16384]{0}', space=vmem, size = 0x4000, scoped, tag = 'input window, operand 8, single buffered']
    %19 = vsyncpa [#allocation6], 0
    %20 = vsyncpa [#allocation8], 0
    // Predicated region
    $region2: #{vanilla_lstm_forward.1} parent=1 // pred_check
      _
    $region3: #{vanilla_lstm_forward.1} parent=1 // pred_check_branch
      %22 = sbr.rel (0) target = $region5
    $region4: #{vanilla_lstm_forward.1} parent=1 // pred_region
      _
    $region5: #{vanilla_lstm_forward.1} parent=1 // pred_fallthru
      _
    // Predicated region
    $region6: #{vanilla_lstm_forward.1} parent=1 // pred_check
      _
    $region7: #{vanilla_lstm_forward.1} parent=1 // pred_check_branch
      %24 = sbr.rel (0) target = $region9
    $region8: #{vanilla_lstm_forward.1} parent=1 // pred_region
      _
    $region9: #{vanilla_lstm_forward.1} parent=1 // pred_fallthru
      _
    // Predicated region
    $region10: #{vanilla_lstm_forward.1} parent=1 // pred_check
      _
    $region11: #{vanilla_lstm_forward.1} parent=1 // pred_check_branch
      %26 = sbr.rel (0) target = $region13
    $region12: #{vanilla_lstm_forward.1} parent=1 // pred_region
      _
    $region13: #{vanilla_lstm_forward.1} parent=1 // pred_fallthru
      _
    // Predicated region
    $region14: #{vanilla_lstm_forward.1} parent=1 // pred_check
      _
    $region15: #{vanilla_lstm_forward.1} parent=1 // pred_check_branch
      %28 = sbr.rel (0) target = $region17
    $region16: #{vanilla_lstm_forward.1} parent=1 // pred_region
      _
    $region17: #{vanilla_lstm_forward.1} parent=1 // pred_fallthru
      _
    // Predicated region
    $region18: #{vanilla_lstm_forward.1} parent=1 // pred_check
      _
    $region19: #{vanilla_lstm_forward.1} parent=1 // pred_check_branch
      %30 = sbr.rel (0) target = $region21
    $region20: #{vanilla_lstm_forward.1} parent=1 // pred_region
      _
    $region21: #{vanilla_lstm_forward.1} parent=1 // pred_fallthru
      _
    // Predicated region
    $region22: #{vanilla_lstm_forward.1} parent=1 // pred_check
      _
    $region23: #{vanilla_lstm_forward.1} parent=1 // pred_check_branch
      %32 = sbr.rel (0) target = $region25
    $region24: #{vanilla_lstm_forward.1} parent=1 // pred_region
      %34 = vsyncadd [#allocation6], 0
      %s35 = sshll.u32 %s5, 4
      %s36 = int_to_ptr.hbm [resolvable:$true] %s35
      %s37 = sshll.u32 [#allocation5], 4
      %s38 = int_to_ptr.vmem [resolvable:$true] %s37
      %43 = dma.hbm_to_vmem [thread:$0]  %s36, 512, %s38, [#allocation6], 128, 128, 8
    $region25: #{vanilla_lstm_forward.1} parent=1 // pred_fallthru
      _
    // Predicated region
    $region26: #{vanilla_lstm_forward.1} parent=1 // pred_check
      _
    $region27: #{vanilla_lstm_forward.1} parent=1 // pred_check_branch
      %45 = sbr.rel (0) target = $region29
    $region28: #{vanilla_lstm_forward.1} parent=1 // pred_region
      _
    $region29: #{vanilla_lstm_forward.1} parent=1 // pred_fallthru
      _
    // Predicated region
    $region30: #{vanilla_lstm_forward.1} parent=1 // pred_check
      _
    $region31: #{vanilla_lstm_forward.1} parent=1 // pred_check_branch
      %47 = sbr.rel (0) target = $region33
    $region32: #{vanilla_lstm_forward.1} parent=1 // pred_region
      %49 = vsyncadd [#allocation8], 0
      %s50 = sshll.u32 %s7, 4
      %s51 = int_to_ptr.hbm [resolvable:$true] %s50
      %s52 = sshll.u32 [#allocation7], 4
      %s53 = int_to_ptr.vmem [resolvable:$true] %s52
      %58 = dma.hbm_to_vmem [thread:$0]  %s51, 512, %s53, [#allocation8], 128, 128, 8
    $region33: #{vanilla_lstm_forward.1} parent=1 // pred_fallthru
      _
    // Predicated region
    $region34: #{vanilla_lstm_forward.1} parent=1 // pred_check
      _
    $region35: #{vanilla_lstm_forward.1} parent=1 // pred_check_branch
      %60 = sbr.rel (0) target = $region37
    $region36: #{vanilla_lstm_forward.1} parent=1 // pred_region
      %62 = vsyncadd [#allocation8], 0
      %s63 = sshll.u32 %s8, 4
      %s64 = int_to_ptr.hbm [resolvable:$true] %s63
      %s65 = sshll.u32 [#allocation9], 4
      %s66 = int_to_ptr.vmem [resolvable:$true] %s65
      %71 = dma.hbm_to_vmem [thread:$0]  %s64, 512, %s66, [#allocation8], 128, 128, 8
    $region37: #{vanilla_lstm_forward.1} parent=1 // pred_fallthru
      _
    // Predicated region
    $region38: #{vanilla_lstm_forward.1} parent=1 // pred_check
      _
    $region39: #{vanilla_lstm_forward.1} parent=1 // pred_check_branch
      %73 = sbr.rel (0) target = $region41
    $region40: #{vanilla_lstm_forward.1} parent=1 // pred_region
      _
    $region41: #{vanilla_lstm_forward.1} parent=1 // pred_fallthru
      _
    // Predicated region
    $region42: #{vanilla_lstm_forward.1} parent=1 // pred_check
      _
    $region43: #{vanilla_lstm_forward.1} parent=1 // pred_check_branch
      %75 = sbr.rel (0) target = $region45
    $region44: #{vanilla_lstm_forward.1} parent=1 // pred_region
      _
    $region45: #{vanilla_lstm_forward.1} parent=1 // pred_fallthru
      _
    // Predicated region
    $region46: #{vanilla_lstm_forward.1} parent=1 // pred_check
      _
    $region47: #{vanilla_lstm_forward.1} parent=1 // pred_check_branch
      %77 = sbr.rel (0) target = $region49
    $region48: #{vanilla_lstm_forward.1} parent=1 // pred_region
      _
    $region49: #{vanilla_lstm_forward.1} parent=1 // pred_fallthru
      _
    // Predicated region
    $region50: #{vanilla_lstm_forward.1} parent=1 // pred_check
      _
    $region51: #{vanilla_lstm_forward.1} parent=1 // pred_check_branch
      %79 = sbr.rel (0) target = $region53
    $region52: #{vanilla_lstm_forward.1} parent=1 // pred_region
      _
    $region53: #{vanilla_lstm_forward.1} parent=1 // pred_fallthru
      _
    // Predicated region
    $region54: #{vanilla_lstm_forward.1} parent=1 // pred_check
      _
    $region55: #{vanilla_lstm_forward.1} parent=1 // pred_check_branch
      %81 = sbr.rel (0) target = $region57
    $region56: #{vanilla_lstm_forward.1} parent=1 // pred_region
      _
    $region57: #{vanilla_lstm_forward.1} parent=1 // pred_fallthru
      _
    // Predicated region
    $region58: #{vanilla_lstm_forward.1} parent=1 // pred_check
      _
    $region59: #{vanilla_lstm_forward.1} parent=1 // pred_check_branch
      %83 = sbr.rel (0) target = $region61
    $region60: #{vanilla_lstm_forward.1} parent=1 // pred_region
      %85 = dma.done [#allocation6], 512
    $region61: #{vanilla_lstm_forward.1} parent=1 // pred_fallthru
      _
    // Predicated region
    $region62: #{vanilla_lstm_forward.1} parent=1 // pred_check
      _
    $region63: #{vanilla_lstm_forward.1} parent=1 // pred_check_branch
      %87 = sbr.rel (0) target = $region65
    $region64: #{vanilla_lstm_forward.1} parent=1 // pred_region
      %89 = dma.done [#allocation8], 512
    $region65: #{vanilla_lstm_forward.1} parent=1 // pred_fallthru
      _
    // Predicated region
    $region66: #{vanilla_lstm_forward.1} parent=1 // pred_check
      _
    $region67: #{vanilla_lstm_forward.1} parent=1 // pred_check_branch
      %91 = sbr.rel (0) target = $region69
    $region68: #{vanilla_lstm_forward.1} parent=1 // pred_region
      %93 = dma.done [#allocation8], 512
    $region69: #{vanilla_lstm_forward.1} parent=1 // pred_fallthru
      _
    %v94 = vld [vmem:[%s0] sm:$0xff]
    %v95 = vld [vmem:[%s0 + $0x8] sm:$0xff]
    %v96 = vld [vmem:[%s0 + $0x10] sm:$0xff]
    %v97 = vld [vmem:[%s0 + $0x18] sm:$0xff]
    %v98 = vld [vmem:[%s1] sm:$0xff]
    %v99 = vld [vmem:[%s1 + $0x8] sm:$0xff]
    %v100 = vld [vmem:[%s2] sm:$0xff]
    %v101 = vld [vmem:[%s2 + $0x8] sm:$0xff]
    %v102 = vld [vmem:[%s2 + $0x10] sm:$0xff]
    %v103 = vld [vmem:[%s2 + $0x18] sm:$0xff]
    %v104 = vld [vmem:[%s3] sm:$0x1]
    %v106 = vperm.slane %v104, 0
    %vm108 = vcmask 130048
    %v110 = vsel %vm108, %v94, 0
    %v113 = vsel %vm108, %v95, 0
    %v116 = vsel %vm108, %v96, 0
    %v119 = vsel %vm108, %v97, 0
    %121 = vmatpush.msra.mxu0 0.0
    %122 = vmatpush.msra.mxu0 0.0
    %123 = vmatpush.msra.mxu0 0.0
    %124 = vmatpush.msra.mxu0 0.0
    %125 = vmatpush.msra.mxu0 0.0
    %126 = vmatpush.msra.mxu0 0.0
    %127 = vmatpush.msra.mxu0 0.0
    %128 = vmatpush.msra.mxu0 0.0
    %129 = vmatpush.msra.mxu0 0.0
    %130 = vmatpush.msra.mxu0 0.0
    %131 = vmatpush.msra.mxu0 0.0
    %132 = vmatpush.msra.mxu0 0.0
    %133 = vmatpush.msra.mxu0 0.0
    %134 = vmatpush.msra.mxu0 0.0
    %135 = vmatpush.msra.mxu0 %v99
    %136 = vmatpush.msra.mxu0 %v98
    %137 = vmatmul.f32.gmra.mxu0 %v110
    %v138 = vpop.f32.mrf.mxu0
    %v139 = vadd.f32 %v106, %v138
    %140 = vmatmul.f32.gmra.mxu0 %v113
    %v141 = vpop.f32.mrf.mxu0
    %v142 = vadd.f32 %v106, %v141
    %143 = vmatmul.f32.gmra.mxu0 %v116
    %v144 = vpop.f32.mrf.mxu0
    %v145 = vadd.f32 %v106, %v144
    %146 = vmatmul.f32.gmra.mxu0 %v119
    %v147 = vpop.f32.mrf.mxu0
    %v148 = vadd.f32 %v106, %v147
    %149 = vdwg.mxu0
    %vm150 = vcmask 261120
    %v152 = vsel %vm150, 0.0, 0
    %154 = vmatpush.msra.mxu0 0.0
    %155 = vmatpush.msra.mxu0 0.0
    %156 = vmatpush.msra.mxu0 0.0
    %157 = vmatpush.msra.mxu0 0.0
    %158 = vmatpush.msra.mxu0 0.0
    %159 = vmatpush.msra.mxu0 0.0
    %160 = vmatpush.msra.mxu0 0.0
    %161 = vmatpush.msra.mxu0 0.0
    %162 = vmatpush.msra.mxu0 0.0
    %163 = vmatpush.msra.mxu0 0.0
    %164 = vmatpush.msra.mxu0 0.0
    %165 = vmatpush.msra.mxu0 0.0
    %166 = vmatpush.msra.mxu0 %v103
    %167 = vmatpush.msra.mxu0 %v102
    %168 = vmatpush.msra.mxu0 %v101
    %169 = vmatpush.msra.mxu0 %v100
    %170 = vmatmul.f32.gmra.mxu0 %v152
    %v171 = vpop.f32.mrf.mxu0
    %v172 = vadd.f32 0.0, %v171
    %173 = vdwg.mxu0
    %v174 = vadd.f32 %v139, %v172
    %v175 = vxor.u32 %v174, 2147483648
    %v176 = vmul.f32 %v175, 1.442695
    %v177 = vpow.pop %v176
    %v178 = vadd.f32 %v177, 1.0
    %v179 = vrcp.pop %v178
    %v180 = vmul.f32 %v178, %v179
    %v181 = vsub.f32 1.0, %v180
    %v182 = vmul.f32 %v179, %v181
    %v183 = vadd.f32 %v179, %v182
    %vm184 = vweird.f32 %v178
    %vm185 = vweird.f32 %v179
    %vm186 = vmor %vm184, %vm185
    %v187 = vsel %vm186, %v179, %v183
    %v188 = vand.u32 2147483647, %v178
    %vm189 = vcmp.eq.f32.partialorder %v188, 8.507059e+37
    %v190 = vand.u32 %v178, 2147483648
    %v191 = vor.u32 1.1754944e-38, %v190
    %v192 = vsel %vm189, %v191, %v187
    %v193 = vmul.f32 1.0, %v192
    %v194 = vtanh.pop %v174
    %v195 = vmul.f32 %v193, 0.0
    %197 = vrot.lane.b32.xlu0 %v194, 64
    %v198 = vpop.permute.xlu0 %197
    %v200 = vmul.f32 %v193, %v198
    %202 = vrot.lane.b32.xlu0 %v200, 32
    %v203 = vpop.permute.xlu0 %202
    %v205 = vadd.f32 %v195, %v203
    %v206 = vtanh.pop %v205
    %208 = vrot.lane.b32.xlu0 %v206, 64
    %v209 = vpop.permute.xlu0 %208
    %v211 = vmul.f32 %v193, %v209
    %213 = vrot.lane.b32.xlu0 %v211, 32
    %v214 = vpop.permute.xlu0 %213
    %vm216 = vcmask 257024
    %217 = vst.msk [vmem:[#allocation2] sm:$0xf] %vm216, %v214
    %v218 = vsel %vm150, %v214, 0
    %220 = vmatpush.msra.mxu0 0.0
    %221 = vmatpush.msra.mxu0 0.0
    %222 = vmatpush.msra.mxu0 0.0
    %223 = vmatpush.msra.mxu0 0.0
    %224 = vmatpush.msra.mxu0 0.0
    %225 = vmatpush.msra.mxu0 0.0
    %226 = vmatpush.msra.mxu0 0.0
    %227 = vmatpush.msra.mxu0 0.0
    %228 = vmatpush.msra.mxu0 0.0
    %229 = vmatpush.msra.mxu0 0.0
    %230 = vmatpush.msra.mxu0 0.0
    %231 = vmatpush.msra.mxu0 0.0
    %232 = vmatpush.msra.mxu0 %v103
    %233 = vmatpush.msra.mxu0 %v102
    %234 = vmatpush.msra.mxu0 %v101
    %235 = vmatpush.msra.mxu0 %v100
    %236 = vmatmul.f32.gmra.mxu0 %v218
    %v237 = vpop.f32.mrf.mxu0
    %v238 = vadd.f32 0.0, %v237
    %239 = vdwg.mxu0
    %v241 = vrot.slane %v238, 4
    %v243 = vadd.f32 %v139, %v241
    %v244 = vxor.u32 %v243, 2147483648
    %v245 = vmul.f32 %v244, 1.442695
    %v246 = vpow.pop %v245
    %v247 = vadd.f32 %v246, 1.0
    %v248 = vrcp.pop %v247
    %v249 = vmul.f32 %v247, %v248
    %v250 = vsub.f32 1.0, %v249
    %v251 = vmul.f32 %v248, %v250
    %v252 = vadd.f32 %v248, %v251
    %vm253 = vweird.f32 %v247
    %vm254 = vweird.f32 %v248
    %vm255 = vmor %vm253, %vm254
    %v256 = vsel %vm255, %v248, %v252
    %v257 = vand.u32 2147483647, %v247
    %vm258 = vcmp.eq.f32.partialorder %v257, 8.507059e+37
    %v259 = vand.u32 %v247, 2147483648
    %v260 = vor.u32 1.1754944e-38, %v259
    %v261 = vsel %vm258, %v260, %v256
    %v262 = vmul.f32 1.0, %v261
    %v263 = vtanh.pop %v243
    %v265 = vrot.slane %v205, 4
    %v267 = vmul.f32 %v262, %v265
    %269 = vrot.lane.b32.xlu0 %v263, 64
    %v270 = vpop.permute.xlu0 %269
    %v272 = vmul.f32 %v262, %v270
    %274 = vrot.lane.b32.xlu0 %v272, 32
    %v275 = vpop.permute.xlu0 %274
    %v277 = vadd.f32 %v267, %v275
    %v278 = vtanh.pop %v277
    %280 = vrot.lane.b32.xlu0 %v278, 64
    %v281 = vpop.permute.xlu0 %280
    %v283 = vmul.f32 %v262, %v281
    %285 = vrot.lane.b32.xlu0 %v283, 32
    %v286 = vpop.permute.xlu0 %285
    %vm288 = vcmask 261124
    %289 = vst.msk [vmem:[#allocation2] sm:$0xf0] %vm288, %v286
    %v290 = vrot.slane %v283, 4
    %291 = vrot.lane.b32.xlu0 %v290, 32
    %v292 = vpop.permute.xlu0 %291
    %v293 = vsel %vm150, %v292, 0
    %295 = vmatpush.msra.mxu0 0.0
    %296 = vmatpush.msra.mxu0 0.0
    %297 = vmatpush.msra.mxu0 0.0
    %298 = vmatpush.msra.mxu0 0.0
    %299 = vmatpush.msra.mxu0 0.0
    %300 = vmatpush.msra.mxu0 0.0
    %301 = vmatpush.msra.mxu0 0.0
    %302 = vmatpush.msra.mxu0 0.0
    %303 = vmatpush.msra.mxu0 0.0
    %304 = vmatpush.msra.mxu0 0.0
    %305 = vmatpush.msra.mxu0 0.0
    %306 = vmatpush.msra.mxu0 0.0
    %307 = vmatpush.msra.mxu0 %v103
    %308 = vmatpush.msra.mxu0 %v102
    %309 = vmatpush.msra.mxu0 %v101
    %310 = vmatpush.msra.mxu0 %v100
    %311 = vmatmul.f32.gmra.mxu0 %v293
    %v312 = vpop.f32.mrf.mxu0
    %v313 = vadd.f32 0.0, %v312
    %314 = vdwg.mxu0
    %v315 = vadd.f32 %v142, %v313
    %v316 = vxor.u32 %v315, 2147483648
    %v317 = vmul.f32 %v316, 1.442695
    %v318 = vpow.pop %v317
    %v319 = vadd.f32 %v318, 1.0
    %v320 = vrcp.pop %v319
    %v321 = vmul.f32 %v319, %v320
    %v322 = vsub.f32 1.0, %v321
    %v323 = vmul.f32 %v320, %v322
    %v324 = vadd.f32 %v320, %v323
    %vm325 = vweird.f32 %v319
    %vm326 = vweird.f32 %v320
    %vm327 = vmor %vm325, %vm326
    %v328 = vsel %vm327, %v320, %v324
    %v329 = vand.u32 2147483647, %v319
    %vm330 = vcmp.eq.f32.partialorder %v329, 8.507059e+37
    %v331 = vand.u32 %v319, 2147483648
    %v332 = vor.u32 1.1754944e-38, %v331
    %v333 = vsel %vm330, %v332, %v328
    %v334 = vmul.f32 1.0, %v333
    %v335 = vtanh.pop %v315
    %v337 = vrot.slane %v277, 4
    %v339 = vmul.f32 %v334, %v337
    %341 = vrot.lane.b32.xlu0 %v335, 64
    %v342 = vpop.permute.xlu0 %341
    %v344 = vmul.f32 %v334, %v342
    %346 = vrot.lane.b32.xlu0 %v344, 32
    %v347 = vpop.permute.xlu0 %346
    %v349 = vadd.f32 %v339, %v347
    %v350 = vtanh.pop %v349
    %352 = vrot.lane.b32.xlu0 %v350, 64
    %v353 = vpop.permute.xlu0 %352
    %v355 = vmul.f32 %v334, %v353
    %357 = vrot.lane.b32.xlu0 %v355, 32
    %v358 = vpop.permute.xlu0 %357
    %360 = vst.msk [vmem:[#allocation2 + $0x8] sm:$0xf] %vm216, %v358
    %v361 = vsel %vm150, %v358, 0
    %363 = vmatpush.msra.mxu0 0.0
    %364 = vmatpush.msra.mxu0 0.0
    %365 = vmatpush.msra.mxu0 0.0
    %366 = vmatpush.msra.mxu0 0.0
    %367 = vmatpush.msra.mxu0 0.0
    %368 = vmatpush.msra.mxu0 0.0
    %369 = vmatpush.msra.mxu0 0.0
    %370 = vmatpush.msra.mxu0 0.0
    %371 = vmatpush.msra.mxu0 0.0
    %372 = vmatpush.msra.mxu0 0.0
    %373 = vmatpush.msra.mxu0 0.0
    %374 = vmatpush.msra.mxu0 0.0
    %375 = vmatpush.msra.mxu0 %v103
    %376 = vmatpush.msra.mxu0 %v102
    %377 = vmatpush.msra.mxu0 %v101
    %378 = vmatpush.msra.mxu0 %v100
    %379 = vmatmul.f32.gmra.mxu0 %v361
    %v380 = vpop.f32.mrf.mxu0
    %v381 = vadd.f32 0.0, %v380
    %382 = vdwg.mxu0
    %v384 = vrot.slane %v381, 4
    %v386 = vadd.f32 %v142, %v384
    %v387 = vxor.u32 %v386, 2147483648
    %v388 = vmul.f32 %v387, 1.442695
    %v389 = vpow.pop %v388
    %v390 = vadd.f32 %v389, 1.0
    %v391 = vrcp.pop %v390
    %v392 = vmul.f32 %v390, %v391
    %v393 = vsub.f32 1.0, %v392
    %v394 = vmul.f32 %v391, %v393
    %v395 = vadd.f32 %v391, %v394
    %vm396 = vweird.f32 %v390
    %vm397 = vweird.f32 %v391
    %vm398 = vmor %vm396, %vm397
    %v399 = vsel %vm398, %v391, %v395
    %v400 = vand.u32 2147483647, %v390
    %vm401 = vcmp.eq.f32.partialorder %v400, 8.507059e+37
    %v402 = vand.u32 %v390, 2147483648
    %v403 = vor.u32 1.1754944e-38, %v402
    %v404 = vsel %vm401, %v403, %v399
    %v405 = vmul.f32 1.0, %v404
    %v406 = vtanh.pop %v386
    %v408 = vrot.slane %v349, 4
    %v410 = vmul.f32 %v405, %v408
    %412 = vrot.lane.b32.xlu0 %v406, 64
    %v413 = vpop.permute.xlu0 %412
    %v415 = vmul.f32 %v405, %v413
    %417 = vrot.lane.b32.xlu0 %v415, 32
    %v418 = vpop.permute.xlu0 %417
    %v420 = vadd.f32 %v410, %v418
    %v421 = vtanh.pop %v420
    %423 = vrot.lane.b32.xlu0 %v421, 64
    %v424 = vpop.permute.xlu0 %423
    %v426 = vmul.f32 %v405, %v424
    %428 = vrot.lane.b32.xlu0 %v426, 32
    %v429 = vpop.permute.xlu0 %428
    %431 = vst.msk [vmem:[#allocation2 + $0x8] sm:$0xf0] %vm288, %v429
    %v432 = vrot.slane %v426, 4
    %433 = vrot.lane.b32.xlu0 %v432, 32
    %v434 = vpop.permute.xlu0 %433
    %v435 = vsel %vm150, %v434, 0
    %437 = vmatpush.msra.mxu0 0.0
    %438 = vmatpush.msra.mxu0 0.0
    %439 = vmatpush.msra.mxu0 0.0
    %440 = vmatpush.msra.mxu0 0.0
    %441 = vmatpush.msra.mxu0 0.0
    %442 = vmatpush.msra.mxu0 0.0
    %443 = vmatpush.msra.mxu0 0.0
    %444 = vmatpush.msra.mxu0 0.0
    %445 = vmatpush.msra.mxu0 0.0
    %446 = vmatpush.msra.mxu0 0.0
    %447 = vmatpush.msra.mxu0 0.0
    %448 = vmatpush.msra.mxu0 0.0
    %449 = vmatpush.msra.mxu0 %v103
    %450 = vmatpush.msra.mxu0 %v102
    %451 = vmatpush.msra.mxu0 %v101
    %452 = vmatpush.msra.mxu0 %v100
    %453 = vmatmul.f32.gmra.mxu0 %v435
    %v454 = vpop.f32.mrf.mxu0
    %v455 = vadd.f32 0.0, %v454
    %456 = vdwg.mxu0
    %v457 = vadd.f32 %v145, %v455
    %v458 = vxor.u32 %v457, 2147483648
    %v459 = vmul.f32 %v458, 1.442695
    %v460 = vpow.pop %v459
    %v461 = vadd.f32 %v460, 1.0
    %v462 = vrcp.pop %v461
    %v463 = vmul.f32 %v461, %v462
    %v464 = vsub.f32 1.0, %v463
    %v465 = vmul.f32 %v462, %v464
    %v466 = vadd.f32 %v462, %v465
    %vm467 = vweird.f32 %v461
    %vm468 = vweird.f32 %v462
    %vm469 = vmor %vm467, %vm468
    %v470 = vsel %vm469, %v462, %v466
    %v471 = vand.u32 2147483647, %v461
    %vm472 = vcmp.eq.f32.partialorder %v471, 8.507059e+37
    %v473 = vand.u32 %v461, 2147483648
    %v474 = vor.u32 1.1754944e-38, %v473
    %v475 = vsel %vm472, %v474, %v470
    %v476 = vmul.f32 1.0, %v475
    %v477 = vtanh.pop %v457
    %v479 = vrot.slane %v420, 4
    %v481 = vmul.f32 %v476, %v479
    %483 = vrot.lane.b32.xlu0 %v477, 64
    %v484 = vpop.permute.xlu0 %483
    %v486 = vmul.f32 %v476, %v484
    %488 = vrot.lane.b32.xlu0 %v486, 32
    %v489 = vpop.permute.xlu0 %488
    %v491 = vadd.f32 %v481, %v489
    %v492 = vtanh.pop %v491
    %494 = vrot.lane.b32.xlu0 %v492, 64
    %v495 = vpop.permute.xlu0 %494
    %v497 = vmul.f32 %v476, %v495
    %499 = vrot.lane.b32.xlu0 %v497, 32
    %v500 = vpop.permute.xlu0 %499
    %502 = vst.msk [vmem:[#allocation2 + $0x10] sm:$0xf] %vm216, %v500
    %v503 = vsel %vm150, %v500, 0
    %505 = vmatpush.msra.mxu0 0.0
    %506 = vmatpush.msra.mxu0 0.0
    %507 = vmatpush.msra.mxu0 0.0
    %508 = vmatpush.msra.mxu0 0.0
    %509 = vmatpush.msra.mxu0 0.0
    %510 = vmatpush.msra.mxu0 0.0
    %511 = vmatpush.msra.mxu0 0.0
    %512 = vmatpush.msra.mxu0 0.0
    %513 = vmatpush.msra.mxu0 0.0
    %514 = vmatpush.msra.mxu0 0.0
    %515 = vmatpush.msra.mxu0 0.0
    %516 = vmatpush.msra.mxu0 0.0
    %517 = vmatpush.msra.mxu0 %v103
    %518 = vmatpush.msra.mxu0 %v102
    %519 = vmatpush.msra.mxu0 %v101
    %520 = vmatpush.msra.mxu0 %v100
    %521 = vmatmul.f32.gmra.mxu0 %v503
    %v522 = vpop.f32.mrf.mxu0
    %v523 = vadd.f32 0.0, %v522
    %524 = vdwg.mxu0
    %v526 = vrot.slane %v523, 4
    %v528 = vadd.f32 %v145, %v526
    %v529 = vxor.u32 %v528, 2147483648
    %v530 = vmul.f32 %v529, 1.442695
    %v531 = vpow.pop %v530
    %v532 = vadd.f32 %v531, 1.0
    %v533 = vrcp.pop %v532
    %v534 = vmul.f32 %v532, %v533
    %v535 = vsub.f32 1.0, %v534
    %v536 = vmul.f32 %v533, %v535
    %v537 = vadd.f32 %v533, %v536
    %vm538 = vweird.f32 %v532
    %vm539 = vweird.f32 %v533
    %vm540 = vmor %vm538, %vm539
    %v541 = vsel %vm540, %v533, %v537
    %v542 = vand.u32 2147483647, %v532
    %vm543 = vcmp.eq.f32.partialorder %v542, 8.507059e+37
    %v544 = vand.u32 %v532, 2147483648
    %v545 = vor.u32 1.1754944e-38, %v544
    %v546 = vsel %vm543, %v545, %v541
    %v547 = vmul.f32 1.0, %v546
    %v548 = vtanh.pop %v528
    %v550 = vrot.slane %v491, 4
    %v552 = vmul.f32 %v547, %v550
    %554 = vrot.lane.b32.xlu0 %v548, 64
    %v555 = vpop.permute.xlu0 %554
    %v557 = vmul.f32 %v547, %v555
    %559 = vrot.lane.b32.xlu0 %v557, 32
    %v560 = vpop.permute.xlu0 %559
    %v562 = vadd.f32 %v552, %v560
    %v563 = vtanh.pop %v562
    %565 = vrot.lane.b32.xlu0 %v563, 64
    %v566 = vpop.permute.xlu0 %565
    %v568 = vmul.f32 %v547, %v566
    %570 = vrot.lane.b32.xlu0 %v568, 32
    %v571 = vpop.permute.xlu0 %570
    %573 = vst.msk [vmem:[#allocation2 + $0x10] sm:$0xf0] %vm288, %v571
    %v574 = vrot.slane %v568, 4
    %575 = vrot.lane.b32.xlu0 %v574, 32
    %v576 = vpop.permute.xlu0 %575
    %v577 = vsel %vm150, %v576, 0
    %579 = vmatpush.msra.mxu0 0.0
    %580 = vmatpush.msra.mxu0 0.0
    %581 = vmatpush.msra.mxu0 0.0
    %582 = vmatpush.msra.mxu0 0.0
    %583 = vmatpush.msra.mxu0 0.0
    %584 = vmatpush.msra.mxu0 0.0
    %585 = vmatpush.msra.mxu0 0.0
    %586 = vmatpush.msra.mxu0 0.0
    %587 = vmatpush.msra.mxu0 0.0
    %588 = vmatpush.msra.mxu0 0.0
    %589 = vmatpush.msra.mxu0 0.0
    %590 = vmatpush.msra.mxu0 0.0
    %591 = vmatpush.msra.mxu0 %v103
    %592 = vmatpush.msra.mxu0 %v102
    %593 = vmatpush.msra.mxu0 %v101
    %594 = vmatpush.msra.mxu0 %v100
    %595 = vmatmul.f32.gmra.mxu0 %v577
    %v596 = vpop.f32.mrf.mxu0
    %v597 = vadd.f32 0.0, %v596
    %598 = vdwg.mxu0
    %v599 = vadd.f32 %v148, %v597
    %v600 = vxor.u32 %v599, 2147483648
    %v601 = vmul.f32 %v600, 1.442695
    %v602 = vpow.pop %v601
    %v603 = vadd.f32 %v602, 1.0
    %v604 = vrcp.pop %v603
    %v605 = vmul.f32 %v603, %v604
    %v606 = vsub.f32 1.0, %v605
    %v607 = vmul.f32 %v604, %v606
    %v608 = vadd.f32 %v604, %v607
    %vm609 = vweird.f32 %v603
    %vm610 = vweird.f32 %v604
    %vm611 = vmor %vm609, %vm610
    %v612 = vsel %vm611, %v604, %v608
    %v613 = vand.u32 2147483647, %v603
    %vm614 = vcmp.eq.f32.partialorder %v613, 8.507059e+37
    %v615 = vand.u32 %v603, 2147483648
    %v616 = vor.u32 1.1754944e-38, %v615
    %v617 = vsel %vm614, %v616, %v612
    %v618 = vmul.f32 1.0, %v617
    %v619 = vtanh.pop %v599
    %v621 = vrot.slane %v562, 4
    %v623 = vmul.f32 %v618, %v621
    %625 = vrot.lane.b32.xlu0 %v619, 64
    %v626 = vpop.permute.xlu0 %625
    %v628 = vmul.f32 %v618, %v626
    %630 = vrot.lane.b32.xlu0 %v628, 32
    %v631 = vpop.permute.xlu0 %630
    %v633 = vadd.f32 %v623, %v631
    %v634 = vtanh.pop %v633
    %636 = vrot.lane.b32.xlu0 %v634, 64
    %v637 = vpop.permute.xlu0 %636
    %v639 = vmul.f32 %v618, %v637
    %641 = vrot.lane.b32.xlu0 %v639, 32
    %v642 = vpop.permute.xlu0 %641
    %644 = vst.msk [vmem:[#allocation2 + $0x18] sm:$0xf] %vm216, %v642
    %v645 = vsel %vm150, %v642, 0
    %647 = vmatpush.msra.mxu0 0.0
    %648 = vmatpush.msra.mxu0 0.0
    %649 = vmatpush.msra.mxu0 0.0
    %650 = vmatpush.msra.mxu0 0.0
    %651 = vmatpush.msra.mxu0 0.0
    %652 = vmatpush.msra.mxu0 0.0
    %653 = vmatpush.msra.mxu0 0.0
    %654 = vmatpush.msra.mxu0 0.0
    %655 = vmatpush.msra.mxu0 0.0
    %656 = vmatpush.msra.mxu0 0.0
    %657 = vmatpush.msra.mxu0 0.0
    %658 = vmatpush.msra.mxu0 0.0
    %659 = vmatpush.msra.mxu0 %v103
    %660 = vmatpush.msra.mxu0 %v102
    %661 = vmatpush.msra.mxu0 %v101
    %662 = vmatpush.msra.mxu0 %v100
    %663 = vmatmul.f32.gmra.mxu0 %v645
    %v664 = vpop.f32.mrf.mxu0
    %v665 = vadd.f32 0.0, %v664
    %666 = vdwg.mxu0
    %v668 = vrot.slane %v665, 4
    %v670 = vadd.f32 %v148, %v668
    %v671 = vxor.u32 %v670, 2147483648
    %v672 = vmul.f32 %v671, 1.442695
    %v673 = vpow.pop %v672
    %v674 = vadd.f32 %v673, 1.0
    %v675 = vrcp.pop %v674
    %v676 = vmul.f32 %v674, %v675
    %v677 = vsub.f32 1.0, %v676
    %v678 = vmul.f32 %v675, %v677
    %v679 = vadd.f32 %v675, %v678
    %vm680 = vweird.f32 %v674
    %vm681 = vweird.f32 %v675
    %vm682 = vmor %vm680, %vm681
    %v683 = vsel %vm682, %v675, %v679
    %v684 = vand.u32 2147483647, %v674
    %vm685 = vcmp.eq.f32.partialorder %v684, 8.507059e+37
    %v686 = vand.u32 %v674, 2147483648
    %v687 = vor.u32 1.1754944e-38, %v686
    %v688 = vsel %vm685, %v687, %v683
    %v689 = vmul.f32 1.0, %v688
    %v690 = vtanh.pop %v670
    %v692 = vrot.slane %v633, 4
    %v694 = vmul.f32 %v689, %v692
    %696 = vrot.lane.b32.xlu0 %v690, 64
    %v697 = vpop.permute.xlu0 %696
    %v699 = vmul.f32 %v689, %v697
    %701 = vrot.lane.b32.xlu0 %v699, 32
    %v702 = vpop.permute.xlu0 %701
    %v704 = vadd.f32 %v694, %v702
    %v705 = vtanh.pop %v704
    %707 = vrot.lane.b32.xlu0 %v705, 64
    %v708 = vpop.permute.xlu0 %707
    %v710 = vmul.f32 %v689, %v708
    %712 = vrot.lane.b32.xlu0 %v710, 32
    %v713 = vpop.permute.xlu0 %712
    %715 = vst.msk [vmem:[#allocation2 + $0x18] sm:$0xf0] %vm288, %v713
    %v716 = vld [vmem:[#allocation2] sm:$0xff]
    %v717 = vld [vmem:[#allocation2 + $0x8] sm:$0xff]
    %v718 = vld [vmem:[#allocation2 + $0x10] sm:$0xff]
    %v719 = vld [vmem:[#allocation2 + $0x18] sm:$0xff]
    %v720 = vld [vmem:[%s4] sm:$0xff]
    %v721 = vld [vmem:[%s4 + $0x8] sm:$0xff]
    %v722 = vld [vmem:[%s4 + $0x10] sm:$0xff]
    %v723 = vld [vmem:[%s4 + $0x18] sm:$0xff]
    %v724 = vld [vmem:[#allocation5] sm:$0xff]
    %v725 = vld [vmem:[#allocation5 + $0x8] sm:$0xff]
    %v726 = vld [vmem:[#allocation5 + $0x10] sm:$0xff]
    %v727 = vld [vmem:[#allocation5 + $0x18] sm:$0xff]
    %v728 = vld [vmem:[%s6] sm:$0x1]
    %v730 = vperm.slane %v728, 0
    %v733 = vsel %vm150, %v716, 0
    %v736 = vsel %vm150, %v717, 0
    %v739 = vsel %vm150, %v718, 0
    %v742 = vsel %vm150, %v719, 0
    %744 = vmatpush.msra.mxu0 0.0
    %745 = vmatpush.msra.mxu0 0.0
    %746 = vmatpush.msra.mxu0 0.0
    %747 = vmatpush.msra.mxu0 0.0
    %748 = vmatpush.msra.mxu0 0.0
    %749 = vmatpush.msra.mxu0 0.0
    %750 = vmatpush.msra.mxu0 0.0
    %751 = vmatpush.msra.mxu0 0.0
    %752 = vmatpush.msra.mxu0 0.0
    %753 = vmatpush.msra.mxu0 0.0
    %754 = vmatpush.msra.mxu0 0.0
    %755 = vmatpush.msra.mxu0 0.0
    %756 = vmatpush.msra.mxu0 %v723
    %757 = vmatpush.msra.mxu0 %v722
    %758 = vmatpush.msra.mxu0 %v721
    %759 = vmatpush.msra.mxu0 %v720
    %760 = vmatmul.f32.gmra.mxu0 %v733
    %v761 = vpop.f32.mrf.mxu0
    %v762 = vadd.f32 %v730, %v761
    %763 = vmatmul.f32.gmra.mxu0 %v736
    %v764 = vpop.f32.mrf.mxu0
    %v765 = vadd.f32 %v730, %v764
    %766 = vmatmul.f32.gmra.mxu0 %v739
    %v767 = vpop.f32.mrf.mxu0
    %v768 = vadd.f32 %v730, %v767
    %769 = vmatmul.f32.gmra.mxu0 %v742
    %v770 = vpop.f32.mrf.mxu0
    %v771 = vadd.f32 %v730, %v770
    %772 = vdwg.mxu0
    %773 = vmatpush.msra.mxu0 0.0
    %774 = vmatpush.msra.mxu0 0.0
    %775 = vmatpush.msra.mxu0 0.0
    %776 = vmatpush.msra.mxu0 0.0
    %777 = vmatpush.msra.mxu0 0.0
    %778 = vmatpush.msra.mxu0 0.0
    %779 = vmatpush.msra.mxu0 0.0
    %780 = vmatpush.msra.mxu0 0.0
    %781 = vmatpush.msra.mxu0 0.0
    %782 = vmatpush.msra.mxu0 0.0
    %783 = vmatpush.msra.mxu0 0.0
    %784 = vmatpush.msra.mxu0 0.0
    %785 = vmatpush.msra.mxu0 %v727
    %786 = vmatpush.msra.mxu0 %v726
    %787 = vmatpush.msra.mxu0 %v725
    %788 = vmatpush.msra.mxu0 %v724
    %789 = vmatmul.f32.gmra.mxu0 %v152
    %v790 = vpop.f32.mrf.mxu0
    %v791 = vadd.f32 0.0, %v790
    %792 = vdwg.mxu0
    %v793 = vadd.f32 %v762, %v791
    %v794 = vxor.u32 %v793, 2147483648
    %v795 = vmul.f32 %v794, 1.442695
    %v796 = vpow.pop %v795
    %v797 = vadd.f32 %v796, 1.0
    %v798 = vrcp.pop %v797
    %v799 = vmul.f32 %v797, %v798
    %v800 = vsub.f32 1.0, %v799
    %v801 = vmul.f32 %v798, %v800
    %v802 = vadd.f32 %v798, %v801
    %vm803 = vweird.f32 %v797
    %vm804 = vweird.f32 %v798
    %vm805 = vmor %vm803, %vm804
    %v806 = vsel %vm805, %v798, %v802
    %v807 = vand.u32 2147483647, %v797
    %vm808 = vcmp.eq.f32.partialorder %v807, 8.507059e+37
    %v809 = vand.u32 %v797, 2147483648
    %v810 = vor.u32 1.1754944e-38, %v809
    %v811 = vsel %vm808, %v810, %v806
    %v812 = vmul.f32 1.0, %v811
    %v813 = vtanh.pop %v793
    %v814 = vmul.f32 %v812, 0.0
    %816 = vrot.lane.b32.xlu0 %v813, 64
    %v817 = vpop.permute.xlu0 %816
    %v819 = vmul.f32 %v812, %v817
    %821 = vrot.lane.b32.xlu0 %v819, 32
    %v822 = vpop.permute.xlu0 %821
    %v824 = vadd.f32 %v814, %v822
    %v825 = vtanh.pop %v824
    %827 = vrot.lane.b32.xlu0 %v825, 64
    %v828 = vpop.permute.xlu0 %827
    %v830 = vmul.f32 %v812, %v828
    %832 = vrot.lane.b32.xlu0 %v830, 32
    %v833 = vpop.permute.xlu0 %832
    %835 = vst.msk [vmem:[#allocation3] sm:$0xf] %vm216, %v833
    %v836 = vsel %vm150, %v833, 0
    %838 = vmatpush.msra.mxu0 0.0
    %839 = vmatpush.msra.mxu0 0.0
    %840 = vmatpush.msra.mxu0 0.0
    %841 = vmatpush.msra.mxu0 0.0
    %842 = vmatpush.msra.mxu0 0.0
    %843 = vmatpush.msra.mxu0 0.0
    %844 = vmatpush.msra.mxu0 0.0
    %845 = vmatpush.msra.mxu0 0.0
    %846 = vmatpush.msra.mxu0 0.0
    %847 = vmatpush.msra.mxu0 0.0
    %848 = vmatpush.msra.mxu0 0.0
    %849 = vmatpush.msra.mxu0 0.0
    %850 = vmatpush.msra.mxu0 %v727
    %851 = vmatpush.msra.mxu0 %v726
    %852 = vmatpush.msra.mxu0 %v725
    %853 = vmatpush.msra.mxu0 %v724
    %854 = vmatmul.f32.gmra.mxu0 %v836
    %v855 = vpop.f32.mrf.mxu0
    %v856 = vadd.f32 0.0, %v855
    %857 = vdwg.mxu0
    %v859 = vrot.slane %v856, 4
    %v861 = vadd.f32 %v762, %v859
    %v862 = vxor.u32 %v861, 2147483648
    %v863 = vmul.f32 %v862, 1.442695
    %v864 = vpow.pop %v863
    %v865 = vadd.f32 %v864, 1.0
    %v866 = vrcp.pop %v865
    %v867 = vmul.f32 %v865, %v866
    %v868 = vsub.f32 1.0, %v867
    %v869 = vmul.f32 %v866, %v868
    %v870 = vadd.f32 %v866, %v869
    %vm871 = vweird.f32 %v865
    %vm872 = vweird.f32 %v866
    %vm873 = vmor %vm871, %vm872
    %v874 = vsel %vm873, %v866, %v870
    %v875 = vand.u32 2147483647, %v865
    %vm876 = vcmp.eq.f32.partialorder %v875, 8.507059e+37
    %v877 = vand.u32 %v865, 2147483648
    %v878 = vor.u32 1.1754944e-38, %v877
    %v879 = vsel %vm876, %v878, %v874
    %v880 = vmul.f32 1.0, %v879
    %v881 = vtanh.pop %v861
    %v883 = vrot.slane %v824, 4
    %v885 = vmul.f32 %v880, %v883
    %887 = vrot.lane.b32.xlu0 %v881, 64
    %v888 = vpop.permute.xlu0 %887
    %v890 = vmul.f32 %v880, %v888
    %892 = vrot.lane.b32.xlu0 %v890, 32
    %v893 = vpop.permute.xlu0 %892
    %v895 = vadd.f32 %v885, %v893
    %v896 = vtanh.pop %v895
    %898 = vrot.lane.b32.xlu0 %v896, 64
    %v899 = vpop.permute.xlu0 %898
    %v901 = vmul.f32 %v880, %v899
    %903 = vrot.lane.b32.xlu0 %v901, 32
    %v904 = vpop.permute.xlu0 %903
    %906 = vst.msk [vmem:[#allocation3] sm:$0xf0] %vm288, %v904
    %v907 = vrot.slane %v901, 4
    %908 = vrot.lane.b32.xlu0 %v907, 32
    %v909 = vpop.permute.xlu0 %908
    %v910 = vsel %vm150, %v909, 0
    %912 = vmatpush.msra.mxu0 0.0
    %913 = vmatpush.msra.mxu0 0.0
    %914 = vmatpush.msra.mxu0 0.0
    %915 = vmatpush.msra.mxu0 0.0
    %916 = vmatpush.msra.mxu0 0.0
    %917 = vmatpush.msra.mxu0 0.0
    %918 = vmatpush.msra.mxu0 0.0
    %919 = vmatpush.msra.mxu0 0.0
    %920 = vmatpush.msra.mxu0 0.0
    %921 = vmatpush.msra.mxu0 0.0
    %922 = vmatpush.msra.mxu0 0.0
    %923 = vmatpush.msra.mxu0 0.0
    %924 = vmatpush.msra.mxu0 %v727
    %925 = vmatpush.msra.mxu0 %v726
    %926 = vmatpush.msra.mxu0 %v725
    %927 = vmatpush.msra.mxu0 %v724
    %928 = vmatmul.f32.gmra.mxu0 %v910
    %v929 = vpop.f32.mrf.mxu0
    %v930 = vadd.f32 0.0, %v929
    %931 = vdwg.mxu0
    %v932 = vadd.f32 %v765, %v930
    %v933 = vxor.u32 %v932, 2147483648
    %v934 = vmul.f32 %v933, 1.442695
    %v935 = vpow.pop %v934
    %v936 = vadd.f32 %v935, 1.0
    %v937 = vrcp.pop %v936
    %v938 = vmul.f32 %v936, %v937
    %v939 = vsub.f32 1.0, %v938
    %v940 = vmul.f32 %v937, %v939
    %v941 = vadd.f32 %v937, %v940
    %vm942 = vweird.f32 %v936
    %vm943 = vweird.f32 %v937
    %vm944 = vmor %vm942, %vm943
    %v945 = vsel %vm944, %v937, %v941
    %v946 = vand.u32 2147483647, %v936
    %vm947 = vcmp.eq.f32.partialorder %v946, 8.507059e+37
    %v948 = vand.u32 %v936, 2147483648
    %v949 = vor.u32 1.1754944e-38, %v948
    %v950 = vsel %vm947, %v949, %v945
    %v951 = vmul.f32 1.0, %v950
    %v952 = vtanh.pop %v932
    %v954 = vrot.slane %v895, 4
    %v956 = vmul.f32 %v951, %v954
    %958 = vrot.lane.b32.xlu0 %v952, 64
    %v959 = vpop.permute.xlu0 %958
    %v961 = vmul.f32 %v951, %v959
    %963 = vrot.lane.b32.xlu0 %v961, 32
    %v964 = vpop.permute.xlu0 %963
    %v966 = vadd.f32 %v956, %v964
    %v967 = vtanh.pop %v966
    %969 = vrot.lane.b32.xlu0 %v967, 64
    %v970 = vpop.permute.xlu0 %969
    %v972 = vmul.f32 %v951, %v970
    %974 = vrot.lane.b32.xlu0 %v972, 32
    %v975 = vpop.permute.xlu0 %974
    %977 = vst.msk [vmem:[#allocation3 + $0x8] sm:$0xf] %vm216, %v975
    %v978 = vsel %vm150, %v975, 0
    %980 = vmatpush.msra.mxu0 0.0
    %981 = vmatpush.msra.mxu0 0.0
    %982 = vmatpush.msra.mxu0 0.0
    %983 = vmatpush.msra.mxu0 0.0
    %984 = vmatpush.msra.mxu0 0.0
    %985 = vmatpush.msra.mxu0 0.0
    %986 = vmatpush.msra.mxu0 0.0
    %987 = vmatpush.msra.mxu0 0.0
    %988 = vmatpush.msra.mxu0 0.0
    %989 = vmatpush.msra.mxu0 0.0
    %990 = vmatpush.msra.mxu0 0.0
    %991 = vmatpush.msra.mxu0 0.0
    %992 = vmatpush.msra.mxu0 %v727
    %993 = vmatpush.msra.mxu0 %v726
    %994 = vmatpush.msra.mxu0 %v725
    %995 = vmatpush.msra.mxu0 %v724
    %996 = vmatmul.f32.gmra.mxu0 %v978
    %v997 = vpop.f32.mrf.mxu0
    %v998 = vadd.f32 0.0, %v997
    %999 = vdwg.mxu0
    %v1001 = vrot.slane %v998, 4
    %v1003 = vadd.f32 %v765, %v1001
    %v1004 = vxor.u32 %v1003, 2147483648
    %v1005 = vmul.f32 %v1004, 1.442695
    %v1006 = vpow.pop %v1005
    %v1007 = vadd.f32 %v1006, 1.0
    %v1008 = vrcp.pop %v1007
    %v1009 = vmul.f32 %v1007, %v1008
    %v1010 = vsub.f32 1.0, %v1009
    %v1011 = vmul.f32 %v1008, %v1010
    %v1012 = vadd.f32 %v1008, %v1011
    %vm1013 = vweird.f32 %v1007
    %vm1014 = vweird.f32 %v1008
    %vm1015 = vmor %vm1013, %vm1014
    %v1016 = vsel %vm1015, %v1008, %v1012
    %v1017 = vand.u32 2147483647, %v1007
    %vm1018 = vcmp.eq.f32.partialorder %v1017, 8.507059e+37
    %v1019 = vand.u32 %v1007, 2147483648
    %v1020 = vor.u32 1.1754944e-38, %v1019
    %v1021 = vsel %vm1018, %v1020, %v1016
    %v1022 = vmul.f32 1.0, %v1021
    %v1023 = vtanh.pop %v1003
    %v1025 = vrot.slane %v966, 4
    %v1027 = vmul.f32 %v1022, %v1025
    %1029 = vrot.lane.b32.xlu0 %v1023, 64
    %v1030 = vpop.permute.xlu0 %1029
    %v1032 = vmul.f32 %v1022, %v1030
    %1034 = vrot.lane.b32.xlu0 %v1032, 32
    %v1035 = vpop.permute.xlu0 %1034
    %v1037 = vadd.f32 %v1027, %v1035
    %v1038 = vtanh.pop %v1037
    %1040 = vrot.lane.b32.xlu0 %v1038, 64
    %v1041 = vpop.permute.xlu0 %1040
    %v1043 = vmul.f32 %v1022, %v1041
    %1045 = vrot.lane.b32.xlu0 %v1043, 32
    %v1046 = vpop.permute.xlu0 %1045
    %1048 = vst.msk [vmem:[#allocation3 + $0x8] sm:$0xf0] %vm288, %v1046
    %v1049 = vrot.slane %v1043, 4
    %1050 = vrot.lane.b32.xlu0 %v1049, 32
    %v1051 = vpop.permute.xlu0 %1050
    %v1052 = vsel %vm150, %v1051, 0
    %1054 = vmatpush.msra.mxu0 0.0
    %1055 = vmatpush.msra.mxu0 0.0
    %1056 = vmatpush.msra.mxu0 0.0
    %1057 = vmatpush.msra.mxu0 0.0
    %1058 = vmatpush.msra.mxu0 0.0
    %1059 = vmatpush.msra.mxu0 0.0
    %1060 = vmatpush.msra.mxu0 0.0
    %1061 = vmatpush.msra.mxu0 0.0
    %1062 = vmatpush.msra.mxu0 0.0
    %1063 = vmatpush.msra.mxu0 0.0
    %1064 = vmatpush.msra.mxu0 0.0
    %1065 = vmatpush.msra.mxu0 0.0
    %1066 = vmatpush.msra.mxu0 %v727
    %1067 = vmatpush.msra.mxu0 %v726
    %1068 = vmatpush.msra.mxu0 %v725
    %1069 = vmatpush.msra.mxu0 %v724
    %1070 = vmatmul.f32.gmra.mxu0 %v1052
    %v1071 = vpop.f32.mrf.mxu0
    %v1072 = vadd.f32 0.0, %v1071
    %1073 = vdwg.mxu0
    %v1074 = vadd.f32 %v768, %v1072
    %v1075 = vxor.u32 %v1074, 2147483648
    %v1076 = vmul.f32 %v1075, 1.442695
    %v1077 = vpow.pop %v1076
    %v1078 = vadd.f32 %v1077, 1.0
    %v1079 = vrcp.pop %v1078
    %v1080 = vmul.f32 %v1078, %v1079
    %v1081 = vsub.f32 1.0, %v1080
    %v1082 = vmul.f32 %v1079, %v1081
    %v1083 = vadd.f32 %v1079, %v1082
    %vm1084 = vweird.f32 %v1078
    %vm1085 = vweird.f32 %v1079
    %vm1086 = vmor %vm1084, %vm1085
    %v1087 = vsel %vm1086, %v1079, %v1083
    %v1088 = vand.u32 2147483647, %v1078
    %vm1089 = vcmp.eq.f32.partialorder %v1088, 8.507059e+37
    %v1090 = vand.u32 %v1078, 2147483648
    %v1091 = vor.u32 1.1754944e-38, %v1090
    %v1092 = vsel %vm1089, %v1091, %v1087
    %v1093 = vmul.f32 1.0, %v1092
    %v1094 = vtanh.pop %v1074
    %v1096 = vrot.slane %v1037, 4
    %v1098 = vmul.f32 %v1093, %v1096
    %1100 = vrot.lane.b32.xlu0 %v1094, 64
    %v1101 = vpop.permute.xlu0 %1100
    %v1103 = vmul.f32 %v1093, %v1101
    %1105 = vrot.lane.b32.xlu0 %v1103, 32
    %v1106 = vpop.permute.xlu0 %1105
    %v1108 = vadd.f32 %v1098, %v1106
    %v1109 = vtanh.pop %v1108
    %1111 = vrot.lane.b32.xlu0 %v1109, 64
    %v1112 = vpop.permute.xlu0 %1111
    %v1114 = vmul.f32 %v1093, %v1112
    %1116 = vrot.lane.b32.xlu0 %v1114, 32
    %v1117 = vpop.permute.xlu0 %1116
    %1119 = vst.msk [vmem:[#allocation3 + $0x10] sm:$0xf] %vm216, %v1117
    %v1120 = vsel %vm150, %v1117, 0
    %1122 = vmatpush.msra.mxu0 0.0
    %1123 = vmatpush.msra.mxu0 0.0
    %1124 = vmatpush.msra.mxu0 0.0
    %1125 = vmatpush.msra.mxu0 0.0
    %1126 = vmatpush.msra.mxu0 0.0
    %1127 = vmatpush.msra.mxu0 0.0
    %1128 = vmatpush.msra.mxu0 0.0
    %1129 = vmatpush.msra.mxu0 0.0
    %1130 = vmatpush.msra.mxu0 0.0
    %1131 = vmatpush.msra.mxu0 0.0
    %1132 = vmatpush.msra.mxu0 0.0
    %1133 = vmatpush.msra.mxu0 0.0
    %1134 = vmatpush.msra.mxu0 %v727
    %1135 = vmatpush.msra.mxu0 %v726
    %1136 = vmatpush.msra.mxu0 %v725
    %1137 = vmatpush.msra.mxu0 %v724
    %1138 = vmatmul.f32.gmra.mxu0 %v1120
    %v1139 = vpop.f32.mrf.mxu0
    %v1140 = vadd.f32 0.0, %v1139
    %1141 = vdwg.mxu0
    %v1143 = vrot.slane %v1140, 4
    %v1145 = vadd.f32 %v768, %v1143
    %v1146 = vxor.u32 %v1145, 2147483648
    %v1147 = vmul.f32 %v1146, 1.442695
    %v1148 = vpow.pop %v1147
    %v1149 = vadd.f32 %v1148, 1.0
    %v1150 = vrcp.pop %v1149
    %v1151 = vmul.f32 %v1149, %v1150
    %v1152 = vsub.f32 1.0, %v1151
    %v1153 = vmul.f32 %v1150, %v1152
    %v1154 = vadd.f32 %v1150, %v1153
    %vm1155 = vweird.f32 %v1149
    %vm1156 = vweird.f32 %v1150
    %vm1157 = vmor %vm1155, %vm1156
    %v1158 = vsel %vm1157, %v1150, %v1154
    %v1159 = vand.u32 2147483647, %v1149
    %vm1160 = vcmp.eq.f32.partialorder %v1159, 8.507059e+37
    %v1161 = vand.u32 %v1149, 2147483648
    %v1162 = vor.u32 1.1754944e-38, %v1161
    %v1163 = vsel %vm1160, %v1162, %v1158
    %v1164 = vmul.f32 1.0, %v1163
    %v1165 = vtanh.pop %v1145
    %v1167 = vrot.slane %v1108, 4
    %v1169 = vmul.f32 %v1164, %v1167
    %1171 = vrot.lane.b32.xlu0 %v1165, 64
    %v1172 = vpop.permute.xlu0 %1171
    %v1174 = vmul.f32 %v1164, %v1172
    %1176 = vrot.lane.b32.xlu0 %v1174, 32
    %v1177 = vpop.permute.xlu0 %1176
    %v1179 = vadd.f32 %v1169, %v1177
    %v1180 = vtanh.pop %v1179
    %1182 = vrot.lane.b32.xlu0 %v1180, 64
    %v1183 = vpop.permute.xlu0 %1182
    %v1185 = vmul.f32 %v1164, %v1183
    %1187 = vrot.lane.b32.xlu0 %v1185, 32
    %v1188 = vpop.permute.xlu0 %1187
    %1190 = vst.msk [vmem:[#allocation3 + $0x10] sm:$0xf0] %vm288, %v1188
    %v1191 = vrot.slane %v1185, 4
    %1192 = vrot.lane.b32.xlu0 %v1191, 32
    %v1193 = vpop.permute.xlu0 %1192
    %v1194 = vsel %vm150, %v1193, 0
    %1196 = vmatpush.msra.mxu0 0.0
    %1197 = vmatpush.msra.mxu0 0.0
    %1198 = vmatpush.msra.mxu0 0.0
    %1199 = vmatpush.msra.mxu0 0.0
    %1200 = vmatpush.msra.mxu0 0.0
    %1201 = vmatpush.msra.mxu0 0.0
    %1202 = vmatpush.msra.mxu0 0.0
    %1203 = vmatpush.msra.mxu0 0.0
    %1204 = vmatpush.msra.mxu0 0.0
    %1205 = vmatpush.msra.mxu0 0.0
    %1206 = vmatpush.msra.mxu0 0.0
    %1207 = vmatpush.msra.mxu0 0.0
    %1208 = vmatpush.msra.mxu0 %v727
    %1209 = vmatpush.msra.mxu0 %v726
    %1210 = vmatpush.msra.mxu0 %v725
    %1211 = vmatpush.msra.mxu0 %v724
    %1212 = vmatmul.f32.gmra.mxu0 %v1194
    %v1213 = vpop.f32.mrf.mxu0
    %v1214 = vadd.f32 0.0, %v1213
    %1215 = vdwg.mxu0
    %v1216 = vadd.f32 %v771, %v1214
    %v1217 = vxor.u32 %v1216, 2147483648
    %v1218 = vmul.f32 %v1217, 1.442695
    %v1219 = vpow.pop %v1218
    %v1220 = vadd.f32 %v1219, 1.0
    %v1221 = vrcp.pop %v1220
    %v1222 = vmul.f32 %v1220, %v1221
    %v1223 = vsub.f32 1.0, %v1222
    %v1224 = vmul.f32 %v1221, %v1223
    %v1225 = vadd.f32 %v1221, %v1224
    %vm1226 = vweird.f32 %v1220
    %vm1227 = vweird.f32 %v1221
    %vm1228 = vmor %vm1226, %vm1227
    %v1229 = vsel %vm1228, %v1221, %v1225
    %v1230 = vand.u32 2147483647, %v1220
    %vm1231 = vcmp.eq.f32.partialorder %v1230, 8.507059e+37
    %v1232 = vand.u32 %v1220, 2147483648
    %v1233 = vor.u32 1.1754944e-38, %v1232
    %v1234 = vsel %vm1231, %v1233, %v1229
    %v1235 = vmul.f32 1.0, %v1234
    %v1236 = vtanh.pop %v1216
    %v1238 = vrot.slane %v1179, 4
    %v1240 = vmul.f32 %v1235, %v1238
    %1242 = vrot.lane.b32.xlu0 %v1236, 64
    %v1243 = vpop.permute.xlu0 %1242
    %v1245 = vmul.f32 %v1235, %v1243
    %1247 = vrot.lane.b32.xlu0 %v1245, 32
    %v1248 = vpop.permute.xlu0 %1247
    %v1250 = vadd.f32 %v1240, %v1248
    %v1251 = vtanh.pop %v1250
    %1253 = vrot.lane.b32.xlu0 %v1251, 64
    %v1254 = vpop.permute.xlu0 %1253
    %v1256 = vmul.f32 %v1235, %v1254
    %1258 = vrot.lane.b32.xlu0 %v1256, 32
    %v1259 = vpop.permute.xlu0 %1258
    %1261 = vst.msk [vmem:[#allocation3 + $0x18] sm:$0xf] %vm216, %v1259
    %v1262 = vsel %vm150, %v1259, 0
    %1264 = vmatpush.msra.mxu0 0.0
    %1265 = vmatpush.msra.mxu0 0.0
    %1266 = vmatpush.msra.mxu0 0.0
    %1267 = vmatpush.msra.mxu0 0.0
    %1268 = vmatpush.msra.mxu0 0.0
    %1269 = vmatpush.msra.mxu0 0.0
    %1270 = vmatpush.msra.mxu0 0.0
    %1271 = vmatpush.msra.mxu0 0.0
    %1272 = vmatpush.msra.mxu0 0.0
    %1273 = vmatpush.msra.mxu0 0.0
    %1274 = vmatpush.msra.mxu0 0.0
    %1275 = vmatpush.msra.mxu0 0.0
    %1276 = vmatpush.msra.mxu0 %v727
    %1277 = vmatpush.msra.mxu0 %v726
    %1278 = vmatpush.msra.mxu0 %v725
    %1279 = vmatpush.msra.mxu0 %v724
    %1280 = vmatmul.f32.gmra.mxu0 %v1262
    %v1281 = vpop.f32.mrf.mxu0
    %v1282 = vadd.f32 0.0, %v1281
    %1283 = vdwg.mxu0
    %v1285 = vrot.slane %v1282, 4
    %v1287 = vadd.f32 %v771, %v1285
    %v1288 = vxor.u32 %v1287, 2147483648
    %v1289 = vmul.f32 %v1288, 1.442695
    %v1290 = vpow.pop %v1289
    %v1291 = vadd.f32 %v1290, 1.0
    %v1292 = vrcp.pop %v1291
    %v1293 = vmul.f32 %v1291, %v1292
    %v1294 = vsub.f32 1.0, %v1293
    %v1295 = vmul.f32 %v1292, %v1294
    %v1296 = vadd.f32 %v1292, %v1295
    %vm1297 = vweird.f32 %v1291
    %vm1298 = vweird.f32 %v1292
    %vm1299 = vmor %vm1297, %vm1298
    %v1300 = vsel %vm1299, %v1292, %v1296
    %v1301 = vand.u32 2147483647, %v1291
    %vm1302 = vcmp.eq.f32.partialorder %v1301, 8.507059e+37
    %v1303 = vand.u32 %v1291, 2147483648
    %v1304 = vor.u32 1.1754944e-38, %v1303
    %v1305 = vsel %vm1302, %v1304, %v1300
    %v1306 = vmul.f32 1.0, %v1305
    %v1307 = vtanh.pop %v1287
    %v1309 = vrot.slane %v1250, 4
    %v1311 = vmul.f32 %v1306, %v1309
    %1313 = vrot.lane.b32.xlu0 %v1307, 64
    %v1314 = vpop.permute.xlu0 %1313
    %v1316 = vmul.f32 %v1306, %v1314
    %1318 = vrot.lane.b32.xlu0 %v1316, 32
    %v1319 = vpop.permute.xlu0 %1318
    %v1321 = vadd.f32 %v1311, %v1319
    %v1322 = vtanh.pop %v1321
    %1324 = vrot.lane.b32.xlu0 %v1322, 64
    %v1325 = vpop.permute.xlu0 %1324
    %v1327 = vmul.f32 %v1306, %v1325
    %1329 = vrot.lane.b32.xlu0 %v1327, 32
    %v1330 = vpop.permute.xlu0 %1329
    %1332 = vst.msk [vmem:[#allocation3 + $0x18] sm:$0xf0] %vm288, %v1330
    %v1333 = vld [vmem:[#allocation3] sm:$0xff]
    %v1334 = vld [vmem:[#allocation3 + $0x8] sm:$0xff]
    %v1335 = vld [vmem:[#allocation3 + $0x10] sm:$0xff]
    %v1336 = vld [vmem:[#allocation3 + $0x18] sm:$0xff]
    %v1337 = vld [vmem:[#allocation7] sm:$0xff]
    %v1338 = vld [vmem:[#allocation7 + $0x8] sm:$0xff]
    %v1339 = vld [vmem:[#allocation7 + $0x10] sm:$0xff]
    %v1340 = vld [vmem:[#allocation7 + $0x18] sm:$0xff]
    %v1341 = vld [vmem:[#allocation9] sm:$0xff]
    %v1342 = vld [vmem:[#allocation9 + $0x8] sm:$0xff]
    %v1343 = vld [vmem:[#allocation9 + $0x10] sm:$0xff]
    %v1344 = vld [vmem:[#allocation9 + $0x18] sm:$0xff]
    %v1345 = vld [vmem:[%s9] sm:$0x1]
    %v1347 = vperm.slane %v1345, 0
    %v1350 = vsel %vm150, %v1333, 0
    %v1353 = vsel %vm150, %v1334, 0
    %v1356 = vsel %vm150, %v1335, 0
    %v1359 = vsel %vm150, %v1336, 0
    %1361 = vmatpush.msra.mxu0 0.0
    %1362 = vmatpush.msra.mxu0 0.0
    %1363 = vmatpush.msra.mxu0 0.0
    %1364 = vmatpush.msra.mxu0 0.0
    %1365 = vmatpush.msra.mxu0 0.0
    %1366 = vmatpush.msra.mxu0 0.0
    %1367 = vmatpush.msra.mxu0 0.0
    %1368 = vmatpush.msra.mxu0 0.0
    %1369 = vmatpush.msra.mxu0 0.0
    %1370 = vmatpush.msra.mxu0 0.0
    %1371 = vmatpush.msra.mxu0 0.0
    %1372 = vmatpush.msra.mxu0 0.0
    %1373 = vmatpush.msra.mxu0 %v1340
    %1374 = vmatpush.msra.mxu0 %v1339
    %1375 = vmatpush.msra.mxu0 %v1338
    %1376 = vmatpush.msra.mxu0 %v1337
    %1377 = vmatmul.f32.gmra.mxu0 %v1350
    %v1378 = vpop.f32.mrf.mxu0
    %v1379 = vadd.f32 %v1347, %v1378
    %1380 = vmatmul.f32.gmra.mxu0 %v1353
    %v1381 = vpop.f32.mrf.mxu0
    %v1382 = vadd.f32 %v1347, %v1381
    %1383 = vmatmul.f32.gmra.mxu0 %v1356
    %v1384 = vpop.f32.mrf.mxu0
    %v1385 = vadd.f32 %v1347, %v1384
    %1386 = vmatmul.f32.gmra.mxu0 %v1359
    %v1387 = vpop.f32.mrf.mxu0
    %v1388 = vadd.f32 %v1347, %v1387
    %1389 = vdwg.mxu0
    %1390 = vmatpush.msra.mxu0 0.0
    %1391 = vmatpush.msra.mxu0 0.0
    %1392 = vmatpush.msra.mxu0 0.0
    %1393 = vmatpush.msra.mxu0 0.0
    %1394 = vmatpush.msra.mxu0 0.0
    %1395 = vmatpush.msra.mxu0 0.0
    %1396 = vmatpush.msra.mxu0 0.0
    %1397 = vmatpush.msra.mxu0 0.0
    %1398 = vmatpush.msra.mxu0 0.0
    %1399 = vmatpush.msra.mxu0 0.0
    %1400 = vmatpush.msra.mxu0 0.0
    %1401 = vmatpush.msra.mxu0 0.0
    %1402 = vmatpush.msra.mxu0 %v1344
    %1403 = vmatpush.msra.mxu0 %v1343
    %1404 = vmatpush.msra.mxu0 %v1342
    %1405 = vmatpush.msra.mxu0 %v1341
    %1406 = vmatmul.f32.gmra.mxu0 %v152
    %v1407 = vpop.f32.mrf.mxu0
    %v1408 = vadd.f32 0.0, %v1407
    %1409 = vdwg.mxu0
    %v1410 = vadd.f32 %v1379, %v1408
    %v1411 = vxor.u32 %v1410, 2147483648
    %v1412 = vmul.f32 %v1411, 1.442695
    %v1413 = vpow.pop %v1412
    %v1414 = vadd.f32 %v1413, 1.0
    %v1415 = vrcp.pop %v1414
    %v1416 = vmul.f32 %v1414, %v1415
    %v1417 = vsub.f32 1.0, %v1416
    %v1418 = vmul.f32 %v1415, %v1417
    %v1419 = vadd.f32 %v1415, %v1418
    %vm1420 = vweird.f32 %v1414
    %vm1421 = vweird.f32 %v1415
    %vm1422 = vmor %vm1420, %vm1421
    %v1423 = vsel %vm1422, %v1415, %v1419
    %v1424 = vand.u32 2147483647, %v1414
    %vm1425 = vcmp.eq.f32.partialorder %v1424, 8.507059e+37
    %v1426 = vand.u32 %v1414, 2147483648
    %v1427 = vor.u32 1.1754944e-38, %v1426
    %v1428 = vsel %vm1425, %v1427, %v1423
    %v1429 = vmul.f32 1.0, %v1428
    %v1430 = vtanh.pop %v1410
    %v1431 = vmul.f32 %v1429, 0.0
    %1433 = vrot.lane.b32.xlu0 %v1430, 64
    %v1434 = vpop.permute.xlu0 %1433
    %v1436 = vmul.f32 %v1429, %v1434
    %1438 = vrot.lane.b32.xlu0 %v1436, 32
    %v1439 = vpop.permute.xlu0 %1438
    %v1441 = vadd.f32 %v1431, %v1439
    %v1442 = vtanh.pop %v1441
    %1444 = vrot.lane.b32.xlu0 %v1442, 64
    %v1445 = vpop.permute.xlu0 %1444
    %v1447 = vmul.f32 %v1429, %v1445
    %1449 = vrot.lane.b32.xlu0 %v1447, 32
    %v1450 = vpop.permute.xlu0 %1449
    %1452 = vst.msk [vmem:[#allocation4] sm:$0xf] %vm216, %v1450
    %v1453 = vsel %vm150, %v1450, 0
    %1455 = vmatpush.msra.mxu0 0.0
    %1456 = vmatpush.msra.mxu0 0.0
    %1457 = vmatpush.msra.mxu0 0.0
    %1458 = vmatpush.msra.mxu0 0.0
    %1459 = vmatpush.msra.mxu0 0.0
    %1460 = vmatpush.msra.mxu0 0.0
    %1461 = vmatpush.msra.mxu0 0.0
    %1462 = vmatpush.msra.mxu0 0.0
    %1463 = vmatpush.msra.mxu0 0.0
    %1464 = vmatpush.msra.mxu0 0.0
    %1465 = vmatpush.msra.mxu0 0.0
    %1466 = vmatpush.msra.mxu0 0.0
    %1467 = vmatpush.msra.mxu0 %v1344
    %1468 = vmatpush.msra.mxu0 %v1343
    %1469 = vmatpush.msra.mxu0 %v1342
    %1470 = vmatpush.msra.mxu0 %v1341
    %1471 = vmatmul.f32.gmra.mxu0 %v1453
    %v1472 = vpop.f32.mrf.mxu0
    %v1473 = vadd.f32 0.0, %v1472
    %1474 = vdwg.mxu0
    %v1476 = vrot.slane %v1473, 4
    %v1478 = vadd.f32 %v1379, %v1476
    %v1479 = vxor.u32 %v1478, 2147483648
    %v1480 = vmul.f32 %v1479, 1.442695
    %v1481 = vpow.pop %v1480
    %v1482 = vadd.f32 %v1481, 1.0
    %v1483 = vrcp.pop %v1482
    %v1484 = vmul.f32 %v1482, %v1483
    %v1485 = vsub.f32 1.0, %v1484
    %v1486 = vmul.f32 %v1483, %v1485
    %v1487 = vadd.f32 %v1483, %v1486
    %vm1488 = vweird.f32 %v1482
    %vm1489 = vweird.f32 %v1483
    %vm1490 = vmor %vm1488, %vm1489
    %v1491 = vsel %vm1490, %v1483, %v1487
    %v1492 = vand.u32 2147483647, %v1482
    %vm1493 = vcmp.eq.f32.partialorder %v1492, 8.507059e+37
    %v1494 = vand.u32 %v1482, 2147483648
    %v1495 = vor.u32 1.1754944e-38, %v1494
    %v1496 = vsel %vm1493, %v1495, %v1491
    %v1497 = vmul.f32 1.0, %v1496
    %v1498 = vtanh.pop %v1478
    %v1500 = vrot.slane %v1441, 4
    %v1502 = vmul.f32 %v1497, %v1500
    %1504 = vrot.lane.b32.xlu0 %v1498, 64
    %v1505 = vpop.permute.xlu0 %1504
    %v1507 = vmul.f32 %v1497, %v1505
    %1509 = vrot.lane.b32.xlu0 %v1507, 32
    %v1510 = vpop.permute.xlu0 %1509
    %v1512 = vadd.f32 %v1502, %v1510
    %v1513 = vtanh.pop %v1512
    %1515 = vrot.lane.b32.xlu0 %v1513, 64
    %v1516 = vpop.permute.xlu0 %1515
    %v1518 = vmul.f32 %v1497, %v1516
    %1520 = vrot.lane.b32.xlu0 %v1518, 32
    %v1521 = vpop.permute.xlu0 %1520
    %1523 = vst.msk [vmem:[#allocation4] sm:$0xf0] %vm288, %v1521
    %v1524 = vrot.slane %v1518, 4
    %1525 = vrot.lane.b32.xlu0 %v1524, 32
    %v1526 = vpop.permute.xlu0 %1525
    %v1527 = vsel %vm150, %v1526, 0
    %1529 = vmatpush.msra.mxu0 0.0
    %1530 = vmatpush.msra.mxu0 0.0
    %1531 = vmatpush.msra.mxu0 0.0
    %1532 = vmatpush.msra.mxu0 0.0
    %1533 = vmatpush.msra.mxu0 0.0
    %1534 = vmatpush.msra.mxu0 0.0
    %1535 = vmatpush.msra.mxu0 0.0
    %1536 = vmatpush.msra.mxu0 0.0
    %1537 = vmatpush.msra.mxu0 0.0
    %1538 = vmatpush.msra.mxu0 0.0
    %1539 = vmatpush.msra.mxu0 0.0
    %1540 = vmatpush.msra.mxu0 0.0
    %1541 = vmatpush.msra.mxu0 %v1344
    %1542 = vmatpush.msra.mxu0 %v1343
    %1543 = vmatpush.msra.mxu0 %v1342
    %1544 = vmatpush.msra.mxu0 %v1341
    %1545 = vmatmul.f32.gmra.mxu0 %v1527
    %v1546 = vpop.f32.mrf.mxu0
    %v1547 = vadd.f32 0.0, %v1546
    %1548 = vdwg.mxu0
    %v1549 = vadd.f32 %v1382, %v1547
    %v1550 = vxor.u32 %v1549, 2147483648
    %v1551 = vmul.f32 %v1550, 1.442695
    %v1552 = vpow.pop %v1551
    %v1553 = vadd.f32 %v1552, 1.0
    %v1554 = vrcp.pop %v1553
    %v1555 = vmul.f32 %v1553, %v1554
    %v1556 = vsub.f32 1.0, %v1555
    %v1557 = vmul.f32 %v1554, %v1556
    %v1558 = vadd.f32 %v1554, %v1557
    %vm1559 = vweird.f32 %v1553
    %vm1560 = vweird.f32 %v1554
    %vm1561 = vmor %vm1559, %vm1560
    %v1562 = vsel %vm1561, %v1554, %v1558
    %v1563 = vand.u32 2147483647, %v1553
    %vm1564 = vcmp.eq.f32.partialorder %v1563, 8.507059e+37
    %v1565 = vand.u32 %v1553, 2147483648
    %v1566 = vor.u32 1.1754944e-38, %v1565
    %v1567 = vsel %vm1564, %v1566, %v1562
    %v1568 = vmul.f32 1.0, %v1567
    %v1569 = vtanh.pop %v1549
    %v1571 = vrot.slane %v1512, 4
    %v1573 = vmul.f32 %v1568, %v1571
    %1575 = vrot.lane.b32.xlu0 %v1569, 64
    %v1576 = vpop.permute.xlu0 %1575
    %v1578 = vmul.f32 %v1568, %v1576
    %1580 = vrot.lane.b32.xlu0 %v1578, 32
    %v1581 = vpop.permute.xlu0 %1580
    %v1583 = vadd.f32 %v1573, %v1581
    %v1584 = vtanh.pop %v1583
    %1586 = vrot.lane.b32.xlu0 %v1584, 64
    %v1587 = vpop.permute.xlu0 %1586
    %v1589 = vmul.f32 %v1568, %v1587
    %1591 = vrot.lane.b32.xlu0 %v1589, 32
    %v1592 = vpop.permute.xlu0 %1591
    %1594 = vst.msk [vmem:[#allocation4 + $0x8] sm:$0xf] %vm216, %v1592
    %v1595 = vsel %vm150, %v1592, 0
    %1597 = vmatpush.msra.mxu0 0.0
    %1598 = vmatpush.msra.mxu0 0.0
    %1599 = vmatpush.msra.mxu0 0.0
    %1600 = vmatpush.msra.mxu0 0.0
    %1601 = vmatpush.msra.mxu0 0.0
    %1602 = vmatpush.msra.mxu0 0.0
    %1603 = vmatpush.msra.mxu0 0.0
    %1604 = vmatpush.msra.mxu0 0.0
    %1605 = vmatpush.msra.mxu0 0.0
    %1606 = vmatpush.msra.mxu0 0.0
    %1607 = vmatpush.msra.mxu0 0.0
    %1608 = vmatpush.msra.mxu0 0.0
    %1609 = vmatpush.msra.mxu0 %v1344
    %1610 = vmatpush.msra.mxu0 %v1343
    %1611 = vmatpush.msra.mxu0 %v1342
    %1612 = vmatpush.msra.mxu0 %v1341
    %1613 = vmatmul.f32.gmra.mxu0 %v1595
    %v1614 = vpop.f32.mrf.mxu0
    %v1615 = vadd.f32 0.0, %v1614
    %1616 = vdwg.mxu0
    %v1618 = vrot.slane %v1615, 4
    %v1620 = vadd.f32 %v1382, %v1618
    %v1621 = vxor.u32 %v1620, 2147483648
    %v1622 = vmul.f32 %v1621, 1.442695
    %v1623 = vpow.pop %v1622
    %v1624 = vadd.f32 %v1623, 1.0
    %v1625 = vrcp.pop %v1624
    %v1626 = vmul.f32 %v1624, %v1625
    %v1627 = vsub.f32 1.0, %v1626
    %v1628 = vmul.f32 %v1625, %v1627
    %v1629 = vadd.f32 %v1625, %v1628
    %vm1630 = vweird.f32 %v1624
    %vm1631 = vweird.f32 %v1625
    %vm1632 = vmor %vm1630, %vm1631
    %v1633 = vsel %vm1632, %v1625, %v1629
    %v1634 = vand.u32 2147483647, %v1624
    %vm1635 = vcmp.eq.f32.partialorder %v1634, 8.507059e+37
    %v1636 = vand.u32 %v1624, 2147483648
    %v1637 = vor.u32 1.1754944e-38, %v1636
    %v1638 = vsel %vm1635, %v1637, %v1633
    %v1639 = vmul.f32 1.0, %v1638
    %v1640 = vtanh.pop %v1620
    %v1642 = vrot.slane %v1583, 4
    %v1644 = vmul.f32 %v1639, %v1642
    %1646 = vrot.lane.b32.xlu0 %v1640, 64
    %v1647 = vpop.permute.xlu0 %1646
    %v1649 = vmul.f32 %v1639, %v1647
    %1651 = vrot.lane.b32.xlu0 %v1649, 32
    %v1652 = vpop.permute.xlu0 %1651
    %v1654 = vadd.f32 %v1644, %v1652
    %v1655 = vtanh.pop %v1654
    %1657 = vrot.lane.b32.xlu0 %v1655, 64
    %v1658 = vpop.permute.xlu0 %1657
    %v1660 = vmul.f32 %v1639, %v1658
    %1662 = vrot.lane.b32.xlu0 %v1660, 32
    %v1663 = vpop.permute.xlu0 %1662
    %1665 = vst.msk [vmem:[#allocation4 + $0x8] sm:$0xf0] %vm288, %v1663
    %v1666 = vrot.slane %v1660, 4
    %1667 = vrot.lane.b32.xlu0 %v1666, 32
    %v1668 = vpop.permute.xlu0 %1667
    %v1669 = vsel %vm150, %v1668, 0
    %1671 = vmatpush.msra.mxu0 0.0
    %1672 = vmatpush.msra.mxu0 0.0
    %1673 = vmatpush.msra.mxu0 0.0
    %1674 = vmatpush.msra.mxu0 0.0
    %1675 = vmatpush.msra.mxu0 0.0
    %1676 = vmatpush.msra.mxu0 0.0
    %1677 = vmatpush.msra.mxu0 0.0
    %1678 = vmatpush.msra.mxu0 0.0
    %1679 = vmatpush.msra.mxu0 0.0
    %1680 = vmatpush.msra.mxu0 0.0
    %1681 = vmatpush.msra.mxu0 0.0
    %1682 = vmatpush.msra.mxu0 0.0
    %1683 = vmatpush.msra.mxu0 %v1344
    %1684 = vmatpush.msra.mxu0 %v1343
    %1685 = vmatpush.msra.mxu0 %v1342
    %1686 = vmatpush.msra.mxu0 %v1341
    %1687 = vmatmul.f32.gmra.mxu0 %v1669
    %v1688 = vpop.f32.mrf.mxu0
    %v1689 = vadd.f32 0.0, %v1688
    %1690 = vdwg.mxu0
    %v1691 = vadd.f32 %v1385, %v1689
    %v1692 = vxor.u32 %v1691, 2147483648
    %v1693 = vmul.f32 %v1692, 1.442695
    %v1694 = vpow.pop %v1693
    %v1695 = vadd.f32 %v1694, 1.0
    %v1696 = vrcp.pop %v1695
    %v1697 = vmul.f32 %v1695, %v1696
    %v1698 = vsub.f32 1.0, %v1697
    %v1699 = vmul.f32 %v1696, %v1698
    %v1700 = vadd.f32 %v1696, %v1699
    %vm1701 = vweird.f32 %v1695
    %vm1702 = vweird.f32 %v1696
    %vm1703 = vmor %vm1701, %vm1702
    %v1704 = vsel %vm1703, %v1696, %v1700
    %v1705 = vand.u32 2147483647, %v1695
    %vm1706 = vcmp.eq.f32.partialorder %v1705, 8.507059e+37
    %v1707 = vand.u32 %v1695, 2147483648
    %v1708 = vor.u32 1.1754944e-38, %v1707
    %v1709 = vsel %vm1706, %v1708, %v1704
    %v1710 = vmul.f32 1.0, %v1709
    %v1711 = vtanh.pop %v1691
    %v1713 = vrot.slane %v1654, 4
    %v1715 = vmul.f32 %v1710, %v1713
    %1717 = vrot.lane.b32.xlu0 %v1711, 64
    %v1718 = vpop.permute.xlu0 %1717
    %v1720 = vmul.f32 %v1710, %v1718
    %1722 = vrot.lane.b32.xlu0 %v1720, 32
    %v1723 = vpop.permute.xlu0 %1722
    %v1725 = vadd.f32 %v1715, %v1723
    %v1726 = vtanh.pop %v1725
    %1728 = vrot.lane.b32.xlu0 %v1726, 64
    %v1729 = vpop.permute.xlu0 %1728
    %v1731 = vmul.f32 %v1710, %v1729
    %1733 = vrot.lane.b32.xlu0 %v1731, 32
    %v1734 = vpop.permute.xlu0 %1733
    %1736 = vst.msk [vmem:[#allocation4 + $0x10] sm:$0xf] %vm216, %v1734
    %v1737 = vsel %vm150, %v1734, 0
    %1739 = vmatpush.msra.mxu0 0.0
    %1740 = vmatpush.msra.mxu0 0.0
    %1741 = vmatpush.msra.mxu0 0.0
    %1742 = vmatpush.msra.mxu0 0.0
    %1743 = vmatpush.msra.mxu0 0.0
    %1744 = vmatpush.msra.mxu0 0.0
    %1745 = vmatpush.msra.mxu0 0.0
    %1746 = vmatpush.msra.mxu0 0.0
    %1747 = vmatpush.msra.mxu0 0.0
    %1748 = vmatpush.msra.mxu0 0.0
    %1749 = vmatpush.msra.mxu0 0.0
    %1750 = vmatpush.msra.mxu0 0.0
    %1751 = vmatpush.msra.mxu0 %v1344
    %1752 = vmatpush.msra.mxu0 %v1343
    %1753 = vmatpush.msra.mxu0 %v1342
    %1754 = vmatpush.msra.mxu0 %v1341
    %1755 = vmatmul.f32.gmra.mxu0 %v1737
    %v1756 = vpop.f32.mrf.mxu0
    %v1757 = vadd.f32 0.0, %v1756
    %1758 = vdwg.mxu0
    %v1760 = vrot.slane %v1757, 4
    %v1762 = vadd.f32 %v1385, %v1760
    %v1763 = vxor.u32 %v1762, 2147483648
    %v1764 = vmul.f32 %v1763, 1.442695
    %v1765 = vpow.pop %v1764
    %v1766 = vadd.f32 %v1765, 1.0
    %v1767 = vrcp.pop %v1766
    %v1768 = vmul.f32 %v1766, %v1767
    %v1769 = vsub.f32 1.0, %v1768
    %v1770 = vmul.f32 %v1767, %v1769
    %v1771 = vadd.f32 %v1767, %v1770
    %vm1772 = vweird.f32 %v1766
    %vm1773 = vweird.f32 %v1767
    %vm1774 = vmor %vm1772, %vm1773
    %v1775 = vsel %vm1774, %v1767, %v1771
    %v1776 = vand.u32 2147483647, %v1766
    %vm1777 = vcmp.eq.f32.partialorder %v1776, 8.507059e+37
    %v1778 = vand.u32 %v1766, 2147483648
    %v1779 = vor.u32 1.1754944e-38, %v1778
    %v1780 = vsel %vm1777, %v1779, %v1775
    %v1781 = vmul.f32 1.0, %v1780
    %v1782 = vtanh.pop %v1762
    %v1784 = vrot.slane %v1725, 4
    %v1786 = vmul.f32 %v1781, %v1784
    %1788 = vrot.lane.b32.xlu0 %v1782, 64
    %v1789 = vpop.permute.xlu0 %1788
    %v1791 = vmul.f32 %v1781, %v1789
    %1793 = vrot.lane.b32.xlu0 %v1791, 32
    %v1794 = vpop.permute.xlu0 %1793
    %v1796 = vadd.f32 %v1786, %v1794
    %v1797 = vtanh.pop %v1796
    %1799 = vrot.lane.b32.xlu0 %v1797, 64
    %v1800 = vpop.permute.xlu0 %1799
    %v1802 = vmul.f32 %v1781, %v1800
    %1804 = vrot.lane.b32.xlu0 %v1802, 32
    %v1805 = vpop.permute.xlu0 %1804
    %1807 = vst.msk [vmem:[#allocation4 + $0x10] sm:$0xf0] %vm288, %v1805
    %v1808 = vrot.slane %v1802, 4
    %1809 = vrot.lane.b32.xlu0 %v1808, 32
    %v1810 = vpop.permute.xlu0 %1809
    %v1811 = vsel %vm150, %v1810, 0
    %1813 = vmatpush.msra.mxu0 0.0
    %1814 = vmatpush.msra.mxu0 0.0
    %1815 = vmatpush.msra.mxu0 0.0
    %1816 = vmatpush.msra.mxu0 0.0
    %1817 = vmatpush.msra.mxu0 0.0
    %1818 = vmatpush.msra.mxu0 0.0
    %1819 = vmatpush.msra.mxu0 0.0
    %1820 = vmatpush.msra.mxu0 0.0
    %1821 = vmatpush.msra.mxu0 0.0
    %1822 = vmatpush.msra.mxu0 0.0
    %1823 = vmatpush.msra.mxu0 0.0
    %1824 = vmatpush.msra.mxu0 0.0
    %1825 = vmatpush.msra.mxu0 %v1344
    %1826 = vmatpush.msra.mxu0 %v1343
    %1827 = vmatpush.msra.mxu0 %v1342
    %1828 = vmatpush.msra.mxu0 %v1341
    %1829 = vmatmul.f32.gmra.mxu0 %v1811
    %v1830 = vpop.f32.mrf.mxu0
    %v1831 = vadd.f32 0.0, %v1830
    %1832 = vdwg.mxu0
    %v1833 = vadd.f32 %v1388, %v1831
    %v1834 = vxor.u32 %v1833, 2147483648
    %v1835 = vmul.f32 %v1834, 1.442695
    %v1836 = vpow.pop %v1835
    %v1837 = vadd.f32 %v1836, 1.0
    %v1838 = vrcp.pop %v1837
    %v1839 = vmul.f32 %v1837, %v1838
    %v1840 = vsub.f32 1.0, %v1839
    %v1841 = vmul.f32 %v1838, %v1840
    %v1842 = vadd.f32 %v1838, %v1841
    %vm1843 = vweird.f32 %v1837
    %vm1844 = vweird.f32 %v1838
    %vm1845 = vmor %vm1843, %vm1844
    %v1846 = vsel %vm1845, %v1838, %v1842
    %v1847 = vand.u32 2147483647, %v1837
    %vm1848 = vcmp.eq.f32.partialorder %v1847, 8.507059e+37
    %v1849 = vand.u32 %v1837, 2147483648
    %v1850 = vor.u32 1.1754944e-38, %v1849
    %v1851 = vsel %vm1848, %v1850, %v1846
    %v1852 = vmul.f32 1.0, %v1851
    %v1853 = vtanh.pop %v1833
    %v1855 = vrot.slane %v1796, 4
    %v1857 = vmul.f32 %v1852, %v1855
    %1859 = vrot.lane.b32.xlu0 %v1853, 64
    %v1860 = vpop.permute.xlu0 %1859
    %v1862 = vmul.f32 %v1852, %v1860
    %1864 = vrot.lane.b32.xlu0 %v1862, 32
    %v1865 = vpop.permute.xlu0 %1864
    %v1867 = vadd.f32 %v1857, %v1865
    %v1868 = vtanh.pop %v1867
    %1870 = vrot.lane.b32.xlu0 %v1868, 64
    %v1871 = vpop.permute.xlu0 %1870
    %v1873 = vmul.f32 %v1852, %v1871
    %1875 = vrot.lane.b32.xlu0 %v1873, 32
    %v1876 = vpop.permute.xlu0 %1875
    %1878 = vst.msk [vmem:[#allocation4 + $0x18] sm:$0xf] %vm216, %v1876
    %v1879 = vsel %vm150, %v1876, 0
    %1881 = vmatpush.msra.mxu0 0.0
    %1882 = vmatpush.msra.mxu0 0.0
    %1883 = vmatpush.msra.mxu0 0.0
    %1884 = vmatpush.msra.mxu0 0.0
    %1885 = vmatpush.msra.mxu0 0.0
    %1886 = vmatpush.msra.mxu0 0.0
    %1887 = vmatpush.msra.mxu0 0.0
    %1888 = vmatpush.msra.mxu0 0.0
    %1889 = vmatpush.msra.mxu0 0.0
    %1890 = vmatpush.msra.mxu0 0.0
    %1891 = vmatpush.msra.mxu0 0.0
    %1892 = vmatpush.msra.mxu0 0.0
    %1893 = vmatpush.msra.mxu0 %v1344
    %1894 = vmatpush.msra.mxu0 %v1343
    %1895 = vmatpush.msra.mxu0 %v1342
    %1896 = vmatpush.msra.mxu0 %v1341
    %1897 = vmatmul.f32.gmra.mxu0 %v1879
    %v1898 = vpop.f32.mrf.mxu0
    %v1899 = vadd.f32 0.0, %v1898
    %1900 = vdwg.mxu0
    %v1902 = vrot.slane %v1899, 4
    %v1904 = vadd.f32 %v1388, %v1902
    %v1905 = vxor.u32 %v1904, 2147483648
    %v1906 = vmul.f32 %v1905, 1.442695
    %v1907 = vpow.pop %v1906
    %v1908 = vadd.f32 %v1907, 1.0
    %v1909 = vrcp.pop %v1908
    %v1910 = vmul.f32 %v1908, %v1909
    %v1911 = vsub.f32 1.0, %v1910
    %v1912 = vmul.f32 %v1909, %v1911
    %v1913 = vadd.f32 %v1909, %v1912
    %vm1914 = vweird.f32 %v1908
    %vm1915 = vweird.f32 %v1909
    %vm1916 = vmor %vm1914, %vm1915
    %v1917 = vsel %vm1916, %v1909, %v1913
    %v1918 = vand.u32 2147483647, %v1908
    %vm1919 = vcmp.eq.f32.partialorder %v1918, 8.507059e+37
    %v1920 = vand.u32 %v1908, 2147483648
    %v1921 = vor.u32 1.1754944e-38, %v1920
    %v1922 = vsel %vm1919, %v1921, %v1917
    %v1923 = vmul.f32 1.0, %v1922
    %v1924 = vtanh.pop %v1904
    %v1926 = vrot.slane %v1867, 4
    %v1928 = vmul.f32 %v1923, %v1926
    %1930 = vrot.lane.b32.xlu0 %v1924, 64
    %v1931 = vpop.permute.xlu0 %1930
    %v1933 = vmul.f32 %v1923, %v1931
    %1935 = vrot.lane.b32.xlu0 %v1933, 32
    %v1936 = vpop.permute.xlu0 %1935
    %v1938 = vadd.f32 %v1928, %v1936
    %v1939 = vtanh.pop %v1938
    %1941 = vrot.lane.b32.xlu0 %v1939, 64
    %v1942 = vpop.permute.xlu0 %1941
    %v1944 = vmul.f32 %v1923, %v1942
    %1946 = vrot.lane.b32.xlu0 %v1944, 32
    %v1947 = vpop.permute.xlu0 %1946
    %1949 = vst.msk [vmem:[#allocation4 + $0x18] sm:$0xf0] %vm288, %v1947
    %v1950 = vld [vmem:[#allocation4] sm:$0xff]
    %v1951 = vld [vmem:[#allocation4 + $0x8] sm:$0xff]
    %v1952 = vld [vmem:[#allocation4 + $0x10] sm:$0xff]
    %v1953 = vld [vmem:[#allocation4 + $0x18] sm:$0xff]
    %v1954 = vld [vmem:[%s10] sm:$0xff]
    %v1955 = vld [vmem:[%s10 + $0x8] sm:$0xff]
    %v1956 = vld [vmem:[%s10 + $0x10] sm:$0xff]
    %v1957 = vld [vmem:[%s10 + $0x18] sm:$0xff]
    %v1958 = vld [vmem:[%s11] sm:$0x1]
    %v1960 = vperm.slane %v1958, 0
    %v1963 = vsel %vm150, %v1950, 0
    %v1966 = vsel %vm150, %v1951, 0
    %v1969 = vsel %vm150, %v1952, 0
    %v1972 = vsel %vm150, %v1953, 0
    %1974 = vmatpush.msra.mxu0 0.0
    %1975 = vmatpush.msra.mxu0 0.0
    %1976 = vmatpush.msra.mxu0 0.0
    %1977 = vmatpush.msra.mxu0 0.0
    %1978 = vmatpush.msra.mxu0 0.0
    %1979 = vmatpush.msra.mxu0 0.0
    %1980 = vmatpush.msra.mxu0 0.0
    %1981 = vmatpush.msra.mxu0 0.0
    %1982 = vmatpush.msra.mxu0 0.0
    %1983 = vmatpush.msra.mxu0 0.0
    %1984 = vmatpush.msra.mxu0 0.0
    %1985 = vmatpush.msra.mxu0 0.0
    %1986 = vmatpush.msra.mxu0 %v1957
    %1987 = vmatpush.msra.mxu0 %v1956
    %1988 = vmatpush.msra.mxu0 %v1955
    %1989 = vmatpush.msra.mxu0 %v1954
    %1990 = vmatmul.f32.gmra.mxu0 %v1963
    %v1991 = vpop.f32.mrf.mxu0
    %v1992 = vadd.f32 %v1960, %v1991
    %1993 = vmatmul.f32.gmra.mxu0 %v1966
    %v1994 = vpop.f32.mrf.mxu0
    %v1995 = vadd.f32 %v1960, %v1994
    %1996 = vmatmul.f32.gmra.mxu0 %v1969
    %v1997 = vpop.f32.mrf.mxu0
    %v1998 = vadd.f32 %v1960, %v1997
    %1999 = vmatmul.f32.gmra.mxu0 %v1972
    %v2000 = vpop.f32.mrf.mxu0
    %v2001 = vadd.f32 %v1960, %v2000
    %2002 = vdwg.mxu0
    %v2003 = vmax.f32 %v1992, 0.0
    %v2004 = vmax.f32 %v1995, 0.0
    %v2005 = vmax.f32 %v1998, 0.0
    %v2006 = vmax.f32 %v2001, 0.0
    %v2007 = vld [vmem:[%s12] sm:$0xff]
    %v2008 = vld [vmem:[%s12 + $0x8] sm:$0xff]
    %v2009 = vld [vmem:[%s13] sm:$0x1]
    %v2011 = vperm.slane %v2009, 0
    %v2014 = vsel %vm108, %v2003, 0
    %v2017 = vsel %vm108, %v2004, 0
    %v2020 = vsel %vm108, %v2005, 0
    %v2023 = vsel %vm108, %v2006, 0
    %2025 = vmatpush.msra.mxu0 0.0
    %2026 = vmatpush.msra.mxu0 0.0
    %2027 = vmatpush.msra.mxu0 0.0
    %2028 = vmatpush.msra.mxu0 0.0
    %2029 = vmatpush.msra.mxu0 0.0
    %2030 = vmatpush.msra.mxu0 0.0
    %2031 = vmatpush.msra.mxu0 0.0
    %2032 = vmatpush.msra.mxu0 0.0
    %2033 = vmatpush.msra.mxu0 0.0
    %2034 = vmatpush.msra.mxu0 0.0
    %2035 = vmatpush.msra.mxu0 0.0
    %2036 = vmatpush.msra.mxu0 0.0
    %2037 = vmatpush.msra.mxu0 0.0
    %2038 = vmatpush.msra.mxu0 0.0
    %2039 = vmatpush.msra.mxu0 %v2008
    %2040 = vmatpush.msra.mxu0 %v2007
    %2041 = vmatmul.f32.gmra.mxu0 %v2014
    %v2042 = vpop.f32.mrf.mxu0
    %v2043 = vadd.f32 %v2011, %v2042
    %2044 = vmatmul.f32.gmra.mxu0 %v2017
    %v2045 = vpop.f32.mrf.mxu0
    %v2046 = vadd.f32 %v2011, %v2045
    %2047 = vmatmul.f32.gmra.mxu0 %v2020
    %v2048 = vpop.f32.mrf.mxu0
    %v2049 = vadd.f32 %v2011, %v2048
    %2050 = vmatmul.f32.gmra.mxu0 %v2023
    %v2051 = vpop.f32.mrf.mxu0
    %v2052 = vadd.f32 %v2011, %v2051
    %2053 = vdwg.mxu0
    %vm2054 = vcmask 64512
    %2055 = vst.msk [vmem:[%s14] sm:$0xff] %vm2054, %v2043
    %2056 = vst.msk [vmem:[%s14 + $0x8] sm:$0xff] %vm2054, %v2046
    %2057 = vst.msk [vmem:[%s14 + $0x10] sm:$0xff] %vm2054, %v2049
    %2058 = vst.msk [vmem:[%s14 + $0x18] sm:$0xff] %vm2054, %v2052
    // Predicated region
    $region70: #{vanilla_lstm_forward.1} parent=1 // pred_check
      _
    $region71: #{vanilla_lstm_forward.1} parent=1 // pred_check_branch
      %2060 = sbr.rel (0) target = $region73
    $region72: #{vanilla_lstm_forward.1} parent=1 // pred_region
      _
    $region73: #{vanilla_lstm_forward.1} parent=1 // pred_fallthru
      _
    // Predicated region
    $region74: #{vanilla_lstm_forward.1} parent=1 // pred_check
      _
    $region75: #{vanilla_lstm_forward.1} parent=1 // pred_check_branch
      %2062 = sbr.rel (0) target = $region77
    $region76: #{vanilla_lstm_forward.1} parent=1 // pred_region
      _
    $region77: #{vanilla_lstm_forward.1} parent=1 // pred_fallthru
      _
    %2063 = vsyncpa [#allocation6], 1
    %2064 = vsyncpa [#allocation8], 1

</llo_original>
